<compile_context>
chip_gen: v7x
topology: tpu7x:2x2x1
jax: 0.10.0
libtpu: 0.0.40
codegen_flags: <defaults>
</compile_context>

<pallas_src>
import functools

import jax
import jax.numpy as jnp
from jax.experimental import pallas as pl
from jax.experimental.pallas import tpu as pltpu

BN_EPS = 1e-5            # PyTorch BatchNorm2d default eps

_TM_CAP = 512            # rows per GEMM tile (multiple of 8)
_TK_CAP = 512            # reduction tile (multiple of 128)
_TN_CAP = 1024           # lane tile (multiple of 128); cout<=1024 -> one N tile
_TM2_CAP = 512           # rows per tile for the elementwise BN/SiLU pass
_VMEM_LIMIT = 32 * 1024 * 1024


# ----------------------------- Pallas kernels ------------------------------ #

def _conv_bias_kernel(p_ref, w_ref, b_ref, o_ref, acc_ref, *, apply_silu):
    """K-tiled im2col GEMM + bias (+ optional SiLU).  bf16 in, f32 accumulate."""
    k = pl.program_id(2)

    @pl.when(k == 0)
    def _():
        acc_ref[...] = jnp.zeros_like(acc_ref)

    acc_ref[...] += jnp.dot(p_ref[...], w_ref[...],
                            preferred_element_type=jnp.float32)

    @pl.when(k == pl.num_programs(2) - 1)
    def _():
        z = acc_ref[...] + b_ref[...]
        if apply_silu:
            z = z * jax.nn.sigmoid(z)
        o_ref[...] = z.astype(o_ref.dtype)


def _conv_stats_kernel(p_ref, w_ref, z_ref, sum_ref, ssq_ref, acc_ref):
    """BN pass 1: K-tiled GEMM -> bf16 pre-activations + per-(M-tile, channel)
    partial sum / sum-of-squares in f32 (reduced later in the wrapper)."""
    k = pl.program_id(2)

    @pl.when(k == 0)
    def _():
        acc_ref[...] = jnp.zeros_like(acc_ref)

    acc_ref[...] += jnp.dot(p_ref[...], w_ref[...],
                            preferred_element_type=jnp.float32)

    @pl.when(k == pl.num_programs(2) - 1)
    def _():
        acc = acc_ref[...]
        z_ref[...] = acc.astype(z_ref.dtype)
        sum_ref[...] = jnp.sum(acc, axis=0, keepdims=True).reshape(sum_ref.shape)
        ssq_ref[...] = jnp.sum(acc * acc, axis=0, keepdims=True).reshape(ssq_ref.shape)


def _scale_shift_silu_kernel(z_ref, scale_ref, shift_ref, o_ref):
    """BN pass 2: y = z*scale + shift; SiLU; bf16 out.  Pure VPU/EUP work."""
    y = z_ref[...].astype(jnp.float32) * scale_ref[...] + shift_ref[...]
    o_ref[...] = (y * jax.nn.sigmoid(y)).astype(o_ref.dtype)


# ------------------------------ helpers (JAX) ------------------------------ #

def _round_up(x, m):
    return (x + m - 1) // m * m


def _pick_tile(total, cap, unit):
    """Largest multiple of `unit` that divides `total` and is <= cap."""
    t = min(cap, total)
    t -= t % unit
    while t >= unit:
        if total % t == 0:
            return t
        t -= unit
    return unit


def _pad_vec(v, n):
    v = v.reshape(-1).astype(jnp.float32)
    if v.shape[0] != n:
        v = jnp.pad(v, (0, n - v.shape[0]))
    return v.reshape(1, n)


def _gemm_tiles(m, k, cout):
    assert k % 128 == 0, k            # guaranteed: input channels padded to 8
    m_p = _round_up(max(m, 1), 8)
    tm = _pick_tile(m_p, _TM_CAP, 8)
    tk = _pick_tile(k, _TK_CAP, 128)
    n_p = _round_up(cout, 128)
    tn = _pick_tile(n_p, _TN_CAP, 128)
    return m_p, tm, k, tk, n_p, tn


def _im2col(x_nhwc, kh, kw, stride, pad):
    # TODO(synk): move the 4x4 tap gather inside the Pallas kernel to avoid
    # materializing the patch matrix in HBM.
    n, h, w, c = x_nhwc.shape
    xp = jnp.pad(x_nhwc, ((0, 0), (pad, pad), (pad, pad), (0, 0)))
    ho = (h + 2 * pad - kh) // stride + 1
    wo = (w + 2 * pad - kw) // stride + 1
    cols = []
    for i in range(kh):
        for j in range(kw):
            cols.append(xp[:, i:i + stride * ho:stride, j:j + stride * wo:stride, :])
    patches = jnp.stack(cols, axis=3)                  # (N, Ho, Wo, KH*KW, C)
    return patches.reshape(n * ho * wo, kh * kw * c), ho, wo


# ------------------------- tiled GEMM pallas wrappers ----------------------- #

def conv_gemm_bias(patches, w_mat, bias, *, apply_silu, out_dtype):
    """(M,K) @ (K,Cout) + bias (+SiLU), tiled over (N, M, K), K accumulated."""
    m, k = patches.shape
    cout = w_mat.shape[1]
    m_p, tm, k_p, tk, n_p, tn = _gemm_tiles(m, k, cout)

    p = patches.astype(jnp.bfloat16)
    if m_p != m:
        p = jnp.pad(p, ((0, m_p - m), (0, 0)))
    w = w_mat
    if n_p != cout:
        w = jnp.pad(w, ((0, 0), (0, n_p - cout)))
    w = w.astype(jnp.bfloat16)
    b = _pad_vec(bias, n_p)

    grid = (n_p // tn, m_p // tm, k_p // tk)
    out = pl.pallas_call(
        functools.partial(_conv_bias_kernel, apply_silu=apply_silu),
        out_shape=jax.ShapeDtypeStruct((m_p, n_p), out_dtype),
        grid_spec=pltpu.PrefetchScalarGridSpec(
            num_scalar_prefetch=0,
            grid=grid,
            in_specs=[
                pl.BlockSpec((tm, tk), lambda j, i, k: (i, k)),
                pl.BlockSpec((tk, tn), lambda j, i, k: (k, j)),
                pl.BlockSpec((1, tn), lambda j, i, k: (0, j)),
            ],
            out_specs=pl.BlockSpec((tm, tn), lambda j, i, k: (i, j)),
            scratch_shapes=[pltpu.VMEM((tm, tn), jnp.float32)],
        ),
        compiler_params=pltpu.CompilerParams(
            dimension_semantics=("parallel", "parallel", "arbitrary"),
            vmem_limit_bytes=_VMEM_LIMIT),
    )(p, w, b)
    return out                                          # (m_p, n_p)


def conv_gemm_bn_silu(patches, w_mat, gamma, beta):
    """Bias-free conv GEMM + training-mode BatchNorm + SiLU (two Pallas passes)."""
    m, k = patches.shape
    cout = w_mat.shape[1]
    m_p, tm, k_p, tk, n_p, tn = _gemm_tiles(m, k, cout)
    num_i = m_p // tm

    p = patches.astype(jnp.bfloat16)
    if m_p != m:
        p = jnp.pad(p, ((0, m_p - m), (0, 0)))
    w = w_mat
    if n_p != cout:
        w = jnp.pad(w, ((0, 0), (0, n_p - cout)))
    w = w.astype(jnp.bfloat16)

    # Pass 1: GEMM + per-M-tile partial channel sums.  Padded rows/channels
    # are exact zeros (no conv bias on BN layers), so dividing by the real M
    # keeps the statistics exact despite padding.
    grid = (n_p // tn, num_i, k_p // tk)
    z, psum, pssq = pl.pallas_call(
        _conv_stats_kernel,
        out_shape=(
            jax.ShapeDtypeStruct((m_p, n_p), jnp.bfloat16),
            jax.ShapeDtypeStruct((num_i, 1, n_p), jnp.float32),
            jax.ShapeDtypeStruct((num_i, 1, n_p), jnp.float32),
        ),
        grid_spec=pltpu.PrefetchScalarGridSpec(
            num_scalar_prefetch=0,
            grid=grid,
            in_specs=[
                pl.BlockSpec((tm, tk), lambda j, i, k: (i, k)),
                pl.BlockSpec((tk, tn), lambda j, i, k: (k, j)),
            ],
            out_specs=(
                pl.BlockSpec((tm, tn), lambda j, i, k: (i, j)),
                pl.BlockSpec((1, 1, tn), lambda j, i, k: (i, 0, j)),
                pl.BlockSpec((1, 1, tn), lambda j, i, k: (i, 0, j)),
            ),
            scratch_shapes=[pltpu.VMEM((tm, tn), jnp.float32)],
        ),
        compiler_params=pltpu.CompilerParams(
            dimension_semantics=("parallel", "parallel", "arbitrary"),
            vmem_limit_bytes=_VMEM_LIMIT),
    )(p, w)

    # Tiny (1, n_p) stats math stays in XLA: reduce the per-tile partials
    # (better f32 precision), clamp the variance, fold gamma/beta.
    inv_m = 1.0 / float(m)
    mean = jnp.sum(psum, axis=0) * inv_m                    # (1, n_p)
    ex2 = jnp.sum(pssq, axis=0) * inv_m
    var = jnp.maximum(ex2 - mean * mean, 0.0)
    scale = _pad_vec(gamma, n_p) * jax.lax.rsqrt(var + BN_EPS)
    shift = _pad_vec(beta, n_p) - mean * scale

    # Pass 2: normalize + affine + SiLU on big, lane-dense tiles.
    tm2 = _pick_tile(m_p, _TM2_CAP, 8)
    y = pl.pallas_call(
        _scale_shift_silu_kernel,
        out_shape=jax.ShapeDtypeStruct((m_p, n_p), jnp.bfloat16),
        grid_spec=pltpu.PrefetchScalarGridSpec(
            num_scalar_prefetch=0,
            grid=(m_p // tm2,),
            in_specs=[
                pl.BlockSpec((tm2, n_p), lambda i: (i, 0)),
                pl.BlockSpec((1, n_p), lambda i: (0, 0)),
                pl.BlockSpec((1, n_p), lambda i: (0, 0)),
            ],
            out_specs=pl.BlockSpec((tm2, n_p), lambda i: (i, 0)),
        ),
        compiler_params=pltpu.CompilerParams(
            dimension_semantics=("parallel",),
            vmem_limit_bytes=_VMEM_LIMIT),
    )(z, scale, shift)
    return y                                            # (m_p, n_p) bf16


# ------------------------------ layer wrappers ------------------------------ #

def conv_block(x_nhwc, w_oihw, gamma, beta, *, stride, pad, use_bn, apply_silu):
    n = x_nhwc.shape[0]
    cout, cin, kh, kw = w_oihw.shape
    cin_x = x_nhwc.shape[-1]
    if cin_x > cin:  # input channels were zero-padded to a multiple of 8
        w_oihw = jnp.pad(w_oihw, ((0, 0), (0, cin_x - cin), (0, 0), (0, 0)))

    patches, ho, wo = _im2col(x_nhwc, kh, kw, stride, pad)          # bf16
    w_mat = jnp.transpose(w_oihw, (2, 3, 1, 0)).reshape(kh * kw * cin_x, cout)

    if use_bn:
        y = conv_gemm_bn_silu(patches, w_mat, gamma, beta)
    else:
        y = conv_gemm_bias(patches, w_mat, beta, apply_silu=apply_silu,
                           out_dtype=jnp.bfloat16)

    m = n * ho * wo
    c_keep = _round_up(cout, 8)     # minimal channel padding carried forward
    if y.shape[0] != m or y.shape[1] != c_keep:
        y = y[:m, :c_keep]
    return y.reshape(n, ho, wo, c_keep)


def head_conv_avgpool(x_nhwc, w_oihw, bias, *, pad):
    """Final Conv2d (stride 1) fused with the global avg_pool + flatten.

    avg_pool over the full spatial output commutes with the (linear) conv +
    bias, so we pool the im2col patches per image first and run one tiny GEMM.
    """
    n = x_nhwc.shape[0]
    cout, cin, kh, kw = w_oihw.shape
    cin_x = x_nhwc.shape[-1]
    if cin_x > cin:
        w_oihw = jnp.pad(w_oihw, ((0, 0), (0, cin_x - cin), (0, 0), (0, 0)))

    patches, ho, wo = _im2col(x_nhwc, kh, kw, 1, pad)
    k = patches.shape[1]
    pooled = jnp.mean(patches.reshape(n, ho * wo, k).astype(jnp.float32),
                      axis=1).astype(jnp.bfloat16)                  # (N, K)
    w_mat = jnp.transpose(w_oihw, (2, 3, 1, 0)).reshape(k, cout)

    y = conv_gemm_bias(pooled, w_mat, bias, apply_silu=False,
                       out_dtype=jnp.float32)                       # (M_p, C_p)
    # torch.flatten on (N, C, 1, 1): N-major, C-minor == row-major (N, C).
    return y[:n, :cout].reshape(-1)


# ------------------------------- model glue -------------------------------- #

def init_params(key, in_channels=3, out_channels=1, hidden=8, n_layers=3):
    """Deterministic synthetic parameters mirroring the PyTorch module's shapes."""
    cfg = [dict(cin=in_channels, cout=hidden, stride=2, use_bn=False, silu=True)]
    nf = 1
    for i in range(1, n_layers + 1):
        nfp = nf
        nf = min(2 ** i, 8)
        cfg.append(dict(cin=hidden * nfp, cout=hidden * nf, stride=2,
                        use_bn=True, silu=True))
    cfg.append(dict(cin=hidden * nf, cout=out_channels, stride=1,
                    use_bn=False, silu=False))

    params = []
    for li, c in enumerate(cfg):
        kw_, kb, kg = jax.random.split(jax.random.fold_in(key, li), 3)
        fan_in = c["cin"] * 4 * 4
        w = jax.random.normal(kw_, (c["cout"], c["cin"], 4, 4), jnp.float32)
        w = w / jnp.sqrt(jnp.float32(fan_in))
        if c["use_bn"]:
            gamma = 1.0 + 0.1 * jax.random.normal(kg, (c["cout"],), jnp.float32)
            beta = 0.1 * jax.random.normal(kb, (c["cout"],), jnp.float32)
        else:
            gamma = jnp.ones((c["cout"],), jnp.float32)                      # unused
            beta = 0.1 * jax.random.normal(kb, (c["cout"],), jnp.float32)    # conv bias
        params.append(dict(w=w, gamma=gamma, beta=beta, stride=c["stride"],
                           use_bn=c["use_bn"], silu=c["silu"]))
    return params


def discriminator_forward(params, x_nhwc):
    y = x_nhwc.astype(jnp.bfloat16)
    cin = y.shape[-1]
    cin_p = _round_up(cin, 8)        # keeps every GEMM K a multiple of 128
    if cin_p != cin:
        y = jnp.pad(y, ((0, 0), (0, 0), (0, 0), (0, cin_p - cin)))
    for p in params[:-1]:
        y = conv_block(y, p["w"], p["gamma"], p["beta"], stride=p["stride"],
                       pad=1, use_bn=p["use_bn"], apply_silu=p["silu"])
    ph = params[-1]
    return head_conv_avgpool(y, ph["w"], ph["beta"], pad=1)


def reference_forward(params, x_nhwc):
    """Pure-JAX reference with matching numerics (bf16 operands, f32 accum):
    conv -> bias|BN -> SiLU ... conv -> avg_pool -> flatten."""
    n = x_nhwc.shape[0]
    y = x_nhwc.astype(jnp.bfloat16)
    for li, p in enumerate(params):
        cout, cin, kh, kw = p["w"].shape
        patches, ho, wo = _im2col(y, kh, kw, p["stride"], 1)
        w_mat = jnp.transpose(p["w"], (2, 3, 1, 0)).reshape(kh * kw * cin, cout)
        acc = jnp.dot(patches, w_mat.astype(jnp.bfloat16),
                      preferred_element_type=jnp.float32)
        if p["use_bn"]:
            mean = jnp.mean(acc, axis=0, keepdims=True)
            var = jnp.maximum(jnp.mean(acc * acc, axis=0, keepdims=True)
                              - mean * mean, 0.0)
            z = (acc - mean) * (p["gamma"][None, :] * jax.lax.rsqrt(var + BN_EPS)) \
                + p["beta"][None, :]
        else:
            z = acc + p["beta"][None, :]
        if p["silu"]:
            z = z * jax.nn.sigmoid(z)
        if li < len(params) - 1:
            z = z.astype(jnp.bfloat16)
        y = z.reshape(n, ho, wo, cout)
    return jnp.mean(y, axis=(1, 2)).reshape(-1)


if __name__ == "__main__":
    key = jax.random.PRNGKey(0)
    kx, kp = jax.random.split(key)

    # Small shapes consistent with the module (hidden shrunk from 128 -> 8).
    batch, in_channels, spatial = 2, 3, 32
    hidden, out_channels, n_layers = 8, 1, 3

    x_nchw = jax.random.normal(kx, (batch, in_channels, spatial, spatial), jnp.float32)
    x_nhwc = jnp.transpose(x_nchw, (0, 2, 3, 1))

    params = init_params(kp, in_channels, out_channels, hidden, n_layers)

    fwd = jax.jit(lambda xx: discriminator_forward(params, xx))
    out = jax.block_until_ready(fwd(x_nhwc))

    assert out.shape == (batch * out_channels,), out.shape
    assert bool(jnp.all(jnp.isfinite(out)))

    ref = reference_forward(params, x_nhwc)
    assert bool(jnp.allclose(out, ref, rtol=2e-2, atol=1e-2)), (out, ref)

    print("KERNEL_OK")
</pallas_src>

<mosaic_0001>
module attributes {stable_mosaic.version = 11 : i64} {
  func.func @_conv_bias_kernel(%arg0: i32, %arg1: i32, %arg2: i32, %arg3: memref<512x128xbf16, #tpu.memory_space<vmem>>, %arg4: memref<128x128xbf16, #tpu.memory_space<vmem>>, %arg5: memref<1x128xf32, #tpu.memory_space<vmem>>, %arg6: memref<512x128xbf16, #tpu.memory_space<vmem>>, %arg7: memref<512x128xf32, #tpu.memory_space<vmem>>) attributes {dimension_semantics = [#tpu.dimension_semantics<parallel>, #tpu.dimension_semantics<parallel>, #tpu.dimension_semantics<arbitrary>], iteration_bounds = array<i64: 1, 1, 1>, scalar_prefetch = 0 : i64, scratch_operands = 1 : i64, tpu.core_type = #tpu.core_type<tc>, window_params = [{transform_indices = @transform_0, window_bounds = array<i64: 512, 128>}, {transform_indices = @transform_1, window_bounds = array<i64: 128, 128>}, {transform_indices = @transform_2, window_bounds = array<i64: 1, 128>}, {transform_indices = @transform_3, window_bounds = array<i64: 512, 128>}]} {
    %c0_i32 = arith.constant 0 : i32
    %0 = arith.cmpi eq, %arg2, %c0_i32 : i32
    %1 = arith.extui %0 : i1 to i32
    %c0_i32_0 = arith.constant 0 : i32
    %2 = arith.cmpi ne, %1, %c0_i32_0 : i32
    scf.if %2 {
      %cst_10 = arith.constant 0.000000e+00 : f32
      %12 = vector.broadcast %cst_10 : f32 to vector<512x128xf32>
      %c0_11 = arith.constant 0 : index
      %c0_12 = arith.constant 0 : index
      %13 = vector.load %arg7[%c0_11, %c0_12] : memref<512x128xf32, #tpu.memory_space<vmem>>, vector<512x128xf32>
      tpu.vector_store %arg7[%c0_11, %c0_12], %12 {strides = array<i32>} : memref<512x128xf32, #tpu.memory_space<vmem>>, vector<512x128xf32>,
    } else {
    }
    %c0 = arith.constant 0 : index
    %c0_1 = arith.constant 0 : index
    %3 = vector.load %arg7[%c0, %c0_1] : memref<512x128xf32, #tpu.memory_space<vmem>>, vector<512x128xf32>
    %c0_2 = arith.constant 0 : index
    %c0_3 = arith.constant 0 : index
    %4 = vector.load %arg3[%c0_2, %c0_3] : memref<512x128xbf16, #tpu.memory_space<vmem>>, vector<512x128xbf16>
    %c0_4 = arith.constant 0 : index
    %c0_5 = arith.constant 0 : index
    %5 = vector.load %arg4[%c0_4, %c0_5] : memref<128x128xbf16, #tpu.memory_space<vmem>>, vector<128x128xbf16>
    %cst = arith.constant dense<0.000000e+00> : vector<512x128xf32>
    %6 = tpu.matmul %4, %5, %cst {dimension_numbers = #tpu.dot_dimension_numbers<[1], [0], [0], [1], [0, 0, 1, 1], [], []>} : vector<512x128xbf16>, vector<128x128xbf16>, vector<512x128xf32> -> vector<512x128xf32>
    %7 = arith.addf %3, %6 : vector<512x128xf32>
    %c0_6 = arith.constant 0 : index
    %c0_7 = arith.constant 0 : index
    %8 = vector.load %arg7[%c0_6, %c0_7] : memref<512x128xf32, #tpu.memory_space<vmem>>, vector<512x128xf32>
    tpu.vector_store %arg7[%c0_6, %c0_7], %7 {strides = array<i32>} : memref<512x128xf32, #tpu.memory_space<vmem>>, vector<512x128xf32>,
    %c0_i32_8 = arith.constant 0 : i32
    %9 = arith.cmpi eq, %arg2, %c0_i32_8 : i32
    %10 = arith.extui %9 : i1 to i32
    %c0_i32_9 = arith.constant 0 : i32
    %11 = arith.cmpi ne, %10, %c0_i32_9 : i32
    scf.if %11 {
      %c0_10 = arith.constant 0 : index
      %c0_11 = arith.constant 0 : index
      %12 = vector.load %arg7[%c0_10, %c0_11] : memref<512x128xf32, #tpu.memory_space<vmem>>, vector<512x128xf32>
      %c0_12 = arith.constant 0 : index
      %c0_13 = arith.constant 0 : index
      %13 = vector.load %arg5[%c0_12, %c0_13] : memref<1x128xf32, #tpu.memory_space<vmem>>, vector<1x128xf32>
      %14 = vector.broadcast %13 : vector<1x128xf32> to vector<512x128xf32>
      %15 = arith.addf %12, %14 : vector<512x128xf32>
      %16 = arith.negf %15 : vector<512x128xf32>
      %17 = math.exp %16 : vector<512x128xf32>
      %cst_14 = arith.constant 1.000000e+00 : f32
      %18 = vector.broadcast %cst_14 : f32 to vector<512x128xf32>
      %19 = arith.addf %18, %17 : vector<512x128xf32>
      %20 = arith.divf %18, %19 : vector<512x128xf32>
      %21 = arith.mulf %15, %20 : vector<512x128xf32>
      %22 = arith.truncf %21 : vector<512x128xf32> to vector<512x128xbf16>
      %c0_15 = arith.constant 0 : index
      %c0_16 = arith.constant 0 : index
      %23 = vector.load %arg6[%c0_15, %c0_16] : memref<512x128xbf16, #tpu.memory_space<vmem>>, vector<512x128xbf16>
      tpu.vector_store %arg6[%c0_15, %c0_16], %22 {strides = array<i32>} : memref<512x128xbf16, #tpu.memory_space<vmem>>, vector<512x128xbf16>,
    } else {
    }
    return
  }
  func.func @transform_0(%arg0: i32, %arg1: i32, %arg2: i32) -> (i32, i32) {
    %c0_i32 = arith.constant 0 : i32
    return %arg1, %arg2 : i32, i32
  }
  func.func @transform_1(%arg0: i32, %arg1: i32, %arg2: i32) -> (i32, i32) {
    %c0_i32 = arith.constant 0 : i32
    return %arg2, %arg0 : i32, i32
  }
  func.func @transform_2(%arg0: i32, %arg1: i32, %arg2: i32) -> (i32, i32) {
    %c0_i32 = arith.constant 0 : i32
    %c0_i32_0 = arith.constant 0 : i32
    return %c0_i32, %arg0 : i32, i32
  }
  func.func @transform_3(%arg0: i32, %arg1: i32, %arg2: i32) -> (i32, i32) {
    %c0_i32 = arith.constant 0 : i32
    return %arg1, %arg0 : i32, i32
  }
}

module attributes {stable_mosaic.version = 11 : i64} {
  func.func @_conv_stats_kernel(%arg0: i32, %arg1: i32, %arg2: i32, %arg3: memref<128x128xbf16, #tpu.memory_space<vmem>>, %arg4: memref<128x128xbf16, #tpu.memory_space<vmem>>, %arg5: memref<128x128xbf16, #tpu.memory_space<vmem>>, %arg6: memref<1x1x128xf32, #tpu.memory_space<vmem>>, %arg7: memref<1x1x128xf32, #tpu.memory_space<vmem>>, %arg8: memref<128x128xf32, #tpu.memory_space<vmem>>) attributes {dimension_semantics = [#tpu.dimension_semantics<parallel>, #tpu.dimension_semantics<parallel>, #tpu.dimension_semantics<arbitrary>], iteration_bounds = array<i64: 1, 1, 1>, scalar_prefetch = 0 : i64, scratch_operands = 1 : i64, tpu.core_type = #tpu.core_type<tc>, window_params = [{transform_indices = @transform_0, window_bounds = array<i64: 128, 128>}, {transform_indices = @transform_1, window_bounds = array<i64: 128, 128>}, {transform_indices = @transform_2, window_bounds = array<i64: 128, 128>}, {transform_indices = @transform_3, window_bounds = array<i64: 1, 1, 128>}, {transform_indices = @transform_4, window_bounds = array<i64: 1, 1, 128>}]} {
    %c0_i32 = arith.constant 0 : i32
    %0 = arith.cmpi eq, %arg2, %c0_i32 : i32
    %1 = arith.extui %0 : i1 to i32
    %c0_i32_0 = arith.constant 0 : i32
    %2 = arith.cmpi ne, %1, %c0_i32_0 : i32
    scf.if %2 {
      %cst_10 = arith.constant 0.000000e+00 : f32
      %12 = vector.broadcast %cst_10 : f32 to vector<128x128xf32>
      %c0_11 = arith.constant 0 : index
      %c0_12 = arith.constant 0 : index
      %13 = vector.load %arg8[%c0_11, %c0_12] : memref<128x128xf32, #tpu.memory_space<vmem>>, vector<128x128xf32>
      tpu.vector_store %arg8[%c0_11, %c0_12], %12 {strides = array<i32>} : memref<128x128xf32, #tpu.memory_space<vmem>>, vector<128x128xf32>,
    } else {
    }
    %c0 = arith.constant 0 : index
    %c0_1 = arith.constant 0 : index
    %3 = vector.load %arg8[%c0, %c0_1] : memref<128x128xf32, #tpu.memory_space<vmem>>, vector<128x128xf32>
    %c0_2 = arith.constant 0 : index
    %c0_3 = arith.constant 0 : index
    %4 = vector.load %arg3[%c0_2, %c0_3] : memref<128x128xbf16, #tpu.memory_space<vmem>>, vector<128x128xbf16>
    %c0_4 = arith.constant 0 : index
    %c0_5 = arith.constant 0 : index
    %5 = vector.load %arg4[%c0_4, %c0_5] : memref<128x128xbf16, #tpu.memory_space<vmem>>, vector<128x128xbf16>
    %cst = arith.constant dense<0.000000e+00> : vector<128x128xf32>
    %6 = tpu.matmul %4, %5, %cst {dimension_numbers = #tpu.dot_dimension_numbers<[1], [0], [0], [1], [0, 0, 1, 1], [], []>} : vector<128x128xbf16>, vector<128x128xbf16>, vector<128x128xf32> -> vector<128x128xf32>
    %7 = arith.addf %3, %6 : vector<128x128xf32>
    %c0_6 = arith.constant 0 : index
    %c0_7 = arith.constant 0 : index
    %8 = vector.load %arg8[%c0_6, %c0_7] : memref<128x128xf32, #tpu.memory_space<vmem>>, vector<128x128xf32>
    tpu.vector_store %arg8[%c0_6, %c0_7], %7 {strides = array<i32>} : memref<128x128xf32, #tpu.memory_space<vmem>>, vector<128x128xf32>,
    %c0_i32_8 = arith.constant 0 : i32
    %9 = arith.cmpi eq, %arg2, %c0_i32_8 : i32
    %10 = arith.extui %9 : i1 to i32
    %c0_i32_9 = arith.constant 0 : i32
    %11 = arith.cmpi ne, %10, %c0_i32_9 : i32
    scf.if %11 {
      %c0_10 = arith.constant 0 : index
      %c0_11 = arith.constant 0 : index
      %12 = vector.load %arg8[%c0_10, %c0_11] : memref<128x128xf32, #tpu.memory_space<vmem>>, vector<128x128xf32>
      %13 = arith.truncf %12 : vector<128x128xf32> to vector<128x128xbf16>
      %c0_12 = arith.constant 0 : index
      %c0_13 = arith.constant 0 : index
      %14 = vector.load %arg5[%c0_12, %c0_13] : memref<128x128xbf16, #tpu.memory_space<vmem>>, vector<128x128xbf16>
      tpu.vector_store %arg5[%c0_12, %c0_13], %13 {strides = array<i32>} : memref<128x128xbf16, #tpu.memory_space<vmem>>, vector<128x128xbf16>,
      %cst_14 = arith.constant dense<0.000000e+00> : vector<128xf32>
      %15 = vector.multi_reduction <add>, %12, %cst_14 [0] : vector<128x128xf32> to vector<128xf32>
      %16 = vector.shape_cast %15 : vector<128xf32> to vector<1x128xf32>
      %17 = vector.shape_cast %16 : vector<1x128xf32> to vector<1x1x128xf32>
      %c0_15 = arith.constant 0 : index
      %c0_16 = arith.constant 0 : index
      %c0_17 = arith.constant 0 : index
      %18 = vector.load %arg6[%c0_15, %c0_16, %c0_17] : memref<1x1x128xf32, #tpu.memory_space<vmem>>, vector<1x1x128xf32>
      tpu.vector_store %arg6[%c0_15, %c0_16, %c0_17], %17 {strides = array<i32>} : memref<1x1x128xf32, #tpu.memory_space<vmem>>, vector<1x1x128xf32>,
      %19 = arith.mulf %12, %12 : vector<128x128xf32>
      %cst_18 = arith.constant dense<0.000000e+00> : vector<128xf32>
      %20 = vector.multi_reduction <add>, %19, %cst_18 [0] : vector<128x128xf32> to vector<128xf32>
      %21 = vector.shape_cast %20 : vector<128xf32> to vector<1x128xf32>
      %22 = vector.shape_cast %21 : vector<1x128xf32> to vector<1x1x128xf32>
      %c0_19 = arith.constant 0 : index
      %c0_20 = arith.constant 0 : index
      %c0_21 = arith.constant 0 : index
      %23 = vector.load %arg7[%c0_19, %c0_20, %c0_21] : memref<1x1x128xf32, #tpu.memory_space<vmem>>, vector<1x1x128xf32>
      tpu.vector_store %arg7[%c0_19, %c0_20, %c0_21], %22 {strides = array<i32>} : memref<1x1x128xf32, #tpu.memory_space<vmem>>, vector<1x1x128xf32>,
    } else {
    }
    return
  }
  func.func @transform_0(%arg0: i32, %arg1: i32, %arg2: i32) -> (i32, i32) {
    %c0_i32 = arith.constant 0 : i32
    return %arg1, %arg2 : i32, i32
  }
  func.func @transform_1(%arg0: i32, %arg1: i32, %arg2: i32) -> (i32, i32) {
    %c0_i32 = arith.constant 0 : i32
    return %arg2, %arg0 : i32, i32
  }
  func.func @transform_2(%arg0: i32, %arg1: i32, %arg2: i32) -> (i32, i32) {
    %c0_i32 = arith.constant 0 : i32
    return %arg1, %arg0 : i32, i32
  }
  func.func @transform_3(%arg0: i32, %arg1: i32, %arg2: i32) -> (i32, i32, i32) {
    %c0_i32 = arith.constant 0 : i32
    %c0_i32_0 = arith.constant 0 : i32
    return %arg1, %c0_i32, %arg0 : i32, i32, i32
  }
  func.func @transform_4(%arg0: i32, %arg1: i32, %arg2: i32) -> (i32, i32, i32) {
    %c0_i32 = arith.constant 0 : i32
    %c0_i32_0 = arith.constant 0 : i32
    return %arg1, %c0_i32, %arg0 : i32, i32, i32
  }
}

module attributes {stable_mosaic.version = 11 : i64} {
  func.func @_scale_shift_silu_kernel(%arg0: i32, %arg1: memref<128x128xbf16, #tpu.memory_space<vmem>>, %arg2: memref<1x128xf32, #tpu.memory_space<vmem>>, %arg3: memref<1x128xf32, #tpu.memory_space<vmem>>, %arg4: memref<128x128xbf16, #tpu.memory_space<vmem>>) attributes {dimension_semantics = [#tpu.dimension_semantics<parallel>], iteration_bounds = array<i64: 1>, scalar_prefetch = 0 : i64, scratch_operands = 0 : i64, tpu.core_type = #tpu.core_type<tc>, window_params = [{transform_indices = @transform_0, window_bounds = array<i64: 128, 128>}, {pipeline_mode = #tpu.pipeline_mode<synchronous>, transform_indices = @transform_1, window_bounds = array<i64: 1, 128>}, {pipeline_mode = #tpu.pipeline_mode<synchronous>, transform_indices = @transform_2, window_bounds = array<i64: 1, 128>}, {transform_indices = @transform_3, window_bounds = array<i64: 128, 128>}]} {
    %c0 = arith.constant 0 : index
    %c0_0 = arith.constant 0 : index
    %0 = vector.load %arg1[%c0, %c0_0] : memref<128x128xbf16, #tpu.memory_space<vmem>>, vector<128x128xbf16>
    %1 = arith.extf %0 : vector<128x128xbf16> to vector<128x128xf32>
    %c0_1 = arith.constant 0 : index
    %c0_2 = arith.constant 0 : index
    %2 = vector.load %arg2[%c0_1, %c0_2] : memref<1x128xf32, #tpu.memory_space<vmem>>, vector<1x128xf32>
    %3 = vector.broadcast %2 : vector<1x128xf32> to vector<128x128xf32>
    %4 = arith.mulf %1, %3 : vector<128x128xf32>
    %c0_3 = arith.constant 0 : index
    %c0_4 = arith.constant 0 : index
    %5 = vector.load %arg3[%c0_3, %c0_4] : memref<1x128xf32, #tpu.memory_space<vmem>>, vector<1x128xf32>
    %6 = vector.broadcast %5 : vector<1x128xf32> to vector<128x128xf32>
    %7 = arith.addf %4, %6 : vector<128x128xf32>
    %8 = arith.negf %7 : vector<128x128xf32>
    %9 = math.exp %8 : vector<128x128xf32>
    %cst = arith.constant 1.000000e+00 : f32
    %10 = vector.broadcast %cst : f32 to vector<128x128xf32>
    %11 = arith.addf %10, %9 : vector<128x128xf32>
    %12 = arith.divf %10, %11 : vector<128x128xf32>
    %13 = arith.mulf %7, %12 : vector<128x128xf32>
    %14 = arith.truncf %13 : vector<128x128xf32> to vector<128x128xbf16>
    %c0_5 = arith.constant 0 : index
    %c0_6 = arith.constant 0 : index
    %15 = vector.load %arg4[%c0_5, %c0_6] : memref<128x128xbf16, #tpu.memory_space<vmem>>, vector<128x128xbf16>
    tpu.vector_store %arg4[%c0_5, %c0_6], %14 {strides = array<i32>} : memref<128x128xbf16, #tpu.memory_space<vmem>>, vector<128x128xbf16>,
    return
  }
  func.func @transform_0(%arg0: i32) -> (i32, i32) {
    %c0_i32 = arith.constant 0 : i32
    %c0_i32_0 = arith.constant 0 : i32
    return %arg0, %c0_i32 : i32, i32
  }
  func.func @transform_1(%arg0: i32) -> (i32, i32) {
    %c0_i32 = arith.constant 0 : i32
    %c0_i32_0 = arith.constant 0 : i32
    %c0_i32_1 = arith.constant 0 : i32
    return %c0_i32, %c0_i32_0 : i32, i32
  }
  func.func @transform_2(%arg0: i32) -> (i32, i32) {
    %c0_i32 = arith.constant 0 : i32
    %c0_i32_0 = arith.constant 0 : i32
    %c0_i32_1 = arith.constant 0 : i32
    return %c0_i32, %c0_i32_0 : i32, i32
  }
  func.func @transform_3(%arg0: i32) -> (i32, i32) {
    %c0_i32 = arith.constant 0 : i32
    %c0_i32_0 = arith.constant 0 : i32
    return %arg0, %c0_i32 : i32, i32
  }
}

module attributes {stable_mosaic.version = 11 : i64} {
  func.func @_conv_stats_kernel(%arg0: i32, %arg1: i32, %arg2: i32, %arg3: memref<32x256xbf16, #tpu.memory_space<vmem>>, %arg4: memref<256x128xbf16, #tpu.memory_space<vmem>>, %arg5: memref<32x128xbf16, #tpu.memory_space<vmem>>, %arg6: memref<1x1x128xf32, #tpu.memory_space<vmem>>, %arg7: memref<1x1x128xf32, #tpu.memory_space<vmem>>, %arg8: memref<32x128xf32, #tpu.memory_space<vmem>>) attributes {dimension_semantics = [#tpu.dimension_semantics<parallel>, #tpu.dimension_semantics<parallel>, #tpu.dimension_semantics<arbitrary>], iteration_bounds = array<i64: 1, 1, 1>, scalar_prefetch = 0 : i64, scratch_operands = 1 : i64, tpu.core_type = #tpu.core_type<tc>, window_params = [{transform_indices = @transform_0, window_bounds = array<i64: 32, 256>}, {transform_indices = @transform_1, window_bounds = array<i64: 256, 128>}, {transform_indices = @transform_2, window_bounds = array<i64: 32, 128>}, {transform_indices = @transform_3, window_bounds = array<i64: 1, 1, 128>}, {transform_indices = @transform_4, window_bounds = array<i64: 1, 1, 128>}]} {
    %c0_i32 = arith.constant 0 : i32
    %0 = arith.cmpi eq, %arg2, %c0_i32 : i32
    %1 = arith.extui %0 : i1 to i32
    %c0_i32_0 = arith.constant 0 : i32
    %2 = arith.cmpi ne, %1, %c0_i32_0 : i32
    scf.if %2 {
      %cst_10 = arith.constant 0.000000e+00 : f32
      %12 = vector.broadcast %cst_10 : f32 to vector<32x128xf32>
      %c0_11 = arith.constant 0 : index
      %c0_12 = arith.constant 0 : index
      %13 = vector.load %arg8[%c0_11, %c0_12] : memref<32x128xf32, #tpu.memory_space<vmem>>, vector<32x128xf32>
      tpu.vector_store %arg8[%c0_11, %c0_12], %12 {strides = array<i32>} : memref<32x128xf32, #tpu.memory_space<vmem>>, vector<32x128xf32>,
    } else {
    }
    %c0 = arith.constant 0 : index
    %c0_1 = arith.constant 0 : index
    %3 = vector.load %arg8[%c0, %c0_1] : memref<32x128xf32, #tpu.memory_space<vmem>>, vector<32x128xf32>
    %c0_2 = arith.constant 0 : index
    %c0_3 = arith.constant 0 : index
    %4 = vector.load %arg3[%c0_2, %c0_3] : memref<32x256xbf16, #tpu.memory_space<vmem>>, vector<32x256xbf16>
    %c0_4 = arith.constant 0 : index
    %c0_5 = arith.constant 0 : index
    %5 = vector.load %arg4[%c0_4, %c0_5] : memref<256x128xbf16, #tpu.memory_space<vmem>>, vector<256x128xbf16>
    %cst = arith.constant dense<0.000000e+00> : vector<32x128xf32>
    %6 = tpu.matmul %4, %5, %cst {dimension_numbers = #tpu.dot_dimension_numbers<[1], [0], [0], [1], [0, 0, 1, 1], [], []>} : vector<32x256xbf16>, vector<256x128xbf16>, vector<32x128xf32> -> vector<32x128xf32>
    %7 = arith.addf %3, %6 : vector<32x128xf32>
    %c0_6 = arith.constant 0 : index
    %c0_7 = arith.constant 0 : index
    %8 = vector.load %arg8[%c0_6, %c0_7] : memref<32x128xf32, #tpu.memory_space<vmem>>, vector<32x128xf32>
    tpu.vector_store %arg8[%c0_6, %c0_7], %7 {strides = array<i32>} : memref<32x128xf32, #tpu.memory_space<vmem>>, vector<32x128xf32>,
    %c0_i32_8 = arith.constant 0 : i32
    %9 = arith.cmpi eq, %arg2, %c0_i32_8 : i32
    %10 = arith.extui %9 : i1 to i32
    %c0_i32_9 = arith.constant 0 : i32
    %11 = arith.cmpi ne, %10, %c0_i32_9 : i32
    scf.if %11 {
      %c0_10 = arith.constant 0 : index
      %c0_11 = arith.constant 0 : index
      %12 = vector.load %arg8[%c0_10, %c0_11] : memref<32x128xf32, #tpu.memory_space<vmem>>, vector<32x128xf32>
      %13 = arith.truncf %12 : vector<32x128xf32> to vector<32x128xbf16>
      %c0_12 = arith.constant 0 : index
      %c0_13 = arith.constant 0 : index
      %14 = vector.load %arg5[%c0_12, %c0_13] : memref<32x128xbf16, #tpu.memory_space<vmem>>, vector<32x128xbf16>
      tpu.vector_store %arg5[%c0_12, %c0_13], %13 {strides = array<i32>} : memref<32x128xbf16, #tpu.memory_space<vmem>>, vector<32x128xbf16>,
      %cst_14 = arith.constant dense<0.000000e+00> : vector<128xf32>
      %15 = vector.multi_reduction <add>, %12, %cst_14 [0] : vector<32x128xf32> to vector<128xf32>
      %16 = vector.shape_cast %15 : vector<128xf32> to vector<1x128xf32>
      %17 = vector.shape_cast %16 : vector<1x128xf32> to vector<1x1x128xf32>
      %c0_15 = arith.constant 0 : index
      %c0_16 = arith.constant 0 : index
      %c0_17 = arith.constant 0 : index
      %18 = vector.load %arg6[%c0_15, %c0_16, %c0_17] : memref<1x1x128xf32, #tpu.memory_space<vmem>>, vector<1x1x128xf32>
      tpu.vector_store %arg6[%c0_15, %c0_16, %c0_17], %17 {strides = array<i32>} : memref<1x1x128xf32, #tpu.memory_space<vmem>>, vector<1x1x128xf32>,
      %19 = arith.mulf %12, %12 : vector<32x128xf32>
      %cst_18 = arith.constant dense<0.000000e+00> : vector<128xf32>
      %20 = vector.multi_reduction <add>, %19, %cst_18 [0] : vector<32x128xf32> to vector<128xf32>
      %21 = vector.shape_cast %20 : vector<128xf32> to vector<1x128xf32>
      %22 = vector.shape_cast %21 : vector<1x128xf32> to vector<1x1x128xf32>
      %c0_19 = arith.constant 0 : index
      %c0_20 = arith.constant 0 : index
      %c0_21 = arith.constant 0 : index
      %23 = vector.load %arg7[%c0_19, %c0_20, %c0_21] : memref<1x1x128xf32, #tpu.memory_space<vmem>>, vector<1x1x128xf32>
      tpu.vector_store %arg7[%c0_19, %c0_20, %c0_21], %22 {strides = array<i32>} : memref<1x1x128xf32, #tpu.memory_space<vmem>>, vector<1x1x128xf32>,
    } else {
    }
    return
  }
  func.func @transform_0(%arg0: i32, %arg1: i32, %arg2: i32) -> (i32, i32) {
    %c0_i32 = arith.constant 0 : i32
    return %arg1, %arg2 : i32, i32
  }
  func.func @transform_1(%arg0: i32, %arg1: i32, %arg2: i32) -> (i32, i32) {
    %c0_i32 = arith.constant 0 : i32
    return %arg2, %arg0 : i32, i32
  }
  func.func @transform_2(%arg0: i32, %arg1: i32, %arg2: i32) -> (i32, i32) {
    %c0_i32 = arith.constant 0 : i32
    return %arg1, %arg0 : i32, i32
  }
  func.func @transform_3(%arg0: i32, %arg1: i32, %arg2: i32) -> (i32, i32, i32) {
    %c0_i32 = arith.constant 0 : i32
    %c0_i32_0 = arith.constant 0 : i32
    return %arg1, %c0_i32, %arg0 : i32, i32, i32
  }
  func.func @transform_4(%arg0: i32, %arg1: i32, %arg2: i32) -> (i32, i32, i32) {
    %c0_i32 = arith.constant 0 : i32
    %c0_i32_0 = arith.constant 0 : i32
    return %arg1, %c0_i32, %arg0 : i32, i32, i32
  }
}

module attributes {stable_mosaic.version = 11 : i64} {
  func.func @_scale_shift_silu_kernel(%arg0: i32, %arg1: memref<32x128xbf16, #tpu.memory_space<vmem>>, %arg2: memref<1x128xf32, #tpu.memory_space<vmem>>, %arg3: memref<1x128xf32, #tpu.memory_space<vmem>>, %arg4: memref<32x128xbf16, #tpu.memory_space<vmem>>) attributes {dimension_semantics = [#tpu.dimension_semantics<parallel>], iteration_bounds = array<i64: 1>, scalar_prefetch = 0 : i64, scratch_operands = 0 : i64, tpu.core_type = #tpu.core_type<tc>, window_params = [{transform_indices = @transform_0, window_bounds = array<i64: 32, 128>}, {pipeline_mode = #tpu.pipeline_mode<synchronous>, transform_indices = @transform_1, window_bounds = array<i64: 1, 128>}, {pipeline_mode = #tpu.pipeline_mode<synchronous>, transform_indices = @transform_2, window_bounds = array<i64: 1, 128>}, {transform_indices = @transform_3, window_bounds = array<i64: 32, 128>}]} {
    %c0 = arith.constant 0 : index
    %c0_0 = arith.constant 0 : index
    %0 = vector.load %arg1[%c0, %c0_0] : memref<32x128xbf16, #tpu.memory_space<vmem>>, vector<32x128xbf16>
    %1 = arith.extf %0 : vector<32x128xbf16> to vector<32x128xf32>
    %c0_1 = arith.constant 0 : index
    %c0_2 = arith.constant 0 : index
    %2 = vector.load %arg2[%c0_1, %c0_2] : memref<1x128xf32, #tpu.memory_space<vmem>>, vector<1x128xf32>
    %3 = vector.broadcast %2 : vector<1x128xf32> to vector<32x128xf32>
    %4 = arith.mulf %1, %3 : vector<32x128xf32>
    %c0_3 = arith.constant 0 : index
    %c0_4 = arith.constant 0 : index
    %5 = vector.load %arg3[%c0_3, %c0_4] : memref<1x128xf32, #tpu.memory_space<vmem>>, vector<1x128xf32>
    %6 = vector.broadcast %5 : vector<1x128xf32> to vector<32x128xf32>
    %7 = arith.addf %4, %6 : vector<32x128xf32>
    %8 = arith.negf %7 : vector<32x128xf32>
    %9 = math.exp %8 : vector<32x128xf32>
    %cst = arith.constant 1.000000e+00 : f32
    %10 = vector.broadcast %cst : f32 to vector<32x128xf32>
    %11 = arith.addf %10, %9 : vector<32x128xf32>
    %12 = arith.divf %10, %11 : vector<32x128xf32>
    %13 = arith.mulf %7, %12 : vector<32x128xf32>
    %14 = arith.truncf %13 : vector<32x128xf32> to vector<32x128xbf16>
    %c0_5 = arith.constant 0 : index
    %c0_6 = arith.constant 0 : index
    %15 = vector.load %arg4[%c0_5, %c0_6] : memref<32x128xbf16, #tpu.memory_space<vmem>>, vector<32x128xbf16>
    tpu.vector_store %arg4[%c0_5, %c0_6], %14 {strides = array<i32>} : memref<32x128xbf16, #tpu.memory_space<vmem>>, vector<32x128xbf16>,
    return
  }
  func.func @transform_0(%arg0: i32) -> (i32, i32) {
    %c0_i32 = arith.constant 0 : i32
    %c0_i32_0 = arith.constant 0 : i32
    return %arg0, %c0_i32 : i32, i32
  }
  func.func @transform_1(%arg0: i32) -> (i32, i32) {
    %c0_i32 = arith.constant 0 : i32
    %c0_i32_0 = arith.constant 0 : i32
    %c0_i32_1 = arith.constant 0 : i32
    return %c0_i32, %c0_i32_0 : i32, i32
  }
  func.func @transform_2(%arg0: i32) -> (i32, i32) {
    %c0_i32 = arith.constant 0 : i32
    %c0_i32_0 = arith.constant 0 : i32
    %c0_i32_1 = arith.constant 0 : i32
    return %c0_i32, %c0_i32_0 : i32, i32
  }
  func.func @transform_3(%arg0: i32) -> (i32, i32) {
    %c0_i32 = arith.constant 0 : i32
    %c0_i32_0 = arith.constant 0 : i32
    return %arg0, %c0_i32 : i32, i32
  }
}

module attributes {stable_mosaic.version = 11 : i64} {
  func.func @_scale_shift_silu_kernel(%arg0: i32, %arg1: memref<8x128xbf16, #tpu.memory_space<vmem>>, %arg2: memref<1x128xf32, #tpu.memory_space<vmem>>, %arg3: memref<1x128xf32, #tpu.memory_space<vmem>>, %arg4: memref<8x128xbf16, #tpu.memory_space<vmem>>) attributes {dimension_semantics = [#tpu.dimension_semantics<parallel>], iteration_bounds = array<i64: 1>, scalar_prefetch = 0 : i64, scratch_operands = 0 : i64, tpu.core_type = #tpu.core_type<tc>, window_params = [{transform_indices = @transform_0, window_bounds = array<i64: 8, 128>}, {pipeline_mode = #tpu.pipeline_mode<synchronous>, transform_indices = @transform_1, window_bounds = array<i64: 1, 128>}, {pipeline_mode = #tpu.pipeline_mode<synchronous>, transform_indices = @transform_2, window_bounds = array<i64: 1, 128>}, {transform_indices = @transform_3, window_bounds = array<i64: 8, 128>}]} {
    %c0 = arith.constant 0 : index
    %c0_0 = arith.constant 0 : index
    %0 = vector.load %arg1[%c0, %c0_0] : memref<8x128xbf16, #tpu.memory_space<vmem>>, vector<8x128xbf16>
    %1 = arith.extf %0 : vector<8x128xbf16> to vector<8x128xf32>
    %c0_1 = arith.constant 0 : index
    %c0_2 = arith.constant 0 : index
    %2 = vector.load %arg2[%c0_1, %c0_2] : memref<1x128xf32, #tpu.memory_space<vmem>>, vector<1x128xf32>
    %3 = vector.broadcast %2 : vector<1x128xf32> to vector<8x128xf32>
    %4 = arith.mulf %1, %3 : vector<8x128xf32>
    %c0_3 = arith.constant 0 : index
    %c0_4 = arith.constant 0 : index
    %5 = vector.load %arg3[%c0_3, %c0_4] : memref<1x128xf32, #tpu.memory_space<vmem>>, vector<1x128xf32>
    %6 = vector.broadcast %5 : vector<1x128xf32> to vector<8x128xf32>
    %7 = arith.addf %4, %6 : vector<8x128xf32>
    %8 = arith.negf %7 : vector<8x128xf32>
    %9 = math.exp %8 : vector<8x128xf32>
    %cst = arith.constant 1.000000e+00 : f32
    %10 = vector.broadcast %cst : f32 to vector<8x128xf32>
    %11 = arith.addf %10, %9 : vector<8x128xf32>
    %12 = arith.divf %10, %11 : vector<8x128xf32>
    %13 = arith.mulf %7, %12 : vector<8x128xf32>
    %14 = arith.truncf %13 : vector<8x128xf32> to vector<8x128xbf16>
    %c0_5 = arith.constant 0 : index
    %c0_6 = arith.constant 0 : index
    %15 = vector.load %arg4[%c0_5, %c0_6] : memref<8x128xbf16, #tpu.memory_space<vmem>>, vector<8x128xbf16>
    tpu.vector_store %arg4[%c0_5, %c0_6], %14 {strides = array<i32>} : memref<8x128xbf16, #tpu.memory_space<vmem>>, vector<8x128xbf16>,
    return
  }
  func.func @transform_0(%arg0: i32) -> (i32, i32) {
    %c0_i32 = arith.constant 0 : i32
    %c0_i32_0 = arith.constant 0 : i32
    return %arg0, %c0_i32 : i32, i32
  }
  func.func @transform_1(%arg0: i32) -> (i32, i32) {
    %c0_i32 = arith.constant 0 : i32
    %c0_i32_0 = arith.constant 0 : i32
    %c0_i32_1 = arith.constant 0 : i32
    return %c0_i32, %c0_i32_0 : i32, i32
  }
  func.func @transform_2(%arg0: i32) -> (i32, i32) {
    %c0_i32 = arith.constant 0 : i32
    %c0_i32_0 = arith.constant 0 : i32
    %c0_i32_1 = arith.constant 0 : i32
    return %c0_i32, %c0_i32_0 : i32, i32
  }
  func.func @transform_3(%arg0: i32) -> (i32, i32) {
    %c0_i32 = arith.constant 0 : i32
    %c0_i32_0 = arith.constant 0 : i32
    return %arg0, %c0_i32 : i32, i32
  }
}

module attributes {stable_mosaic.version = 11 : i64} {
  func.func @_conv_stats_kernel(%arg0: i32, %arg1: i32, %arg2: i32, %arg3: memref<8x512xbf16, #tpu.memory_space<vmem>>, %arg4: memref<512x128xbf16, #tpu.memory_space<vmem>>, %arg5: memref<8x128xbf16, #tpu.memory_space<vmem>>, %arg6: memref<1x1x128xf32, #tpu.memory_space<vmem>>, %arg7: memref<1x1x128xf32, #tpu.memory_space<vmem>>, %arg8: memref<8x128xf32, #tpu.memory_space<vmem>>) attributes {dimension_semantics = [#tpu.dimension_semantics<parallel>, #tpu.dimension_semantics<parallel>, #tpu.dimension_semantics<arbitrary>], iteration_bounds = array<i64: 1, 1, 1>, scalar_prefetch = 0 : i64, scratch_operands = 1 : i64, tpu.core_type = #tpu.core_type<tc>, window_params = [{transform_indices = @transform_0, window_bounds = array<i64: 8, 512>}, {transform_indices = @transform_1, window_bounds = array<i64: 512, 128>}, {transform_indices = @transform_2, window_bounds = array<i64: 8, 128>}, {transform_indices = @transform_3, window_bounds = array<i64: 1, 1, 128>}, {transform_indices = @transform_4, window_bounds = array<i64: 1, 1, 128>}]} {
    %c0_i32 = arith.constant 0 : i32
    %0 = arith.cmpi eq, %arg2, %c0_i32 : i32
    %1 = arith.extui %0 : i1 to i32
    %c0_i32_0 = arith.constant 0 : i32
    %2 = arith.cmpi ne, %1, %c0_i32_0 : i32
    scf.if %2 {
      %cst_10 = arith.constant 0.000000e+00 : f32
      %12 = vector.broadcast %cst_10 : f32 to vector<8x128xf32>
      %c0_11 = arith.constant 0 : index
      %c0_12 = arith.constant 0 : index
      %13 = vector.load %arg8[%c0_11, %c0_12] : memref<8x128xf32, #tpu.memory_space<vmem>>, vector<8x128xf32>
      tpu.vector_store %arg8[%c0_11, %c0_12], %12 {strides = array<i32>} : memref<8x128xf32, #tpu.memory_space<vmem>>, vector<8x128xf32>,
    } else {
    }
    %c0 = arith.constant 0 : index
    %c0_1 = arith.constant 0 : index
    %3 = vector.load %arg8[%c0, %c0_1] : memref<8x128xf32, #tpu.memory_space<vmem>>, vector<8x128xf32>
    %c0_2 = arith.constant 0 : index
    %c0_3 = arith.constant 0 : index
    %4 = vector.load %arg3[%c0_2, %c0_3] : memref<8x512xbf16, #tpu.memory_space<vmem>>, vector<8x512xbf16>
    %c0_4 = arith.constant 0 : index
    %c0_5 = arith.constant 0 : index
    %5 = vector.load %arg4[%c0_4, %c0_5] : memref<512x128xbf16, #tpu.memory_space<vmem>>, vector<512x128xbf16>
    %cst = arith.constant dense<0.000000e+00> : vector<8x128xf32>
    %6 = tpu.matmul %4, %5, %cst {dimension_numbers = #tpu.dot_dimension_numbers<[1], [0], [0], [1], [0, 0, 1, 1], [], []>} : vector<8x512xbf16>, vector<512x128xbf16>, vector<8x128xf32> -> vector<8x128xf32>
    %7 = arith.addf %3, %6 : vector<8x128xf32>
    %c0_6 = arith.constant 0 : index
    %c0_7 = arith.constant 0 : index
    %8 = vector.load %arg8[%c0_6, %c0_7] : memref<8x128xf32, #tpu.memory_space<vmem>>, vector<8x128xf32>
    tpu.vector_store %arg8[%c0_6, %c0_7], %7 {strides = array<i32>} : memref<8x128xf32, #tpu.memory_space<vmem>>, vector<8x128xf32>,
    %c0_i32_8 = arith.constant 0 : i32
    %9 = arith.cmpi eq, %arg2, %c0_i32_8 : i32
    %10 = arith.extui %9 : i1 to i32
    %c0_i32_9 = arith.constant 0 : i32
    %11 = arith.cmpi ne, %10, %c0_i32_9 : i32
    scf.if %11 {
      %c0_10 = arith.constant 0 : index
      %c0_11 = arith.constant 0 : index
      %12 = vector.load %arg8[%c0_10, %c0_11] : memref<8x128xf32, #tpu.memory_space<vmem>>, vector<8x128xf32>
      %13 = arith.truncf %12 : vector<8x128xf32> to vector<8x128xbf16>
      %c0_12 = arith.constant 0 : index
      %c0_13 = arith.constant 0 : index
      %14 = vector.load %arg5[%c0_12, %c0_13] : memref<8x128xbf16, #tpu.memory_space<vmem>>, vector<8x128xbf16>
      tpu.vector_store %arg5[%c0_12, %c0_13], %13 {strides = array<i32>} : memref<8x128xbf16, #tpu.memory_space<vmem>>, vector<8x128xbf16>,
      %cst_14 = arith.constant dense<0.000000e+00> : vector<128xf32>
      %15 = vector.multi_reduction <add>, %12, %cst_14 [0] : vector<8x128xf32> to vector<128xf32>
      %16 = vector.shape_cast %15 : vector<128xf32> to vector<1x128xf32>
      %17 = vector.shape_cast %16 : vector<1x128xf32> to vector<1x1x128xf32>
      %c0_15 = arith.constant 0 : index
      %c0_16 = arith.constant 0 : index
      %c0_17 = arith.constant 0 : index
      %18 = vector.load %arg6[%c0_15, %c0_16, %c0_17] : memref<1x1x128xf32, #tpu.memory_space<vmem>>, vector<1x1x128xf32>
      tpu.vector_store %arg6[%c0_15, %c0_16, %c0_17], %17 {strides = array<i32>} : memref<1x1x128xf32, #tpu.memory_space<vmem>>, vector<1x1x128xf32>,
      %19 = arith.mulf %12, %12 : vector<8x128xf32>
      %cst_18 = arith.constant dense<0.000000e+00> : vector<128xf32>
      %20 = vector.multi_reduction <add>, %19, %cst_18 [0] : vector<8x128xf32> to vector<128xf32>
      %21 = vector.shape_cast %20 : vector<128xf32> to vector<1x128xf32>
      %22 = vector.shape_cast %21 : vector<1x128xf32> to vector<1x1x128xf32>
      %c0_19 = arith.constant 0 : index
      %c0_20 = arith.constant 0 : index
      %c0_21 = arith.constant 0 : index
      %23 = vector.load %arg7[%c0_19, %c0_20, %c0_21] : memref<1x1x128xf32, #tpu.memory_space<vmem>>, vector<1x1x128xf32>
      tpu.vector_store %arg7[%c0_19, %c0_20, %c0_21], %22 {strides = array<i32>} : memref<1x1x128xf32, #tpu.memory_space<vmem>>, vector<1x1x128xf32>,
    } else {
    }
    return
  }
  func.func @transform_0(%arg0: i32, %arg1: i32, %arg2: i32) -> (i32, i32) {
    %c0_i32 = arith.constant 0 : i32
    return %arg1, %arg2 : i32, i32
  }
  func.func @transform_1(%arg0: i32, %arg1: i32, %arg2: i32) -> (i32, i32) {
    %c0_i32 = arith.constant 0 : i32
    return %arg2, %arg0 : i32, i32
  }
  func.func @transform_2(%arg0: i32, %arg1: i32, %arg2: i32) -> (i32, i32) {
    %c0_i32 = arith.constant 0 : i32
    return %arg1, %arg0 : i32, i32
  }
  func.func @transform_3(%arg0: i32, %arg1: i32, %arg2: i32) -> (i32, i32, i32) {
    %c0_i32 = arith.constant 0 : i32
    %c0_i32_0 = arith.constant 0 : i32
    return %arg1, %c0_i32, %arg0 : i32, i32, i32
  }
  func.func @transform_4(%arg0: i32, %arg1: i32, %arg2: i32) -> (i32, i32, i32) {
    %c0_i32 = arith.constant 0 : i32
    %c0_i32_0 = arith.constant 0 : i32
    return %arg1, %c0_i32, %arg0 : i32, i32, i32
  }
}

module attributes {stable_mosaic.version = 11 : i64} {
  func.func @_conv_bias_kernel(%arg0: i32, %arg1: i32, %arg2: i32, %arg3: memref<8x512xbf16, #tpu.memory_space<vmem>>, %arg4: memref<512x128xbf16, #tpu.memory_space<vmem>>, %arg5: memref<1x128xf32, #tpu.memory_space<vmem>>, %arg6: memref<8x128xf32, #tpu.memory_space<vmem>>, %arg7: memref<8x128xf32, #tpu.memory_space<vmem>>) attributes {dimension_semantics = [#tpu.dimension_semantics<parallel>, #tpu.dimension_semantics<parallel>, #tpu.dimension_semantics<arbitrary>], iteration_bounds = array<i64: 1, 1, 2>, scalar_prefetch = 0 : i64, scratch_operands = 1 : i64, tpu.core_type = #tpu.core_type<tc>, window_params = [{transform_indices = @transform_0, window_bounds = array<i64: 8, 512>}, {transform_indices = @transform_1, window_bounds = array<i64: 512, 128>}, {transform_indices = @transform_2, window_bounds = array<i64: 1, 128>}, {transform_indices = @transform_3, window_bounds = array<i64: 8, 128>}]} {
    %c0_i32 = arith.constant 0 : i32
    %0 = arith.cmpi eq, %arg2, %c0_i32 : i32
    %1 = arith.extui %0 : i1 to i32
    %c0_i32_0 = arith.constant 0 : i32
    %2 = arith.cmpi ne, %1, %c0_i32_0 : i32
    scf.if %2 {
      %cst_9 = arith.constant 0.000000e+00 : f32
      %12 = vector.broadcast %cst_9 : f32 to vector<8x128xf32>
      %c0_10 = arith.constant 0 : index
      %c0_11 = arith.constant 0 : index
      %13 = vector.load %arg7[%c0_10, %c0_11] : memref<8x128xf32, #tpu.memory_space<vmem>>, vector<8x128xf32>
      tpu.vector_store %arg7[%c0_10, %c0_11], %12 {strides = array<i32>} : memref<8x128xf32, #tpu.memory_space<vmem>>, vector<8x128xf32>,
    } else {
    }
    %c0 = arith.constant 0 : index
    %c0_1 = arith.constant 0 : index
    %3 = vector.load %arg7[%c0, %c0_1] : memref<8x128xf32, #tpu.memory_space<vmem>>, vector<8x128xf32>
    %c0_2 = arith.constant 0 : index
    %c0_3 = arith.constant 0 : index
    %4 = vector.load %arg3[%c0_2, %c0_3] : memref<8x512xbf16, #tpu.memory_space<vmem>>, vector<8x512xbf16>
    %c0_4 = arith.constant 0 : index
    %c0_5 = arith.constant 0 : index
    %5 = vector.load %arg4[%c0_4, %c0_5] : memref<512x128xbf16, #tpu.memory_space<vmem>>, vector<512x128xbf16>
    %cst = arith.constant dense<0.000000e+00> : vector<8x128xf32>
    %6 = tpu.matmul %4, %5, %cst {dimension_numbers = #tpu.dot_dimension_numbers<[1], [0], [0], [1], [0, 0, 1, 1], [], []>} : vector<8x512xbf16>, vector<512x128xbf16>, vector<8x128xf32> -> vector<8x128xf32>
    %7 = arith.addf %3, %6 : vector<8x128xf32>
    %c0_6 = arith.constant 0 : index
    %c0_7 = arith.constant 0 : index
    %8 = vector.load %arg7[%c0_6, %c0_7] : memref<8x128xf32, #tpu.memory_space<vmem>>, vector<8x128xf32>
    tpu.vector_store %arg7[%c0_6, %c0_7], %7 {strides = array<i32>} : memref<8x128xf32, #tpu.memory_space<vmem>>, vector<8x128xf32>,
    %c1_i32 = arith.constant 1 : i32
    %9 = arith.cmpi eq, %arg2, %c1_i32 : i32
    %10 = arith.extui %9 : i1 to i32
    %c0_i32_8 = arith.constant 0 : i32
    %11 = arith.cmpi ne, %10, %c0_i32_8 : i32
    scf.if %11 {
      %c0_9 = arith.constant 0 : index
      %c0_10 = arith.constant 0 : index
      %12 = vector.load %arg7[%c0_9, %c0_10] : memref<8x128xf32, #tpu.memory_space<vmem>>, vector<8x128xf32>
      %c0_11 = arith.constant 0 : index
      %c0_12 = arith.constant 0 : index
      %13 = vector.load %arg5[%c0_11, %c0_12] : memref<1x128xf32, #tpu.memory_space<vmem>>, vector<1x128xf32>
      %14 = vector.broadcast %13 : vector<1x128xf32> to vector<8x128xf32>
      %15 = arith.addf %12, %14 : vector<8x128xf32>
      %c0_13 = arith.constant 0 : index
      %c0_14 = arith.constant 0 : index
      %16 = vector.load %arg6[%c0_13, %c0_14] : memref<8x128xf32, #tpu.memory_space<vmem>>, vector<8x128xf32>
      tpu.vector_store %arg6[%c0_13, %c0_14], %15 {strides = array<i32>} : memref<8x128xf32, #tpu.memory_space<vmem>>, vector<8x128xf32>,
    } else {
    }
    return
  }
  func.func @transform_0(%arg0: i32, %arg1: i32, %arg2: i32) -> (i32, i32) {
    %c0_i32 = arith.constant 0 : i32
    return %arg1, %arg2 : i32, i32
  }
  func.func @transform_1(%arg0: i32, %arg1: i32, %arg2: i32) -> (i32, i32) {
    %c0_i32 = arith.constant 0 : i32
    return %arg2, %arg0 : i32, i32
  }
  func.func @transform_2(%arg0: i32, %arg1: i32, %arg2: i32) -> (i32, i32) {
    %c0_i32 = arith.constant 0 : i32
    %c0_i32_0 = arith.constant 0 : i32
    return %c0_i32, %arg0 : i32, i32
  }
  func.func @transform_3(%arg0: i32, %arg1: i32, %arg2: i32) -> (i32, i32) {
    %c0_i32 = arith.constant 0 : i32
    return %arg1, %arg0 : i32, i32
  }
}

</mosaic_0001>

<llo_original>
// kernel: _lambda_.8
$region0: #{_lambda_.8}
  #allocation0 [shape = 'u32[]', space=smem, size = 0x4, offset = 0x4, fixed_abs, tag = 'smem constant byte address 0x4 - core index']
  #allocation1 [shape = 'u32[144,128]{1,0:T(1,128)}', space=vmem, size = 0x12000, scoped, tag = 'internal scratch']
  #allocation2 [shape = 'f32[512,128]{1,0:T(8,128)}', space=vmem, size = 0x40000, scoped, tag = 'scratch operand']
  %s0 = inlined_call_operand.vmem [shape: bf16[512,128], index: 0, kind: input, shape index: {}]
  %s1 = inlined_call_operand.vmem [shape: bf16[128,128], index: 1, kind: input, shape index: {}]
  %s2 = inlined_call_operand.vmem [shape: f32[1,128], index: 2, kind: input, shape index: {}]
  %s3 = inlined_call_operand.vmem [shape: bf16[512,128], index: 3, kind: output, shape index: {}]
  %s4 = sld [smem:[#allocation0]]
  $region30: #{_lambda_.8} parent=0
    _
  %s6 = ssub.s32 1, %s4
  %s7 = scalar_select 0, %s6, %s4
  // Predicated region
  $region2: #{_lambda_.8} parent=0 // pred_check
    _
  $region3: #{_lambda_.8} parent=0 // pred_check_branch
    %9 = sbr.rel (0) target = $region5
  $region4: #{_lambda_.8} parent=0 // pred_region
    _
  $region5: #{_lambda_.8} parent=0 // pred_fallthru
    _
  // Predicated region
  $region6: #{_lambda_.8} parent=0 // pred_check
    _
  $region7: #{_lambda_.8} parent=0 // pred_check_branch
    %11 = sbr.rel (0) target = $region9
  $region8: #{_lambda_.8} parent=0 // pred_region
    _
  $region9: #{_lambda_.8} parent=0 // pred_fallthru
    _
  // Predicated region
  $region10: #{_lambda_.8} parent=0 // pred_check
    _
  $region11: #{_lambda_.8} parent=0 // pred_check_branch
    %13 = sbr.rel (0) target = $region13
  $region12: #{_lambda_.8} parent=0 // pred_region
    _
  $region13: #{_lambda_.8} parent=0 // pred_fallthru
    _
  %p15 = scmp.eq.s32.totalorder 0, 0
  // Predicated region
  $region14: #{_lambda_.8} parent=0 // pred_check
    %p16 = pneg %p15
  $region15: #{_lambda_.8} parent=0 // pred_check_branch
    %18 = sbr.rel (%p16) target = $region17
  $region16: #{_lambda_.8} parent=0 // pred_region
    %19 = vst [vmem:[#allocation2] sm:$0xff] 0.0
    %20 = vst [vmem:[#allocation2 + $0x8] sm:$0xff] 0.0
    %21 = vst [vmem:[#allocation2 + $0x10] sm:$0xff] 0.0
    %22 = vst [vmem:[#allocation2 + $0x18] sm:$0xff] 0.0
    %23 = vst [vmem:[#allocation2 + $0x20] sm:$0xff] 0.0
    %24 = vst [vmem:[#allocation2 + $0x28] sm:$0xff] 0.0
    %25 = vst [vmem:[#allocation2 + $0x30] sm:$0xff] 0.0
    %26 = vst [vmem:[#allocation2 + $0x38] sm:$0xff] 0.0
    %27 = vst [vmem:[#allocation2 + $0x40] sm:$0xff] 0.0
    %28 = vst [vmem:[#allocation2 + $0x48] sm:$0xff] 0.0
    %29 = vst [vmem:[#allocation2 + $0x50] sm:$0xff] 0.0
    %30 = vst [vmem:[#allocation2 + $0x58] sm:$0xff] 0.0
    %31 = vst [vmem:[#allocation2 + $0x60] sm:$0xff] 0.0
    %32 = vst [vmem:[#allocation2 + $0x68] sm:$0xff] 0.0
    %33 = vst [vmem:[#allocation2 + $0x70] sm:$0xff] 0.0
    %34 = vst [vmem:[#allocation2 + $0x78] sm:$0xff] 0.0
    %35 = vst [vmem:[#allocation2 + $0x80] sm:$0xff] 0.0
    %36 = vst [vmem:[#allocation2 + $0x88] sm:$0xff] 0.0
    %37 = vst [vmem:[#allocation2 + $0x90] sm:$0xff] 0.0
    %38 = vst [vmem:[#allocation2 + $0x98] sm:$0xff] 0.0
    %39 = vst [vmem:[#allocation2 + $0xa0] sm:$0xff] 0.0
    %40 = vst [vmem:[#allocation2 + $0xa8] sm:$0xff] 0.0
    %41 = vst [vmem:[#allocation2 + $0xb0] sm:$0xff] 0.0
    %42 = vst [vmem:[#allocation2 + $0xb8] sm:$0xff] 0.0
    %43 = vst [vmem:[#allocation2 + $0xc0] sm:$0xff] 0.0
    %44 = vst [vmem:[#allocation2 + $0xc8] sm:$0xff] 0.0
    %45 = vst [vmem:[#allocation2 + $0xd0] sm:$0xff] 0.0
    %46 = vst [vmem:[#allocation2 + $0xd8] sm:$0xff] 0.0
    %47 = vst [vmem:[#allocation2 + $0xe0] sm:$0xff] 0.0
    %48 = vst [vmem:[#allocation2 + $0xe8] sm:$0xff] 0.0
    %49 = vst [vmem:[#allocation2 + $0xf0] sm:$0xff] 0.0
    %50 = vst [vmem:[#allocation2 + $0xf8] sm:$0xff] 0.0
    %51 = vst [vmem:[#allocation2 + $0x100] sm:$0xff] 0.0
    %52 = vst [vmem:[#allocation2 + $0x108] sm:$0xff] 0.0
    %53 = vst [vmem:[#allocation2 + $0x110] sm:$0xff] 0.0
    %54 = vst [vmem:[#allocation2 + $0x118] sm:$0xff] 0.0
    %55 = vst [vmem:[#allocation2 + $0x120] sm:$0xff] 0.0
    %56 = vst [vmem:[#allocation2 + $0x128] sm:$0xff] 0.0
    %57 = vst [vmem:[#allocation2 + $0x130] sm:$0xff] 0.0
    %58 = vst [vmem:[#allocation2 + $0x138] sm:$0xff] 0.0
    %59 = vst [vmem:[#allocation2 + $0x140] sm:$0xff] 0.0
    %60 = vst [vmem:[#allocation2 + $0x148] sm:$0xff] 0.0
    %61 = vst [vmem:[#allocation2 + $0x150] sm:$0xff] 0.0
    %62 = vst [vmem:[#allocation2 + $0x158] sm:$0xff] 0.0
    %63 = vst [vmem:[#allocation2 + $0x160] sm:$0xff] 0.0
    %64 = vst [vmem:[#allocation2 + $0x168] sm:$0xff] 0.0
    %65 = vst [vmem:[#allocation2 + $0x170] sm:$0xff] 0.0
    %66 = vst [vmem:[#allocation2 + $0x178] sm:$0xff] 0.0
    %67 = vst [vmem:[#allocation2 + $0x180] sm:$0xff] 0.0
    %68 = vst [vmem:[#allocation2 + $0x188] sm:$0xff] 0.0
    %69 = vst [vmem:[#allocation2 + $0x190] sm:$0xff] 0.0
    %70 = vst [vmem:[#allocation2 + $0x198] sm:$0xff] 0.0
    %71 = vst [vmem:[#allocation2 + $0x1a0] sm:$0xff] 0.0
    %72 = vst [vmem:[#allocation2 + $0x1a8] sm:$0xff] 0.0
    %73 = vst [vmem:[#allocation2 + $0x1b0] sm:$0xff] 0.0
    %74 = vst [vmem:[#allocation2 + $0x1b8] sm:$0xff] 0.0
    %75 = vst [vmem:[#allocation2 + $0x1c0] sm:$0xff] 0.0
    %76 = vst [vmem:[#allocation2 + $0x1c8] sm:$0xff] 0.0
    %77 = vst [vmem:[#allocation2 + $0x1d0] sm:$0xff] 0.0
    %78 = vst [vmem:[#allocation2 + $0x1d8] sm:$0xff] 0.0
    %79 = vst [vmem:[#allocation2 + $0x1e0] sm:$0xff] 0.0
    %80 = vst [vmem:[#allocation2 + $0x1e8] sm:$0xff] 0.0
    %81 = vst [vmem:[#allocation2 + $0x1f0] sm:$0xff] 0.0
    %82 = vst [vmem:[#allocation2 + $0x1f8] sm:$0xff] 0.0
  $region17: #{_lambda_.8} parent=0 // pred_fallthru
    _
  %v83 = vld [vmem:[#allocation2] sm:$0xff]
  %v84 = vld [vmem:[#allocation2 + $0x8] sm:$0xff]
  %v85 = vld [vmem:[#allocation2 + $0x10] sm:$0xff]
  %v86 = vld [vmem:[#allocation2 + $0x18] sm:$0xff]
  %v87 = vld [vmem:[#allocation2 + $0x20] sm:$0xff]
  %v88 = vld [vmem:[#allocation2 + $0x28] sm:$0xff]
  %v89 = vld [vmem:[#allocation2 + $0x30] sm:$0xff]
  %v90 = vld [vmem:[#allocation2 + $0x38] sm:$0xff]
  %v91 = vld [vmem:[#allocation2 + $0x40] sm:$0xff]
  %v92 = vld [vmem:[#allocation2 + $0x48] sm:$0xff]
  %v93 = vld [vmem:[#allocation2 + $0x50] sm:$0xff]
  %v94 = vld [vmem:[#allocation2 + $0x58] sm:$0xff]
  %v95 = vld [vmem:[#allocation2 + $0x60] sm:$0xff]
  %v96 = vld [vmem:[#allocation2 + $0x68] sm:$0xff]
  %v97 = vld [vmem:[#allocation2 + $0x70] sm:$0xff]
  %v98 = vld [vmem:[#allocation2 + $0x78] sm:$0xff]
  %v99 = vld [vmem:[#allocation2 + $0x80] sm:$0xff]
  %v100 = vld [vmem:[#allocation2 + $0x88] sm:$0xff]
  %v101 = vld [vmem:[#allocation2 + $0x90] sm:$0xff]
  %v102 = vld [vmem:[#allocation2 + $0x98] sm:$0xff]
  %v103 = vld [vmem:[#allocation2 + $0xa0] sm:$0xff]
  %v104 = vld [vmem:[#allocation2 + $0xa8] sm:$0xff]
  %v105 = vld [vmem:[#allocation2 + $0xb0] sm:$0xff]
  %v106 = vld [vmem:[#allocation2 + $0xb8] sm:$0xff]
  %v107 = vld [vmem:[#allocation2 + $0xc0] sm:$0xff]
  %v108 = vld [vmem:[#allocation2 + $0xc8] sm:$0xff]
  %v109 = vld [vmem:[#allocation2 + $0xd0] sm:$0xff]
  %v110 = vld [vmem:[#allocation2 + $0xd8] sm:$0xff]
  %v111 = vld [vmem:[#allocation2 + $0xe0] sm:$0xff]
  %v112 = vld [vmem:[#allocation2 + $0xe8] sm:$0xff]
  %v113 = vld [vmem:[#allocation2 + $0xf0] sm:$0xff]
  %v114 = vld [vmem:[#allocation2 + $0xf8] sm:$0xff]
  %v115 = vld [vmem:[#allocation2 + $0x100] sm:$0xff]
  %v116 = vld [vmem:[#allocation2 + $0x108] sm:$0xff]
  %v117 = vld [vmem:[#allocation2 + $0x110] sm:$0xff]
  %v118 = vld [vmem:[#allocation2 + $0x118] sm:$0xff]
  %v119 = vld [vmem:[#allocation2 + $0x120] sm:$0xff]
  %v120 = vld [vmem:[#allocation2 + $0x128] sm:$0xff]
  %v121 = vld [vmem:[#allocation2 + $0x130] sm:$0xff]
  %v122 = vld [vmem:[#allocation2 + $0x138] sm:$0xff]
  %v123 = vld [vmem:[#allocation2 + $0x140] sm:$0xff]
  %v124 = vld [vmem:[#allocation2 + $0x148] sm:$0xff]
  %v125 = vld [vmem:[#allocation2 + $0x150] sm:$0xff]
  %v126 = vld [vmem:[#allocation2 + $0x158] sm:$0xff]
  %v127 = vld [vmem:[#allocation2 + $0x160] sm:$0xff]
  %v128 = vld [vmem:[#allocation2 + $0x168] sm:$0xff]
  %v129 = vld [vmem:[#allocation2 + $0x170] sm:$0xff]
  %v130 = vld [vmem:[#allocation2 + $0x178] sm:$0xff]
  %v131 = vld [vmem:[#allocation2 + $0x180] sm:$0xff]
  %v132 = vld [vmem:[#allocation2 + $0x188] sm:$0xff]
  %v133 = vld [vmem:[#allocation2 + $0x190] sm:$0xff]
  %v134 = vld [vmem:[#allocation2 + $0x198] sm:$0xff]
  %v135 = vld [vmem:[#allocation2 + $0x1a0] sm:$0xff]
  %v136 = vld [vmem:[#allocation2 + $0x1a8] sm:$0xff]
  %v137 = vld [vmem:[#allocation2 + $0x1b0] sm:$0xff]
  %v138 = vld [vmem:[#allocation2 + $0x1b8] sm:$0xff]
  %v139 = vld [vmem:[#allocation2 + $0x1c0] sm:$0xff]
  %v140 = vld [vmem:[#allocation2 + $0x1c8] sm:$0xff]
  %v141 = vld [vmem:[#allocation2 + $0x1d0] sm:$0xff]
  %v142 = vld [vmem:[#allocation2 + $0x1d8] sm:$0xff]
  %v143 = vld [vmem:[#allocation2 + $0x1e0] sm:$0xff]
  %v144 = vld [vmem:[#allocation2 + $0x1e8] sm:$0xff]
  %v145 = vld [vmem:[#allocation2 + $0x1f0] sm:$0xff]
  %v146 = vld [vmem:[#allocation2 + $0x1f8] sm:$0xff]
  %v147 = vld [vmem:[%s0] sm:$0xf]
  %v148 = vld [vmem:[%s0 + $0x4] sm:$0xf]
  %v149 = vld [vmem:[%s0 + $0x8] sm:$0xf]
  %v150 = vld [vmem:[%s0 + $0xc] sm:$0xf]
  %v151 = vld [vmem:[%s0 + $0x10] sm:$0xf]
  %v152 = vld [vmem:[%s0 + $0x14] sm:$0xf]
  %v153 = vld [vmem:[%s0 + $0x18] sm:$0xf]
  %v154 = vld [vmem:[%s0 + $0x1c] sm:$0xf]
  %v155 = vld [vmem:[%s0 + $0x20] sm:$0xf]
  %v156 = vld [vmem:[%s0 + $0x24] sm:$0xf]
  %v157 = vld [vmem:[%s0 + $0x28] sm:$0xf]
  %v158 = vld [vmem:[%s0 + $0x2c] sm:$0xf]
  %v159 = vld [vmem:[%s0 + $0x30] sm:$0xf]
  %v160 = vld [vmem:[%s0 + $0x34] sm:$0xf]
  %v161 = vld [vmem:[%s0 + $0x38] sm:$0xf]
  %v162 = vld [vmem:[%s0 + $0x3c] sm:$0xf]
  %v163 = vld [vmem:[%s0 + $0x40] sm:$0xf]
  %v164 = vld [vmem:[%s0 + $0x44] sm:$0xf]
  %v165 = vld [vmem:[%s0 + $0x48] sm:$0xf]
  %v166 = vld [vmem:[%s0 + $0x4c] sm:$0xf]
  %v167 = vld [vmem:[%s0 + $0x50] sm:$0xf]
  %v168 = vld [vmem:[%s0 + $0x54] sm:$0xf]
  %v169 = vld [vmem:[%s0 + $0x58] sm:$0xf]
  %v170 = vld [vmem:[%s0 + $0x5c] sm:$0xf]
  %v171 = vld [vmem:[%s0 + $0x60] sm:$0xf]
  %v172 = vld [vmem:[%s0 + $0x64] sm:$0xf]
  %v173 = vld [vmem:[%s0 + $0x68] sm:$0xf]
  %v174 = vld [vmem:[%s0 + $0x6c] sm:$0xf]
  %v175 = vld [vmem:[%s0 + $0x70] sm:$0xf]
  %v176 = vld [vmem:[%s0 + $0x74] sm:$0xf]
  %v177 = vld [vmem:[%s0 + $0x78] sm:$0xf]
  %v178 = vld [vmem:[%s0 + $0x7c] sm:$0xf]
  %v179 = vld [vmem:[%s0 + $0x80] sm:$0xf]
  %v180 = vld [vmem:[%s0 + $0x84] sm:$0xf]
  %v181 = vld [vmem:[%s0 + $0x88] sm:$0xf]
  %v182 = vld [vmem:[%s0 + $0x8c] sm:$0xf]
  %v183 = vld [vmem:[%s0 + $0x90] sm:$0xf]
  %v184 = vld [vmem:[%s0 + $0x94] sm:$0xf]
  %v185 = vld [vmem:[%s0 + $0x98] sm:$0xf]
  %v186 = vld [vmem:[%s0 + $0x9c] sm:$0xf]
  %v187 = vld [vmem:[%s0 + $0xa0] sm:$0xf]
  %v188 = vld [vmem:[%s0 + $0xa4] sm:$0xf]
  %v189 = vld [vmem:[%s0 + $0xa8] sm:$0xf]
  %v190 = vld [vmem:[%s0 + $0xac] sm:$0xf]
  %v191 = vld [vmem:[%s0 + $0xb0] sm:$0xf]
  %v192 = vld [vmem:[%s0 + $0xb4] sm:$0xf]
  %v193 = vld [vmem:[%s0 + $0xb8] sm:$0xf]
  %v194 = vld [vmem:[%s0 + $0xbc] sm:$0xf]
  %v195 = vld [vmem:[%s0 + $0xc0] sm:$0xf]
  %v196 = vld [vmem:[%s0 + $0xc4] sm:$0xf]
  %v197 = vld [vmem:[%s0 + $0xc8] sm:$0xf]
  %v198 = vld [vmem:[%s0 + $0xcc] sm:$0xf]
  %v199 = vld [vmem:[%s0 + $0xd0] sm:$0xf]
  %v200 = vld [vmem:[%s0 + $0xd4] sm:$0xf]
  %v201 = vld [vmem:[%s0 + $0xd8] sm:$0xf]
  %v202 = vld [vmem:[%s0 + $0xdc] sm:$0xf]
  %v203 = vld [vmem:[%s0 + $0xe0] sm:$0xf]
  %v204 = vld [vmem:[%s0 + $0xe4] sm:$0xf]
  %v205 = vld [vmem:[%s0 + $0xe8] sm:$0xf]
  %v206 = vld [vmem:[%s0 + $0xec] sm:$0xf]
  %v207 = vld [vmem:[%s0 + $0xf0] sm:$0xf]
  %v208 = vld [vmem:[%s0 + $0xf4] sm:$0xf]
  %v209 = vld [vmem:[%s0 + $0xf8] sm:$0xf]
  %v210 = vld [vmem:[%s0 + $0xfc] sm:$0xf]
  %v211 = vld [vmem:[%s1] sm:$0xf]
  %v212 = vld [vmem:[%s1 + $0x4] sm:$0xf]
  %v213 = vld [vmem:[%s1 + $0x8] sm:$0xf]
  %v214 = vld [vmem:[%s1 + $0xc] sm:$0xf]
  %v215 = vld [vmem:[%s1 + $0x10] sm:$0xf]
  %v216 = vld [vmem:[%s1 + $0x14] sm:$0xf]
  %v217 = vld [vmem:[%s1 + $0x18] sm:$0xf]
  %v218 = vld [vmem:[%s1 + $0x1c] sm:$0xf]
  %v219 = vld [vmem:[%s1 + $0x20] sm:$0xf]
  %v220 = vld [vmem:[%s1 + $0x24] sm:$0xf]
  %v221 = vld [vmem:[%s1 + $0x28] sm:$0xf]
  %v222 = vld [vmem:[%s1 + $0x2c] sm:$0xf]
  %v223 = vld [vmem:[%s1 + $0x30] sm:$0xf]
  %v224 = vld [vmem:[%s1 + $0x34] sm:$0xf]
  %v225 = vld [vmem:[%s1 + $0x38] sm:$0xf]
  %v226 = vld [vmem:[%s1 + $0x3c] sm:$0xf]
  %v291 = vunpack.c.l.b16 %v147
  %v292 = vunpack.c.l.b16 %v148
  %v293 = vunpack.c.l.b16 %v149
  %v294 = vunpack.c.l.b16 %v150
  %v295 = vunpack.c.l.b16 %v151
  %v296 = vunpack.c.l.b16 %v152
  %v297 = vunpack.c.l.b16 %v153
  %v298 = vunpack.c.l.b16 %v154
  %v299 = vunpack.c.l.b16 %v155
  %v300 = vunpack.c.l.b16 %v156
  %v301 = vunpack.c.l.b16 %v157
  %v302 = vunpack.c.l.b16 %v158
  %v303 = vunpack.c.l.b16 %v159
  %v304 = vunpack.c.l.b16 %v160
  %v305 = vunpack.c.l.b16 %v161
  %v306 = vunpack.c.l.b16 %v162
  %v307 = vunpack.c.l.b16 %v163
  %v308 = vunpack.c.l.b16 %v164
  %v309 = vunpack.c.l.b16 %v165
  %v310 = vunpack.c.l.b16 %v166
  %v311 = vunpack.c.l.b16 %v167
  %v312 = vunpack.c.l.b16 %v168
  %v313 = vunpack.c.l.b16 %v169
  %v314 = vunpack.c.l.b16 %v170
  %v315 = vunpack.c.l.b16 %v171
  %v316 = vunpack.c.l.b16 %v172
  %v317 = vunpack.c.l.b16 %v173
  %v318 = vunpack.c.l.b16 %v174
  %v319 = vunpack.c.l.b16 %v175
  %v320 = vunpack.c.l.b16 %v176
  %v321 = vunpack.c.l.b16 %v177
  %v322 = vunpack.c.l.b16 %v178
  %v323 = vunpack.c.l.b16 %v179
  %v324 = vunpack.c.l.b16 %v180
  %v325 = vunpack.c.l.b16 %v181
  %v326 = vunpack.c.l.b16 %v182
  %v327 = vunpack.c.l.b16 %v183
  %v328 = vunpack.c.l.b16 %v184
  %v329 = vunpack.c.l.b16 %v185
  %v330 = vunpack.c.l.b16 %v186
  %v331 = vunpack.c.l.b16 %v187
  %v332 = vunpack.c.l.b16 %v188
  %v333 = vunpack.c.l.b16 %v189
  %v334 = vunpack.c.l.b16 %v190
  %v335 = vunpack.c.l.b16 %v191
  %v336 = vunpack.c.l.b16 %v192
  %v337 = vunpack.c.l.b16 %v193
  %v338 = vunpack.c.l.b16 %v194
  %v339 = vunpack.c.l.b16 %v195
  %v340 = vunpack.c.l.b16 %v196
  %v341 = vunpack.c.l.b16 %v197
  %v342 = vunpack.c.l.b16 %v198
  %v343 = vunpack.c.l.b16 %v199
  %v344 = vunpack.c.l.b16 %v200
  %v345 = vunpack.c.l.b16 %v201
  %v346 = vunpack.c.l.b16 %v202
  %v347 = vunpack.c.l.b16 %v203
  %v348 = vunpack.c.l.b16 %v204
  %v349 = vunpack.c.l.b16 %v205
  %v350 = vunpack.c.l.b16 %v206
  %v351 = vunpack.c.l.b16 %v207
  %v352 = vunpack.c.l.b16 %v208
  %v353 = vunpack.c.l.b16 %v209
  %v354 = vunpack.c.l.b16 %v210
  %v355 = vpack.c.b16 %v292, %v291
  %v356 = vpack.c.b16 %v294, %v293
  %v357 = vpack.c.b16 %v296, %v295
  %v358 = vpack.c.b16 %v298, %v297
  %v359 = vpack.c.b16 %v300, %v299
  %v360 = vpack.c.b16 %v302, %v301
  %v361 = vpack.c.b16 %v304, %v303
  %v362 = vpack.c.b16 %v306, %v305
  %v363 = vpack.c.b16 %v308, %v307
  %v364 = vpack.c.b16 %v310, %v309
  %v365 = vpack.c.b16 %v312, %v311
  %v366 = vpack.c.b16 %v314, %v313
  %v367 = vpack.c.b16 %v316, %v315
  %v368 = vpack.c.b16 %v318, %v317
  %v369 = vpack.c.b16 %v320, %v319
  %v370 = vpack.c.b16 %v322, %v321
  %v371 = vpack.c.b16 %v324, %v323
  %v372 = vpack.c.b16 %v326, %v325
  %v373 = vpack.c.b16 %v328, %v327
  %v374 = vpack.c.b16 %v330, %v329
  %v375 = vpack.c.b16 %v332, %v331
  %v376 = vpack.c.b16 %v334, %v333
  %v377 = vpack.c.b16 %v336, %v335
  %v378 = vpack.c.b16 %v338, %v337
  %v379 = vpack.c.b16 %v340, %v339
  %v380 = vpack.c.b16 %v342, %v341
  %v381 = vpack.c.b16 %v344, %v343
  %v382 = vpack.c.b16 %v346, %v345
  %v383 = vpack.c.b16 %v348, %v347
  %v384 = vpack.c.b16 %v350, %v349
  %v385 = vpack.c.b16 %v352, %v351
  %v386 = vpack.c.b16 %v354, %v353
  %v435 = vunpack.c.l.b16 %v211
  %v436 = vunpack.c.l.b16 %v212
  %v437 = vunpack.c.l.b16 %v213
  %v438 = vunpack.c.l.b16 %v214
  %v439 = vunpack.c.l.b16 %v215
  %v440 = vunpack.c.l.b16 %v216
  %v441 = vunpack.c.l.b16 %v217
  %v442 = vunpack.c.l.b16 %v218
  %v443 = vunpack.c.l.b16 %v219
  %v444 = vunpack.c.l.b16 %v220
  %v445 = vunpack.c.l.b16 %v221
  %v446 = vunpack.c.l.b16 %v222
  %v447 = vunpack.c.l.b16 %v223
  %v448 = vunpack.c.l.b16 %v224
  %v449 = vunpack.c.l.b16 %v225
  %v450 = vunpack.c.l.b16 %v226
  %v451 = vpack.c.b16 %v436, %v435
  %v452 = vpack.c.b16 %v438, %v437
  %v453 = vpack.c.b16 %v440, %v439
  %v454 = vpack.c.b16 %v442, %v441
  %v455 = vpack.c.b16 %v444, %v443
  %v456 = vpack.c.b16 %v446, %v445
  %v457 = vpack.c.b16 %v448, %v447
  %v458 = vpack.c.b16 %v450, %v449
  %467 = vmatprep.subr.bf16.mxu0 0
  %468 = vmatpush1.bf16.msra.mxu0 %v451
  %469 = vmatprep.subr.bf16.mxu0 0
  %470 = vmatpush1.bf16.msra.mxu0 %v452
  %471 = vmatprep.subr.bf16.mxu0 0
  %472 = vmatpush1.bf16.msra.mxu0 %v453
  %473 = vmatprep.subr.bf16.mxu0 0
  %474 = vmatpush1.bf16.msra.mxu0 %v454
  %475 = vmatprep.subr.bf16.mxu0 0
  %476 = vmatpush1.bf16.msra.mxu0 %v455
  %477 = vmatprep.subr.bf16.mxu0 0
  %478 = vmatpush1.bf16.msra.mxu0 %v456
  %479 = vmatprep.subr.bf16.mxu0 0
  %480 = vmatpush1.bf16.msra.mxu0 %v457
  %481 = vmatprep.subr.bf16.mxu0 0
  %482 = vmatpush1.bf16.msra.mxu0 %v458
  %483 = vmatprep.subr.bf16.mxu0 0
  %484 = vmatpush1.bf16.msra.mxu0 0
  %485 = vmatprep.subr.bf16.mxu0 0
  %486 = vmatpush1.bf16.msra.mxu0 0
  %487 = vmatprep.subr.bf16.mxu0 0
  %488 = vmatpush1.bf16.msra.mxu0 0
  %489 = vmatprep.subr.bf16.mxu0 0
  %490 = vmatpush1.bf16.msra.mxu0 0
  %491 = vmatprep.subr.bf16.mxu0 0
  %492 = vmatpush1.bf16.msra.mxu0 0
  %493 = vmatprep.subr.bf16.mxu0 0
  %494 = vmatpush1.bf16.msra.mxu0 0
  %495 = vmatprep.subr.bf16.mxu0 0
  %496 = vmatpush1.bf16.msra.mxu0 0
  %497 = vmatprep.subr.bf16.mxu0 0
  %498 = vmatpush1.bf16.msra.mxu0 0
  %499 = vmatprep.mubr.bf16.mxu0 0
  %500 = vmatmul.mubr.bf16.gmra.mrb[0].mxu0 %v355
  %v501 = vpop.f32.mrb[0].mxu0
  %v502 = vadd.f32 0.0, %v501
  %v503 = vpop.f32.mrb[0].mxu0
  %v504 = vpop.f32.mrb[0].mxu0
  %v505 = vadd.f32 0.0, %v504
  %v506 = vpop.f32.mrb[0].mxu0
  %507 = vmatprep.mubr.bf16.mxu0 0
  %508 = vmatmul.mubr.bf16.gmra.mrb[0].mxu0 %v356
  %v509 = vpop.f32.mrb[0].mxu0
  %v510 = vadd.f32 0.0, %v509
  %v511 = vpop.f32.mrb[0].mxu0
  %v512 = vpop.f32.mrb[0].mxu0
  %v513 = vadd.f32 0.0, %v512
  %v514 = vpop.f32.mrb[0].mxu0
  %515 = vmatprep.mubr.bf16.mxu0 0
  %516 = vmatmul.mubr.bf16.gmra.mrb[0].mxu0 %v357
  %v517 = vpop.f32.mrb[0].mxu0
  %v518 = vadd.f32 0.0, %v517
  %v519 = vpop.f32.mrb[0].mxu0
  %v520 = vpop.f32.mrb[0].mxu0
  %v521 = vadd.f32 0.0, %v520
  %v522 = vpop.f32.mrb[0].mxu0
  %523 = vmatprep.mubr.bf16.mxu0 0
  %524 = vmatmul.mubr.bf16.gmra.mrb[0].mxu0 %v358
  %v525 = vpop.f32.mrb[0].mxu0
  %v526 = vadd.f32 0.0, %v525
  %v527 = vpop.f32.mrb[0].mxu0
  %v528 = vpop.f32.mrb[0].mxu0
  %v529 = vadd.f32 0.0, %v528
  %v530 = vpop.f32.mrb[0].mxu0
  %531 = vmatprep.mubr.bf16.mxu0 0
  %532 = vmatmul.mubr.bf16.gmra.mrb[0].mxu0 %v359
  %v533 = vpop.f32.mrb[0].mxu0
  %v534 = vadd.f32 0.0, %v533
  %v535 = vpop.f32.mrb[0].mxu0
  %v536 = vpop.f32.mrb[0].mxu0
  %v537 = vadd.f32 0.0, %v536
  %v538 = vpop.f32.mrb[0].mxu0
  %539 = vmatprep.mubr.bf16.mxu0 0
  %540 = vmatmul.mubr.bf16.gmra.mrb[0].mxu0 %v360
  %v541 = vpop.f32.mrb[0].mxu0
  %v542 = vadd.f32 0.0, %v541
  %v543 = vpop.f32.mrb[0].mxu0
  %v544 = vpop.f32.mrb[0].mxu0
  %v545 = vadd.f32 0.0, %v544
  %v546 = vpop.f32.mrb[0].mxu0
  %547 = vmatprep.mubr.bf16.mxu0 0
  %548 = vmatmul.mubr.bf16.gmra.mrb[0].mxu0 %v361
  %v549 = vpop.f32.mrb[0].mxu0
  %v550 = vadd.f32 0.0, %v549
  %v551 = vpop.f32.mrb[0].mxu0
  %v552 = vpop.f32.mrb[0].mxu0
  %v553 = vadd.f32 0.0, %v552
  %v554 = vpop.f32.mrb[0].mxu0
  %555 = vmatprep.mubr.bf16.mxu0 0
  %556 = vmatmul.mubr.bf16.gmra.mrb[0].mxu0 %v362
  %v557 = vpop.f32.mrb[0].mxu0
  %v558 = vadd.f32 0.0, %v557
  %v559 = vpop.f32.mrb[0].mxu0
  %v560 = vpop.f32.mrb[0].mxu0
  %v561 = vadd.f32 0.0, %v560
  %v562 = vpop.f32.mrb[0].mxu0
  %563 = vmatprep.mubr.bf16.mxu0 0
  %564 = vmatmul.mubr.bf16.gmra.mrb[0].mxu0 %v363
  %v565 = vpop.f32.mrb[0].mxu0
  %v566 = vadd.f32 0.0, %v565
  %v567 = vpop.f32.mrb[0].mxu0
  %v568 = vpop.f32.mrb[0].mxu0
  %v569 = vadd.f32 0.0, %v568
  %v570 = vpop.f32.mrb[0].mxu0
  %571 = vmatprep.mubr.bf16.mxu0 0
  %572 = vmatmul.mubr.bf16.gmra.mrb[0].mxu0 %v364
  %v573 = vpop.f32.mrb[0].mxu0
  %v574 = vadd.f32 0.0, %v573
  %v575 = vpop.f32.mrb[0].mxu0
  %v576 = vpop.f32.mrb[0].mxu0
  %v577 = vadd.f32 0.0, %v576
  %v578 = vpop.f32.mrb[0].mxu0
  %579 = vmatprep.mubr.bf16.mxu0 0
  %580 = vmatmul.mubr.bf16.gmra.mrb[0].mxu0 %v365
  %v581 = vpop.f32.mrb[0].mxu0
  %v582 = vadd.f32 0.0, %v581
  %v583 = vpop.f32.mrb[0].mxu0
  %v584 = vpop.f32.mrb[0].mxu0
  %v585 = vadd.f32 0.0, %v584
  %v586 = vpop.f32.mrb[0].mxu0
  %587 = vmatprep.mubr.bf16.mxu0 0
  %588 = vmatmul.mubr.bf16.gmra.mrb[0].mxu0 %v366
  %v589 = vpop.f32.mrb[0].mxu0
  %v590 = vadd.f32 0.0, %v589
  %v591 = vpop.f32.mrb[0].mxu0
  %v592 = vpop.f32.mrb[0].mxu0
  %v593 = vadd.f32 0.0, %v592
  %v594 = vpop.f32.mrb[0].mxu0
  %595 = vmatprep.mubr.bf16.mxu0 0
  %596 = vmatmul.mubr.bf16.gmra.mrb[0].mxu0 %v367
  %v597 = vpop.f32.mrb[0].mxu0
  %v598 = vadd.f32 0.0, %v597
  %v599 = vpop.f32.mrb[0].mxu0
  %v600 = vpop.f32.mrb[0].mxu0
  %v601 = vadd.f32 0.0, %v600
  %v602 = vpop.f32.mrb[0].mxu0
  %603 = vmatprep.mubr.bf16.mxu0 0
  %604 = vmatmul.mubr.bf16.gmra.mrb[0].mxu0 %v368
  %v605 = vpop.f32.mrb[0].mxu0
  %v606 = vadd.f32 0.0, %v605
  %v607 = vpop.f32.mrb[0].mxu0
  %v608 = vpop.f32.mrb[0].mxu0
  %v609 = vadd.f32 0.0, %v608
  %v610 = vpop.f32.mrb[0].mxu0
  %611 = vmatprep.mubr.bf16.mxu0 0
  %612 = vmatmul.mubr.bf16.gmra.mrb[0].mxu0 %v369
  %v613 = vpop.f32.mrb[0].mxu0
  %v614 = vadd.f32 0.0, %v613
  %v615 = vpop.f32.mrb[0].mxu0
  %v616 = vpop.f32.mrb[0].mxu0
  %v617 = vadd.f32 0.0, %v616
  %v618 = vpop.f32.mrb[0].mxu0
  %619 = vmatprep.mubr.bf16.mxu0 0
  %620 = vmatmul.mubr.bf16.gmra.mrb[0].mxu0 %v370
  %v621 = vpop.f32.mrb[0].mxu0
  %v622 = vadd.f32 0.0, %v621
  %v623 = vpop.f32.mrb[0].mxu0
  %v624 = vpop.f32.mrb[0].mxu0
  %v625 = vadd.f32 0.0, %v624
  %v626 = vpop.f32.mrb[0].mxu0
  %627 = vmatprep.mubr.bf16.mxu0 0
  %628 = vmatmul.mubr.bf16.gmra.mrb[0].mxu0 %v371
  %v629 = vpop.f32.mrb[0].mxu0
  %v630 = vadd.f32 0.0, %v629
  %v631 = vpop.f32.mrb[0].mxu0
  %v632 = vpop.f32.mrb[0].mxu0
  %v633 = vadd.f32 0.0, %v632
  %v634 = vpop.f32.mrb[0].mxu0
  %635 = vmatprep.mubr.bf16.mxu0 0
  %636 = vmatmul.mubr.bf16.gmra.mrb[0].mxu0 %v372
  %v637 = vpop.f32.mrb[0].mxu0
  %v638 = vadd.f32 0.0, %v637
  %v639 = vpop.f32.mrb[0].mxu0
  %v640 = vpop.f32.mrb[0].mxu0
  %v641 = vadd.f32 0.0, %v640
  %v642 = vpop.f32.mrb[0].mxu0
  %643 = vmatprep.mubr.bf16.mxu0 0
  %644 = vmatmul.mubr.bf16.gmra.mrb[0].mxu0 %v373
  %v645 = vpop.f32.mrb[0].mxu0
  %v646 = vadd.f32 0.0, %v645
  %v647 = vpop.f32.mrb[0].mxu0
  %v648 = vpop.f32.mrb[0].mxu0
  %v649 = vadd.f32 0.0, %v648
  %v650 = vpop.f32.mrb[0].mxu0
  %651 = vmatprep.mubr.bf16.mxu0 0
  %652 = vmatmul.mubr.bf16.gmra.mrb[0].mxu0 %v374
  %v653 = vpop.f32.mrb[0].mxu0
  %v654 = vadd.f32 0.0, %v653
  %v655 = vpop.f32.mrb[0].mxu0
  %v656 = vpop.f32.mrb[0].mxu0
  %v657 = vadd.f32 0.0, %v656
  %v658 = vpop.f32.mrb[0].mxu0
  %659 = vmatprep.mubr.bf16.mxu0 0
  %660 = vmatmul.mubr.bf16.gmra.mrb[0].mxu0 %v375
  %v661 = vpop.f32.mrb[0].mxu0
  %v662 = vadd.f32 0.0, %v661
  %v663 = vpop.f32.mrb[0].mxu0
  %v664 = vpop.f32.mrb[0].mxu0
  %v665 = vadd.f32 0.0, %v664
  %v666 = vpop.f32.mrb[0].mxu0
  %667 = vmatprep.mubr.bf16.mxu0 0
  %668 = vmatmul.mubr.bf16.gmra.mrb[0].mxu0 %v376
  %v669 = vpop.f32.mrb[0].mxu0
  %v670 = vadd.f32 0.0, %v669
  %v671 = vpop.f32.mrb[0].mxu0
  %v672 = vpop.f32.mrb[0].mxu0
  %v673 = vadd.f32 0.0, %v672
  %v674 = vpop.f32.mrb[0].mxu0
  %675 = vmatprep.mubr.bf16.mxu0 0
  %676 = vmatmul.mubr.bf16.gmra.mrb[0].mxu0 %v377
  %v677 = vpop.f32.mrb[0].mxu0
  %v678 = vadd.f32 0.0, %v677
  %v679 = vpop.f32.mrb[0].mxu0
  %v680 = vpop.f32.mrb[0].mxu0
  %v681 = vadd.f32 0.0, %v680
  %v682 = vpop.f32.mrb[0].mxu0
  %683 = vmatprep.mubr.bf16.mxu0 0
  %684 = vmatmul.mubr.bf16.gmra.mrb[0].mxu0 %v378
  %v685 = vpop.f32.mrb[0].mxu0
  %v686 = vadd.f32 0.0, %v685
  %v687 = vpop.f32.mrb[0].mxu0
  %v688 = vpop.f32.mrb[0].mxu0
  %v689 = vadd.f32 0.0, %v688
  %v690 = vpop.f32.mrb[0].mxu0
  %691 = vmatprep.mubr.bf16.mxu0 0
  %692 = vmatmul.mubr.bf16.gmra.mrb[0].mxu0 %v379
  %v693 = vpop.f32.mrb[0].mxu0
  %v694 = vadd.f32 0.0, %v693
  %v695 = vpop.f32.mrb[0].mxu0
  %v696 = vpop.f32.mrb[0].mxu0
  %v697 = vadd.f32 0.0, %v696
  %v698 = vpop.f32.mrb[0].mxu0
  %699 = vmatprep.mubr.bf16.mxu0 0
  %700 = vmatmul.mubr.bf16.gmra.mrb[0].mxu0 %v380
  %v701 = vpop.f32.mrb[0].mxu0
  %v702 = vadd.f32 0.0, %v701
  %v703 = vpop.f32.mrb[0].mxu0
  %v704 = vpop.f32.mrb[0].mxu0
  %v705 = vadd.f32 0.0, %v704
  %v706 = vpop.f32.mrb[0].mxu0
  %707 = vmatprep.mubr.bf16.mxu0 0
  %708 = vmatmul.mubr.bf16.gmra.mrb[0].mxu0 %v381
  %v709 = vpop.f32.mrb[0].mxu0
  %v710 = vadd.f32 0.0, %v709
  %v711 = vpop.f32.mrb[0].mxu0
  %v712 = vpop.f32.mrb[0].mxu0
  %v713 = vadd.f32 0.0, %v712
  %v714 = vpop.f32.mrb[0].mxu0
  %715 = vmatprep.mubr.bf16.mxu0 0
  %716 = vmatmul.mubr.bf16.gmra.mrb[0].mxu0 %v382
  %v717 = vpop.f32.mrb[0].mxu0
  %v718 = vadd.f32 0.0, %v717
  %v719 = vpop.f32.mrb[0].mxu0
  %v720 = vpop.f32.mrb[0].mxu0
  %v721 = vadd.f32 0.0, %v720
  %v722 = vpop.f32.mrb[0].mxu0
  %723 = vmatprep.mubr.bf16.mxu0 0
  %724 = vmatmul.mubr.bf16.gmra.mrb[0].mxu0 %v383
  %v725 = vpop.f32.mrb[0].mxu0
  %v726 = vadd.f32 0.0, %v725
  %v727 = vpop.f32.mrb[0].mxu0
  %v728 = vpop.f32.mrb[0].mxu0
  %v729 = vadd.f32 0.0, %v728
  %v730 = vpop.f32.mrb[0].mxu0
  %731 = vmatprep.mubr.bf16.mxu0 0
  %732 = vmatmul.mubr.bf16.gmra.mrb[0].mxu0 %v384
  %v733 = vpop.f32.mrb[0].mxu0
  %v734 = vadd.f32 0.0, %v733
  %v735 = vpop.f32.mrb[0].mxu0
  %v736 = vpop.f32.mrb[0].mxu0
  %v737 = vadd.f32 0.0, %v736
  %v738 = vpop.f32.mrb[0].mxu0
  %739 = vmatprep.mubr.bf16.mxu0 0
  %740 = vmatmul.mubr.bf16.gmra.mrb[0].mxu0 %v385
  %v741 = vpop.f32.mrb[0].mxu0
  %v742 = vadd.f32 0.0, %v741
  %v743 = vpop.f32.mrb[0].mxu0
  %v744 = vpop.f32.mrb[0].mxu0
  %v745 = vadd.f32 0.0, %v744
  %v746 = vpop.f32.mrb[0].mxu0
  %747 = vmatprep.mubr.bf16.mxu0 0
  %748 = vmatmul.mubr.bf16.gmra.mrb[0].mxu0 %v386
  %v749 = vpop.f32.mrb[0].mxu0
  %v750 = vadd.f32 0.0, %v749
  %v751 = vpop.f32.mrb[0].mxu0
  %v752 = vpop.f32.mrb[0].mxu0
  %v753 = vadd.f32 0.0, %v752
  %v754 = vpop.f32.mrb[0].mxu0
  %755 = vdwg.mxu0
  %v756 = vadd.f32 %v83, %v502
  %v757 = vadd.f32 %v84, %v505
  %v758 = vadd.f32 %v85, %v510
  %v759 = vadd.f32 %v86, %v513
  %v760 = vadd.f32 %v87, %v518
  %v761 = vadd.f32 %v88, %v521
  %v762 = vadd.f32 %v89, %v526
  %v763 = vadd.f32 %v90, %v529
  %v764 = vadd.f32 %v91, %v534
  %v765 = vadd.f32 %v92, %v537
  %v766 = vadd.f32 %v93, %v542
  %v767 = vadd.f32 %v94, %v545
  %v768 = vadd.f32 %v95, %v550
  %v769 = vadd.f32 %v96, %v553
  %v770 = vadd.f32 %v97, %v558
  %v771 = vadd.f32 %v98, %v561
  %v772 = vadd.f32 %v99, %v566
  %v773 = vadd.f32 %v100, %v569
  %v774 = vadd.f32 %v101, %v574
  %v775 = vadd.f32 %v102, %v577
  %v776 = vadd.f32 %v103, %v582
  %v777 = vadd.f32 %v104, %v585
  %v778 = vadd.f32 %v105, %v590
  %v779 = vadd.f32 %v106, %v593
  %v780 = vadd.f32 %v107, %v598
  %v781 = vadd.f32 %v108, %v601
  %v782 = vadd.f32 %v109, %v606
  %v783 = vadd.f32 %v110, %v609
  %v784 = vadd.f32 %v111, %v614
  %v785 = vadd.f32 %v112, %v617
  %v786 = vadd.f32 %v113, %v622
  %v787 = vadd.f32 %v114, %v625
  %v788 = vadd.f32 %v115, %v630
  %v789 = vadd.f32 %v116, %v633
  %v790 = vadd.f32 %v117, %v638
  %v791 = vadd.f32 %v118, %v641
  %v792 = vadd.f32 %v119, %v646
  %v793 = vadd.f32 %v120, %v649
  %v794 = vadd.f32 %v121, %v654
  %v795 = vadd.f32 %v122, %v657
  %v796 = vadd.f32 %v123, %v662
  %v797 = vadd.f32 %v124, %v665
  %v798 = vadd.f32 %v125, %v670
  %v799 = vadd.f32 %v126, %v673
  %v800 = vadd.f32 %v127, %v678
  %v801 = vadd.f32 %v128, %v681
  %v802 = vadd.f32 %v129, %v686
  %v803 = vadd.f32 %v130, %v689
  %v804 = vadd.f32 %v131, %v694
  %v805 = vadd.f32 %v132, %v697
  %v806 = vadd.f32 %v133, %v702
  %v807 = vadd.f32 %v134, %v705
  %v808 = vadd.f32 %v135, %v710
  %v809 = vadd.f32 %v136, %v713
  %v810 = vadd.f32 %v137, %v718
  %v811 = vadd.f32 %v138, %v721
  %v812 = vadd.f32 %v139, %v726
  %v813 = vadd.f32 %v140, %v729
  %v814 = vadd.f32 %v141, %v734
  %v815 = vadd.f32 %v142, %v737
  %v816 = vadd.f32 %v143, %v742
  %v817 = vadd.f32 %v144, %v745
  %v818 = vadd.f32 %v145, %v750
  %v819 = vadd.f32 %v146, %v753
  %820 = vst [vmem:[#allocation2] sm:$0xff] %v756
  %821 = vst [vmem:[#allocation2 + $0x8] sm:$0xff] %v757
  %822 = vst [vmem:[#allocation2 + $0x10] sm:$0xff] %v758
  %823 = vst [vmem:[#allocation2 + $0x18] sm:$0xff] %v759
  %824 = vst [vmem:[#allocation2 + $0x20] sm:$0xff] %v760
  %825 = vst [vmem:[#allocation2 + $0x28] sm:$0xff] %v761
  %826 = vst [vmem:[#allocation2 + $0x30] sm:$0xff] %v762
  %827 = vst [vmem:[#allocation2 + $0x38] sm:$0xff] %v763
  %828 = vst [vmem:[#allocation2 + $0x40] sm:$0xff] %v764
  %829 = vst [vmem:[#allocation2 + $0x48] sm:$0xff] %v765
  %830 = vst [vmem:[#allocation2 + $0x50] sm:$0xff] %v766
  %831 = vst [vmem:[#allocation2 + $0x58] sm:$0xff] %v767
  %832 = vst [vmem:[#allocation2 + $0x60] sm:$0xff] %v768
  %833 = vst [vmem:[#allocation2 + $0x68] sm:$0xff] %v769
  %834 = vst [vmem:[#allocation2 + $0x70] sm:$0xff] %v770
  %835 = vst [vmem:[#allocation2 + $0x78] sm:$0xff] %v771
  %836 = vst [vmem:[#allocation2 + $0x80] sm:$0xff] %v772
  %837 = vst [vmem:[#allocation2 + $0x88] sm:$0xff] %v773
  %838 = vst [vmem:[#allocation2 + $0x90] sm:$0xff] %v774
  %839 = vst [vmem:[#allocation2 + $0x98] sm:$0xff] %v775
  %840 = vst [vmem:[#allocation2 + $0xa0] sm:$0xff] %v776
  %841 = vst [vmem:[#allocation2 + $0xa8] sm:$0xff] %v777
  %842 = vst [vmem:[#allocation2 + $0xb0] sm:$0xff] %v778
  %843 = vst [vmem:[#allocation2 + $0xb8] sm:$0xff] %v779
  %844 = vst [vmem:[#allocation2 + $0xc0] sm:$0xff] %v780
  %845 = vst [vmem:[#allocation2 + $0xc8] sm:$0xff] %v781
  %846 = vst [vmem:[#allocation2 + $0xd0] sm:$0xff] %v782
  %847 = vst [vmem:[#allocation2 + $0xd8] sm:$0xff] %v783
  %848 = vst [vmem:[#allocation2 + $0xe0] sm:$0xff] %v784
  %849 = vst [vmem:[#allocation2 + $0xe8] sm:$0xff] %v785
  %850 = vst [vmem:[#allocation2 + $0xf0] sm:$0xff] %v786
  %851 = vst [vmem:[#allocation2 + $0xf8] sm:$0xff] %v787
  %852 = vst [vmem:[#allocation2 + $0x100] sm:$0xff] %v788
  %853 = vst [vmem:[#allocation2 + $0x108] sm:$0xff] %v789
  %854 = vst [vmem:[#allocation2 + $0x110] sm:$0xff] %v790
  %855 = vst [vmem:[#allocation2 + $0x118] sm:$0xff] %v791
  %856 = vst [vmem:[#allocation2 + $0x120] sm:$0xff] %v792
  %857 = vst [vmem:[#allocation2 + $0x128] sm:$0xff] %v793
  %858 = vst [vmem:[#allocation2 + $0x130] sm:$0xff] %v794
  %859 = vst [vmem:[#allocation2 + $0x138] sm:$0xff] %v795
  %860 = vst [vmem:[#allocation2 + $0x140] sm:$0xff] %v796
  %861 = vst [vmem:[#allocation2 + $0x148] sm:$0xff] %v797
  %862 = vst [vmem:[#allocation2 + $0x150] sm:$0xff] %v798
  %863 = vst [vmem:[#allocation2 + $0x158] sm:$0xff] %v799
  %864 = vst [vmem:[#allocation2 + $0x160] sm:$0xff] %v800
  %865 = vst [vmem:[#allocation2 + $0x168] sm:$0xff] %v801
  %866 = vst [vmem:[#allocation2 + $0x170] sm:$0xff] %v802
  %867 = vst [vmem:[#allocation2 + $0x178] sm:$0xff] %v803
  %868 = vst [vmem:[#allocation2 + $0x180] sm:$0xff] %v804
  %869 = vst [vmem:[#allocation2 + $0x188] sm:$0xff] %v805
  %870 = vst [vmem:[#allocation2 + $0x190] sm:$0xff] %v806
  %871 = vst [vmem:[#allocation2 + $0x198] sm:$0xff] %v807
  %872 = vst [vmem:[#allocation2 + $0x1a0] sm:$0xff] %v808
  %873 = vst [vmem:[#allocation2 + $0x1a8] sm:$0xff] %v809
  %874 = vst [vmem:[#allocation2 + $0x1b0] sm:$0xff] %v810
  %875 = vst [vmem:[#allocation2 + $0x1b8] sm:$0xff] %v811
  %876 = vst [vmem:[#allocation2 + $0x1c0] sm:$0xff] %v812
  %877 = vst [vmem:[#allocation2 + $0x1c8] sm:$0xff] %v813
  %878 = vst [vmem:[#allocation2 + $0x1d0] sm:$0xff] %v814
  %879 = vst [vmem:[#allocation2 + $0x1d8] sm:$0xff] %v815
  %880 = vst [vmem:[#allocation2 + $0x1e0] sm:$0xff] %v816
  %881 = vst [vmem:[#allocation2 + $0x1e8] sm:$0xff] %v817
  %882 = vst [vmem:[#allocation2 + $0x1f0] sm:$0xff] %v818
  %883 = vst [vmem:[#allocation2 + $0x1f8] sm:$0xff] %v819
  // Predicated region
  $region18: #{_lambda_.8} parent=0 // pred_check
    %p884 = pneg %p15
  $region19: #{_lambda_.8} parent=0 // pred_check_branch
    %886 = sbr.rel (%p884) target = $region21
  $region20: #{_lambda_.8} parent=0 // pred_region
    %v887 = vld [vmem:[#allocation2] sm:$0xff]
    %v888 = vld [vmem:[#allocation2 + $0x8] sm:$0xff]
    %v889 = vld [vmem:[#allocation2 + $0x10] sm:$0xff]
    %v890 = vld [vmem:[#allocation2 + $0x18] sm:$0xff]
    %v891 = vld [vmem:[#allocation2 + $0x20] sm:$0xff]
    %v892 = vld [vmem:[#allocation2 + $0x28] sm:$0xff]
    %v893 = vld [vmem:[#allocation2 + $0x30] sm:$0xff]
    %v894 = vld [vmem:[#allocation2 + $0x38] sm:$0xff]
    %v895 = vld [vmem:[#allocation2 + $0x40] sm:$0xff]
    %v896 = vld [vmem:[#allocation2 + $0x48] sm:$0xff]
    %v897 = vld [vmem:[#allocation2 + $0x50] sm:$0xff]
    %v898 = vld [vmem:[#allocation2 + $0x58] sm:$0xff]
    %v899 = vld [vmem:[#allocation2 + $0x60] sm:$0xff]
    %v900 = vld [vmem:[#allocation2 + $0x68] sm:$0xff]
    %v901 = vld [vmem:[#allocation2 + $0x70] sm:$0xff]
    %v902 = vld [vmem:[#allocation2 + $0x78] sm:$0xff]
    %v903 = vld [vmem:[#allocation2 + $0x80] sm:$0xff]
    %v904 = vld [vmem:[#allocation2 + $0x88] sm:$0xff]
    %v905 = vld [vmem:[#allocation2 + $0x90] sm:$0xff]
    %v906 = vld [vmem:[#allocation2 + $0x98] sm:$0xff]
    %v907 = vld [vmem:[#allocation2 + $0xa0] sm:$0xff]
    %v908 = vld [vmem:[#allocation2 + $0xa8] sm:$0xff]
    %v909 = vld [vmem:[#allocation2 + $0xb0] sm:$0xff]
    %v910 = vld [vmem:[#allocation2 + $0xb8] sm:$0xff]
    %v911 = vld [vmem:[#allocation2 + $0xc0] sm:$0xff]
    %v912 = vld [vmem:[#allocation2 + $0xc8] sm:$0xff]
    %v913 = vld [vmem:[#allocation2 + $0xd0] sm:$0xff]
    %v914 = vld [vmem:[#allocation2 + $0xd8] sm:$0xff]
    %v915 = vld [vmem:[#allocation2 + $0xe0] sm:$0xff]
    %v916 = vld [vmem:[#allocation2 + $0xe8] sm:$0xff]
    %v917 = vld [vmem:[#allocation2 + $0xf0] sm:$0xff]
    %v918 = vld [vmem:[#allocation2 + $0xf8] sm:$0xff]
    %v919 = vld [vmem:[#allocation2 + $0x100] sm:$0xff]
    %v920 = vld [vmem:[#allocation2 + $0x108] sm:$0xff]
    %v921 = vld [vmem:[#allocation2 + $0x110] sm:$0xff]
    %v922 = vld [vmem:[#allocation2 + $0x118] sm:$0xff]
    %v923 = vld [vmem:[#allocation2 + $0x120] sm:$0xff]
    %v924 = vld [vmem:[#allocation2 + $0x128] sm:$0xff]
    %v925 = vld [vmem:[#allocation2 + $0x130] sm:$0xff]
    %v926 = vld [vmem:[#allocation2 + $0x138] sm:$0xff]
    %v927 = vld [vmem:[#allocation2 + $0x140] sm:$0xff]
    %v928 = vld [vmem:[#allocation2 + $0x148] sm:$0xff]
    %v929 = vld [vmem:[#allocation2 + $0x150] sm:$0xff]
    %v930 = vld [vmem:[#allocation2 + $0x158] sm:$0xff]
    %v931 = vld [vmem:[#allocation2 + $0x160] sm:$0xff]
    %v932 = vld [vmem:[#allocation2 + $0x168] sm:$0xff]
    %v933 = vld [vmem:[#allocation2 + $0x170] sm:$0xff]
    %v934 = vld [vmem:[#allocation2 + $0x178] sm:$0xff]
    %v935 = vld [vmem:[#allocation2 + $0x180] sm:$0xff]
    %v936 = vld [vmem:[#allocation2 + $0x188] sm:$0xff]
    %v937 = vld [vmem:[#allocation2 + $0x190] sm:$0xff]
    %v938 = vld [vmem:[#allocation2 + $0x198] sm:$0xff]
    %v939 = vld [vmem:[#allocation2 + $0x1a0] sm:$0xff]
    %v940 = vld [vmem:[#allocation2 + $0x1a8] sm:$0xff]
    %v941 = vld [vmem:[#allocation2 + $0x1b0] sm:$0xff]
    %v942 = vld [vmem:[#allocation2 + $0x1b8] sm:$0xff]
    %v943 = vld [vmem:[#allocation2 + $0x1c0] sm:$0xff]
    %v944 = vld [vmem:[#allocation2 + $0x1c8] sm:$0xff]
    %v945 = vld [vmem:[#allocation2 + $0x1d0] sm:$0xff]
    %v946 = vld [vmem:[#allocation2 + $0x1d8] sm:$0xff]
    %v947 = vld [vmem:[#allocation2 + $0x1e0] sm:$0xff]
    %v948 = vld [vmem:[#allocation2 + $0x1e8] sm:$0xff]
    %v949 = vld [vmem:[#allocation2 + $0x1f0] sm:$0xff]
    %v950 = vld [vmem:[#allocation2 + $0x1f8] sm:$0xff]
    %v951 = vld [vmem:[%s2] sm:$0x1]
    %v953 = vlaneseq
    %v954 = vshrl.u32 %v953, 7
    %v955 = vsub.s32 0, %v954
    %v956 = vrot.slane %v951, %v955
    %v958 = vadd.f32 %v887, %v956
    %v959 = vadd.f32 %v888, %v956
    %v960 = vadd.f32 %v889, %v956
    %v961 = vadd.f32 %v890, %v956
    %v962 = vadd.f32 %v891, %v956
    %v963 = vadd.f32 %v892, %v956
    %v964 = vadd.f32 %v893, %v956
    %v965 = vadd.f32 %v894, %v956
    %v966 = vadd.f32 %v895, %v956
    %v967 = vadd.f32 %v896, %v956
    %v968 = vadd.f32 %v897, %v956
    %v969 = vadd.f32 %v898, %v956
    %v970 = vadd.f32 %v899, %v956
    %v971 = vadd.f32 %v900, %v956
    %v972 = vadd.f32 %v901, %v956
    %v973 = vadd.f32 %v902, %v956
    %v974 = vadd.f32 %v903, %v956
    %v975 = vadd.f32 %v904, %v956
    %v976 = vadd.f32 %v905, %v956
    %v977 = vadd.f32 %v906, %v956
    %v978 = vadd.f32 %v907, %v956
    %v979 = vadd.f32 %v908, %v956
    %v980 = vadd.f32 %v909, %v956
    %v981 = vadd.f32 %v910, %v956
    %v982 = vadd.f32 %v911, %v956
    %v983 = vadd.f32 %v912, %v956
    %v984 = vadd.f32 %v913, %v956
    %v985 = vadd.f32 %v914, %v956
    %v986 = vadd.f32 %v915, %v956
    %v987 = vadd.f32 %v916, %v956
    %v988 = vadd.f32 %v917, %v956
    %v989 = vadd.f32 %v918, %v956
    %v990 = vadd.f32 %v919, %v956
    %v991 = vadd.f32 %v920, %v956
    %v992 = vadd.f32 %v921, %v956
    %v993 = vadd.f32 %v922, %v956
    %v994 = vadd.f32 %v923, %v956
    %v995 = vadd.f32 %v924, %v956
    %v996 = vadd.f32 %v925, %v956
    %v997 = vadd.f32 %v926, %v956
    %v998 = vadd.f32 %v927, %v956
    %v999 = vadd.f32 %v928, %v956
    %v1000 = vadd.f32 %v929, %v956
    %v1001 = vadd.f32 %v930, %v956
    %v1002 = vadd.f32 %v931, %v956
    %v1003 = vadd.f32 %v932, %v956
    %v1004 = vadd.f32 %v933, %v956
    %v1005 = vadd.f32 %v934, %v956
    %v1006 = vadd.f32 %v935, %v956
    %v1007 = vadd.f32 %v936, %v956
    %v1008 = vadd.f32 %v937, %v956
    %v1009 = vadd.f32 %v938, %v956
    %v1010 = vadd.f32 %v939, %v956
    %v1011 = vadd.f32 %v940, %v956
    %v1012 = vadd.f32 %v941, %v956
    %v1013 = vadd.f32 %v942, %v956
    %v1014 = vadd.f32 %v943, %v956
    %v1015 = vadd.f32 %v944, %v956
    %v1016 = vadd.f32 %v945, %v956
    %v1017 = vadd.f32 %v946, %v956
    %v1018 = vadd.f32 %v947, %v956
    %v1019 = vadd.f32 %v948, %v956
    %v1020 = vadd.f32 %v949, %v956
    %v1021 = vadd.f32 %v950, %v956
    %v1022 = vxor.u32 %v958, 2147483648
    %v1023 = vxor.u32 %v959, 2147483648
    %v1024 = vxor.u32 %v960, 2147483648
    %v1025 = vxor.u32 %v961, 2147483648
    %v1026 = vxor.u32 %v962, 2147483648
    %v1027 = vxor.u32 %v963, 2147483648
    %v1028 = vxor.u32 %v964, 2147483648
    %v1029 = vxor.u32 %v965, 2147483648
    %v1030 = vxor.u32 %v966, 2147483648
    %v1031 = vxor.u32 %v967, 2147483648
    %v1032 = vxor.u32 %v968, 2147483648
    %v1033 = vxor.u32 %v969, 2147483648
    %v1034 = vxor.u32 %v970, 2147483648
    %v1035 = vxor.u32 %v971, 2147483648
    %v1036 = vxor.u32 %v972, 2147483648
    %v1037 = vxor.u32 %v973, 2147483648
    %v1038 = vxor.u32 %v974, 2147483648
    %v1039 = vxor.u32 %v975, 2147483648
    %v1040 = vxor.u32 %v976, 2147483648
    %v1041 = vxor.u32 %v977, 2147483648
    %v1042 = vxor.u32 %v978, 2147483648
    %v1043 = vxor.u32 %v979, 2147483648
    %v1044 = vxor.u32 %v980, 2147483648
    %v1045 = vxor.u32 %v981, 2147483648
    %v1046 = vxor.u32 %v982, 2147483648
    %v1047 = vxor.u32 %v983, 2147483648
    %v1048 = vxor.u32 %v984, 2147483648
    %v1049 = vxor.u32 %v985, 2147483648
    %v1050 = vxor.u32 %v986, 2147483648
    %v1051 = vxor.u32 %v987, 2147483648
    %v1052 = vxor.u32 %v988, 2147483648
    %v1053 = vxor.u32 %v989, 2147483648
    %v1054 = vxor.u32 %v990, 2147483648
    %v1055 = vxor.u32 %v991, 2147483648
    %v1056 = vxor.u32 %v992, 2147483648
    %v1057 = vxor.u32 %v993, 2147483648
    %v1058 = vxor.u32 %v994, 2147483648
    %v1059 = vxor.u32 %v995, 2147483648
    %v1060 = vxor.u32 %v996, 2147483648
    %v1061 = vxor.u32 %v997, 2147483648
    %v1062 = vxor.u32 %v998, 2147483648
    %v1063 = vxor.u32 %v999, 2147483648
    %v1064 = vxor.u32 %v1000, 2147483648
    %v1065 = vxor.u32 %v1001, 2147483648
    %v1066 = vxor.u32 %v1002, 2147483648
    %v1067 = vxor.u32 %v1003, 2147483648
    %v1068 = vxor.u32 %v1004, 2147483648
    %v1069 = vxor.u32 %v1005, 2147483648
    %v1070 = vxor.u32 %v1006, 2147483648
    %v1071 = vxor.u32 %v1007, 2147483648
    %v1072 = vxor.u32 %v1008, 2147483648
    %v1073 = vxor.u32 %v1009, 2147483648
    %v1074 = vxor.u32 %v1010, 2147483648
    %v1075 = vxor.u32 %v1011, 2147483648
    %v1076 = vxor.u32 %v1012, 2147483648
    %v1077 = vxor.u32 %v1013, 2147483648
    %v1078 = vxor.u32 %v1014, 2147483648
    %v1079 = vxor.u32 %v1015, 2147483648
    %v1080 = vxor.u32 %v1016, 2147483648
    %v1081 = vxor.u32 %v1017, 2147483648
    %v1082 = vxor.u32 %v1018, 2147483648
    %v1083 = vxor.u32 %v1019, 2147483648
    %v1084 = vxor.u32 %v1020, 2147483648
    %v1085 = vxor.u32 %v1021, 2147483648
    %v1086 = vmul.f32 %v1022, 1.442695
    %v1087 = vpow.pop %v1086
    %v1088 = vmul.f32 %v1023, 1.442695
    %v1089 = vpow.pop %v1088
    %v1090 = vmul.f32 %v1024, 1.442695
    %v1091 = vpow.pop %v1090
    %v1092 = vmul.f32 %v1025, 1.442695
    %v1093 = vpow.pop %v1092
    %v1094 = vmul.f32 %v1026, 1.442695
    %v1095 = vpow.pop %v1094
    %v1096 = vmul.f32 %v1027, 1.442695
    %v1097 = vpow.pop %v1096
    %v1098 = vmul.f32 %v1028, 1.442695
    %v1099 = vpow.pop %v1098
    %v1100 = vmul.f32 %v1029, 1.442695
    %v1101 = vpow.pop %v1100
    %v1102 = vmul.f32 %v1030, 1.442695
    %v1103 = vpow.pop %v1102
    %v1104 = vmul.f32 %v1031, 1.442695
    %v1105 = vpow.pop %v1104
    %v1106 = vmul.f32 %v1032, 1.442695
    %v1107 = vpow.pop %v1106
    %v1108 = vmul.f32 %v1033, 1.442695
    %v1109 = vpow.pop %v1108
    %v1110 = vmul.f32 %v1034, 1.442695
    %v1111 = vpow.pop %v1110
    %v1112 = vmul.f32 %v1035, 1.442695
    %v1113 = vpow.pop %v1112
    %v1114 = vmul.f32 %v1036, 1.442695
    %v1115 = vpow.pop %v1114
    %v1116 = vmul.f32 %v1037, 1.442695
    %v1117 = vpow.pop %v1116
    %v1118 = vmul.f32 %v1038, 1.442695
    %v1119 = vpow.pop %v1118
    %v1120 = vmul.f32 %v1039, 1.442695
    %v1121 = vpow.pop %v1120
    %v1122 = vmul.f32 %v1040, 1.442695
    %v1123 = vpow.pop %v1122
    %v1124 = vmul.f32 %v1041, 1.442695
    %v1125 = vpow.pop %v1124
    %v1126 = vmul.f32 %v1042, 1.442695
    %v1127 = vpow.pop %v1126
    %v1128 = vmul.f32 %v1043, 1.442695
    %v1129 = vpow.pop %v1128
    %v1130 = vmul.f32 %v1044, 1.442695
    %v1131 = vpow.pop %v1130
    %v1132 = vmul.f32 %v1045, 1.442695
    %v1133 = vpow.pop %v1132
    %v1134 = vmul.f32 %v1046, 1.442695
    %v1135 = vpow.pop %v1134
    %v1136 = vmul.f32 %v1047, 1.442695
    %v1137 = vpow.pop %v1136
    %v1138 = vmul.f32 %v1048, 1.442695
    %v1139 = vpow.pop %v1138
    %v1140 = vmul.f32 %v1049, 1.442695
    %v1141 = vpow.pop %v1140
    %v1142 = vmul.f32 %v1050, 1.442695
    %v1143 = vpow.pop %v1142
    %v1144 = vmul.f32 %v1051, 1.442695
    %v1145 = vpow.pop %v1144
    %v1146 = vmul.f32 %v1052, 1.442695
    %v1147 = vpow.pop %v1146
    %v1148 = vmul.f32 %v1053, 1.442695
    %v1149 = vpow.pop %v1148
    %v1150 = vmul.f32 %v1054, 1.442695
    %v1151 = vpow.pop %v1150
    %v1152 = vmul.f32 %v1055, 1.442695
    %v1153 = vpow.pop %v1152
    %v1154 = vmul.f32 %v1056, 1.442695
    %v1155 = vpow.pop %v1154
    %v1156 = vmul.f32 %v1057, 1.442695
    %v1157 = vpow.pop %v1156
    %v1158 = vmul.f32 %v1058, 1.442695
    %v1159 = vpow.pop %v1158
    %v1160 = vmul.f32 %v1059, 1.442695
    %v1161 = vpow.pop %v1160
    %v1162 = vmul.f32 %v1060, 1.442695
    %v1163 = vpow.pop %v1162
    %v1164 = vmul.f32 %v1061, 1.442695
    %v1165 = vpow.pop %v1164
    %v1166 = vmul.f32 %v1062, 1.442695
    %v1167 = vpow.pop %v1166
    %v1168 = vmul.f32 %v1063, 1.442695
    %v1169 = vpow.pop %v1168
    %v1170 = vmul.f32 %v1064, 1.442695
    %v1171 = vpow.pop %v1170
    %v1172 = vmul.f32 %v1065, 1.442695
    %v1173 = vpow.pop %v1172
    %v1174 = vmul.f32 %v1066, 1.442695
    %v1175 = vpow.pop %v1174
    %v1176 = vmul.f32 %v1067, 1.442695
    %v1177 = vpow.pop %v1176
    %v1178 = vmul.f32 %v1068, 1.442695
    %v1179 = vpow.pop %v1178
    %v1180 = vmul.f32 %v1069, 1.442695
    %v1181 = vpow.pop %v1180
    %v1182 = vmul.f32 %v1070, 1.442695
    %v1183 = vpow.pop %v1182
    %v1184 = vmul.f32 %v1071, 1.442695
    %v1185 = vpow.pop %v1184
    %v1186 = vmul.f32 %v1072, 1.442695
    %v1187 = vpow.pop %v1186
    %v1188 = vmul.f32 %v1073, 1.442695
    %v1189 = vpow.pop %v1188
    %v1190 = vmul.f32 %v1074, 1.442695
    %v1191 = vpow.pop %v1190
    %v1192 = vmul.f32 %v1075, 1.442695
    %v1193 = vpow.pop %v1192
    %v1194 = vmul.f32 %v1076, 1.442695
    %v1195 = vpow.pop %v1194
    %v1196 = vmul.f32 %v1077, 1.442695
    %v1197 = vpow.pop %v1196
    %v1198 = vmul.f32 %v1078, 1.442695
    %v1199 = vpow.pop %v1198
    %v1200 = vmul.f32 %v1079, 1.442695
    %v1201 = vpow.pop %v1200
    %v1202 = vmul.f32 %v1080, 1.442695
    %v1203 = vpow.pop %v1202
    %v1204 = vmul.f32 %v1081, 1.442695
    %v1205 = vpow.pop %v1204
    %v1206 = vmul.f32 %v1082, 1.442695
    %v1207 = vpow.pop %v1206
    %v1208 = vmul.f32 %v1083, 1.442695
    %v1209 = vpow.pop %v1208
    %v1210 = vmul.f32 %v1084, 1.442695
    %v1211 = vpow.pop %v1210
    %v1212 = vmul.f32 %v1085, 1.442695
    %v1213 = vpow.pop %v1212
    %v1214 = vadd.f32 %v1087, 1.0
    %v1215 = vadd.f32 %v1089, 1.0
    %v1216 = vadd.f32 %v1091, 1.0
    %v1217 = vadd.f32 %v1093, 1.0
    %v1218 = vadd.f32 %v1095, 1.0
    %v1219 = vadd.f32 %v1097, 1.0
    %v1220 = vadd.f32 %v1099, 1.0
    %v1221 = vadd.f32 %v1101, 1.0
    %v1222 = vadd.f32 %v1103, 1.0
    %v1223 = vadd.f32 %v1105, 1.0
    %v1224 = vadd.f32 %v1107, 1.0
    %v1225 = vadd.f32 %v1109, 1.0
    %v1226 = vadd.f32 %v1111, 1.0
    %v1227 = vadd.f32 %v1113, 1.0
    %v1228 = vadd.f32 %v1115, 1.0
    %v1229 = vadd.f32 %v1117, 1.0
    %v1230 = vadd.f32 %v1119, 1.0
    %v1231 = vadd.f32 %v1121, 1.0
    %v1232 = vadd.f32 %v1123, 1.0
    %v1233 = vadd.f32 %v1125, 1.0
    %v1234 = vadd.f32 %v1127, 1.0
    %v1235 = vadd.f32 %v1129, 1.0
    %v1236 = vadd.f32 %v1131, 1.0
    %v1237 = vadd.f32 %v1133, 1.0
    %v1238 = vadd.f32 %v1135, 1.0
    %v1239 = vadd.f32 %v1137, 1.0
    %v1240 = vadd.f32 %v1139, 1.0
    %v1241 = vadd.f32 %v1141, 1.0
    %v1242 = vadd.f32 %v1143, 1.0
    %v1243 = vadd.f32 %v1145, 1.0
    %v1244 = vadd.f32 %v1147, 1.0
    %v1245 = vadd.f32 %v1149, 1.0
    %v1246 = vadd.f32 %v1151, 1.0
    %v1247 = vadd.f32 %v1153, 1.0
    %v1248 = vadd.f32 %v1155, 1.0
    %v1249 = vadd.f32 %v1157, 1.0
    %v1250 = vadd.f32 %v1159, 1.0
    %v1251 = vadd.f32 %v1161, 1.0
    %v1252 = vadd.f32 %v1163, 1.0
    %v1253 = vadd.f32 %v1165, 1.0
    %v1254 = vadd.f32 %v1167, 1.0
    %v1255 = vadd.f32 %v1169, 1.0
    %v1256 = vadd.f32 %v1171, 1.0
    %v1257 = vadd.f32 %v1173, 1.0
    %v1258 = vadd.f32 %v1175, 1.0
    %v1259 = vadd.f32 %v1177, 1.0
    %v1260 = vadd.f32 %v1179, 1.0
    %v1261 = vadd.f32 %v1181, 1.0
    %v1262 = vadd.f32 %v1183, 1.0
    %v1263 = vadd.f32 %v1185, 1.0
    %v1264 = vadd.f32 %v1187, 1.0
    %v1265 = vadd.f32 %v1189, 1.0
    %v1266 = vadd.f32 %v1191, 1.0
    %v1267 = vadd.f32 %v1193, 1.0
    %v1268 = vadd.f32 %v1195, 1.0
    %v1269 = vadd.f32 %v1197, 1.0
    %v1270 = vadd.f32 %v1199, 1.0
    %v1271 = vadd.f32 %v1201, 1.0
    %v1272 = vadd.f32 %v1203, 1.0
    %v1273 = vadd.f32 %v1205, 1.0
    %v1274 = vadd.f32 %v1207, 1.0
    %v1275 = vadd.f32 %v1209, 1.0
    %v1276 = vadd.f32 %v1211, 1.0
    %v1277 = vadd.f32 %v1213, 1.0
    %v1278 = vrcp.pop %v1214
    %v1279 = vmul.f32 1.0, %v1278
    %v1280 = vrcp.pop %v1215
    %v1281 = vmul.f32 1.0, %v1280
    %v1282 = vrcp.pop %v1216
    %v1283 = vmul.f32 1.0, %v1282
    %v1284 = vrcp.pop %v1217
    %v1285 = vmul.f32 1.0, %v1284
    %v1286 = vrcp.pop %v1218
    %v1287 = vmul.f32 1.0, %v1286
    %v1288 = vrcp.pop %v1219
    %v1289 = vmul.f32 1.0, %v1288
    %v1290 = vrcp.pop %v1220
    %v1291 = vmul.f32 1.0, %v1290
    %v1292 = vrcp.pop %v1221
    %v1293 = vmul.f32 1.0, %v1292
    %v1294 = vrcp.pop %v1222
    %v1295 = vmul.f32 1.0, %v1294
    %v1296 = vrcp.pop %v1223
    %v1297 = vmul.f32 1.0, %v1296
    %v1298 = vrcp.pop %v1224
    %v1299 = vmul.f32 1.0, %v1298
    %v1300 = vrcp.pop %v1225
    %v1301 = vmul.f32 1.0, %v1300
    %v1302 = vrcp.pop %v1226
    %v1303 = vmul.f32 1.0, %v1302
    %v1304 = vrcp.pop %v1227
    %v1305 = vmul.f32 1.0, %v1304
    %v1306 = vrcp.pop %v1228
    %v1307 = vmul.f32 1.0, %v1306
    %v1308 = vrcp.pop %v1229
    %v1309 = vmul.f32 1.0, %v1308
    %v1310 = vrcp.pop %v1230
    %v1311 = vmul.f32 1.0, %v1310
    %v1312 = vrcp.pop %v1231
    %v1313 = vmul.f32 1.0, %v1312
    %v1314 = vrcp.pop %v1232
    %v1315 = vmul.f32 1.0, %v1314
    %v1316 = vrcp.pop %v1233
    %v1317 = vmul.f32 1.0, %v1316
    %v1318 = vrcp.pop %v1234
    %v1319 = vmul.f32 1.0, %v1318
    %v1320 = vrcp.pop %v1235
    %v1321 = vmul.f32 1.0, %v1320
    %v1322 = vrcp.pop %v1236
    %v1323 = vmul.f32 1.0, %v1322
    %v1324 = vrcp.pop %v1237
    %v1325 = vmul.f32 1.0, %v1324
    %v1326 = vrcp.pop %v1238
    %v1327 = vmul.f32 1.0, %v1326
    %v1328 = vrcp.pop %v1239
    %v1329 = vmul.f32 1.0, %v1328
    %v1330 = vrcp.pop %v1240
    %v1331 = vmul.f32 1.0, %v1330
    %v1332 = vrcp.pop %v1241
    %v1333 = vmul.f32 1.0, %v1332
    %v1334 = vrcp.pop %v1242
    %v1335 = vmul.f32 1.0, %v1334
    %v1336 = vrcp.pop %v1243
    %v1337 = vmul.f32 1.0, %v1336
    %v1338 = vrcp.pop %v1244
    %v1339 = vmul.f32 1.0, %v1338
    %v1340 = vrcp.pop %v1245
    %v1341 = vmul.f32 1.0, %v1340
    %v1342 = vrcp.pop %v1246
    %v1343 = vmul.f32 1.0, %v1342
    %v1344 = vrcp.pop %v1247
    %v1345 = vmul.f32 1.0, %v1344
    %v1346 = vrcp.pop %v1248
    %v1347 = vmul.f32 1.0, %v1346
    %v1348 = vrcp.pop %v1249
    %v1349 = vmul.f32 1.0, %v1348
    %v1350 = vrcp.pop %v1250
    %v1351 = vmul.f32 1.0, %v1350
    %v1352 = vrcp.pop %v1251
    %v1353 = vmul.f32 1.0, %v1352
    %v1354 = vrcp.pop %v1252
    %v1355 = vmul.f32 1.0, %v1354
    %v1356 = vrcp.pop %v1253
    %v1357 = vmul.f32 1.0, %v1356
    %v1358 = vrcp.pop %v1254
    %v1359 = vmul.f32 1.0, %v1358
    %v1360 = vrcp.pop %v1255
    %v1361 = vmul.f32 1.0, %v1360
    %v1362 = vrcp.pop %v1256
    %v1363 = vmul.f32 1.0, %v1362
    %v1364 = vrcp.pop %v1257
    %v1365 = vmul.f32 1.0, %v1364
    %v1366 = vrcp.pop %v1258
    %v1367 = vmul.f32 1.0, %v1366
    %v1368 = vrcp.pop %v1259
    %v1369 = vmul.f32 1.0, %v1368
    %v1370 = vrcp.pop %v1260
    %v1371 = vmul.f32 1.0, %v1370
    %v1372 = vrcp.pop %v1261
    %v1373 = vmul.f32 1.0, %v1372
    %v1374 = vrcp.pop %v1262
    %v1375 = vmul.f32 1.0, %v1374
    %v1376 = vrcp.pop %v1263
    %v1377 = vmul.f32 1.0, %v1376
    %v1378 = vrcp.pop %v1264
    %v1379 = vmul.f32 1.0, %v1378
    %v1380 = vrcp.pop %v1265
    %v1381 = vmul.f32 1.0, %v1380
    %v1382 = vrcp.pop %v1266
    %v1383 = vmul.f32 1.0, %v1382
    %v1384 = vrcp.pop %v1267
    %v1385 = vmul.f32 1.0, %v1384
    %v1386 = vrcp.pop %v1268
    %v1387 = vmul.f32 1.0, %v1386
    %v1388 = vrcp.pop %v1269
    %v1389 = vmul.f32 1.0, %v1388
    %v1390 = vrcp.pop %v1270
    %v1391 = vmul.f32 1.0, %v1390
    %v1392 = vrcp.pop %v1271
    %v1393 = vmul.f32 1.0, %v1392
    %v1394 = vrcp.pop %v1272
    %v1395 = vmul.f32 1.0, %v1394
    %v1396 = vrcp.pop %v1273
    %v1397 = vmul.f32 1.0, %v1396
    %v1398 = vrcp.pop %v1274
    %v1399 = vmul.f32 1.0, %v1398
    %v1400 = vrcp.pop %v1275
    %v1401 = vmul.f32 1.0, %v1400
    %v1402 = vrcp.pop %v1276
    %v1403 = vmul.f32 1.0, %v1402
    %v1404 = vrcp.pop %v1277
    %v1405 = vmul.f32 1.0, %v1404
    %v1406 = vmul.f32 %v958, %v1279
    %v1407 = vmul.f32 %v959, %v1281
    %v1408 = vmul.f32 %v960, %v1283
    %v1409 = vmul.f32 %v961, %v1285
    %v1410 = vmul.f32 %v962, %v1287
    %v1411 = vmul.f32 %v963, %v1289
    %v1412 = vmul.f32 %v964, %v1291
    %v1413 = vmul.f32 %v965, %v1293
    %v1414 = vmul.f32 %v966, %v1295
    %v1415 = vmul.f32 %v967, %v1297
    %v1416 = vmul.f32 %v968, %v1299
    %v1417 = vmul.f32 %v969, %v1301
    %v1418 = vmul.f32 %v970, %v1303
    %v1419 = vmul.f32 %v971, %v1305
    %v1420 = vmul.f32 %v972, %v1307
    %v1421 = vmul.f32 %v973, %v1309
    %v1422 = vmul.f32 %v974, %v1311
    %v1423 = vmul.f32 %v975, %v1313
    %v1424 = vmul.f32 %v976, %v1315
    %v1425 = vmul.f32 %v977, %v1317
    %v1426 = vmul.f32 %v978, %v1319
    %v1427 = vmul.f32 %v979, %v1321
    %v1428 = vmul.f32 %v980, %v1323
    %v1429 = vmul.f32 %v981, %v1325
    %v1430 = vmul.f32 %v982, %v1327
    %v1431 = vmul.f32 %v983, %v1329
    %v1432 = vmul.f32 %v984, %v1331
    %v1433 = vmul.f32 %v985, %v1333
    %v1434 = vmul.f32 %v986, %v1335
    %v1435 = vmul.f32 %v987, %v1337
    %v1436 = vmul.f32 %v988, %v1339
    %v1437 = vmul.f32 %v989, %v1341
    %v1438 = vmul.f32 %v990, %v1343
    %v1439 = vmul.f32 %v991, %v1345
    %v1440 = vmul.f32 %v992, %v1347
    %v1441 = vmul.f32 %v993, %v1349
    %v1442 = vmul.f32 %v994, %v1351
    %v1443 = vmul.f32 %v995, %v1353
    %v1444 = vmul.f32 %v996, %v1355
    %v1445 = vmul.f32 %v997, %v1357
    %v1446 = vmul.f32 %v998, %v1359
    %v1447 = vmul.f32 %v999, %v1361
    %v1448 = vmul.f32 %v1000, %v1363
    %v1449 = vmul.f32 %v1001, %v1365
    %v1450 = vmul.f32 %v1002, %v1367
    %v1451 = vmul.f32 %v1003, %v1369
    %v1452 = vmul.f32 %v1004, %v1371
    %v1453 = vmul.f32 %v1005, %v1373
    %v1454 = vmul.f32 %v1006, %v1375
    %v1455 = vmul.f32 %v1007, %v1377
    %v1456 = vmul.f32 %v1008, %v1379
    %v1457 = vmul.f32 %v1009, %v1381
    %v1458 = vmul.f32 %v1010, %v1383
    %v1459 = vmul.f32 %v1011, %v1385
    %v1460 = vmul.f32 %v1012, %v1387
    %v1461 = vmul.f32 %v1013, %v1389
    %v1462 = vmul.f32 %v1014, %v1391
    %v1463 = vmul.f32 %v1015, %v1393
    %v1464 = vmul.f32 %v1016, %v1395
    %v1465 = vmul.f32 %v1017, %v1397
    %v1466 = vmul.f32 %v1018, %v1399
    %v1467 = vmul.f32 %v1019, %v1401
    %v1468 = vmul.f32 %v1020, %v1403
    %v1469 = vmul.f32 %v1021, %v1405
    %v1470 = vpack.c.bf16 %v1407, %v1406
    %v1471 = vpack.c.bf16 %v1409, %v1408
    %v1472 = vpack.c.bf16 %v1411, %v1410
    %v1473 = vpack.c.bf16 %v1413, %v1412
    %v1474 = vpack.c.bf16 %v1415, %v1414
    %v1475 = vpack.c.bf16 %v1417, %v1416
    %v1476 = vpack.c.bf16 %v1419, %v1418
    %v1477 = vpack.c.bf16 %v1421, %v1420
    %v1478 = vpack.c.bf16 %v1423, %v1422
    %v1479 = vpack.c.bf16 %v1425, %v1424
    %v1480 = vpack.c.bf16 %v1427, %v1426
    %v1481 = vpack.c.bf16 %v1429, %v1428
    %v1482 = vpack.c.bf16 %v1431, %v1430
    %v1483 = vpack.c.bf16 %v1433, %v1432
    %v1484 = vpack.c.bf16 %v1435, %v1434
    %v1485 = vpack.c.bf16 %v1437, %v1436
    %v1486 = vpack.c.bf16 %v1439, %v1438
    %v1487 = vpack.c.bf16 %v1441, %v1440
    %v1488 = vpack.c.bf16 %v1443, %v1442
    %v1489 = vpack.c.bf16 %v1445, %v1444
    %v1490 = vpack.c.bf16 %v1447, %v1446
    %v1491 = vpack.c.bf16 %v1449, %v1448
    %v1492 = vpack.c.bf16 %v1451, %v1450
    %v1493 = vpack.c.bf16 %v1453, %v1452
    %v1494 = vpack.c.bf16 %v1455, %v1454
    %v1495 = vpack.c.bf16 %v1457, %v1456
    %v1496 = vpack.c.bf16 %v1459, %v1458
    %v1497 = vpack.c.bf16 %v1461, %v1460
    %v1498 = vpack.c.bf16 %v1463, %v1462
    %v1499 = vpack.c.bf16 %v1465, %v1464
    %v1500 = vpack.c.bf16 %v1467, %v1466
    %v1501 = vpack.c.bf16 %v1469, %v1468
    %v1534 = vunpack.c.l.b16 %v1470
    %v1535 = vunpack.c.h.b16 %v1470
    %v1536 = vunpack.c.l.b16 %v1471
    %v1537 = vunpack.c.h.b16 %v1471
    %v1538 = vunpack.c.l.b16 %v1472
    %v1539 = vunpack.c.h.b16 %v1472
    %v1540 = vunpack.c.l.b16 %v1473
    %v1541 = vunpack.c.h.b16 %v1473
    %v1542 = vunpack.c.l.b16 %v1474
    %v1543 = vunpack.c.h.b16 %v1474
    %v1544 = vunpack.c.l.b16 %v1475
    %v1545 = vunpack.c.h.b16 %v1475
    %v1546 = vunpack.c.l.b16 %v1476
    %v1547 = vunpack.c.h.b16 %v1476
    %v1548 = vunpack.c.l.b16 %v1477
    %v1549 = vunpack.c.h.b16 %v1477
    %v1550 = vunpack.c.l.b16 %v1478
    %v1551 = vunpack.c.h.b16 %v1478
    %v1552 = vunpack.c.l.b16 %v1479
    %v1553 = vunpack.c.h.b16 %v1479
    %v1554 = vunpack.c.l.b16 %v1480
    %v1555 = vunpack.c.h.b16 %v1480
    %v1556 = vunpack.c.l.b16 %v1481
    %v1557 = vunpack.c.h.b16 %v1481
    %v1558 = vunpack.c.l.b16 %v1482
    %v1559 = vunpack.c.h.b16 %v1482
    %v1560 = vunpack.c.l.b16 %v1483
    %v1561 = vunpack.c.h.b16 %v1483
    %v1562 = vunpack.c.l.b16 %v1484
    %v1563 = vunpack.c.h.b16 %v1484
    %v1564 = vunpack.c.l.b16 %v1485
    %v1565 = vunpack.c.h.b16 %v1485
    %v1566 = vunpack.c.l.b16 %v1486
    %v1567 = vunpack.c.h.b16 %v1486
    %v1568 = vunpack.c.l.b16 %v1487
    %v1569 = vunpack.c.h.b16 %v1487
    %v1570 = vunpack.c.l.b16 %v1488
    %v1571 = vunpack.c.h.b16 %v1488
    %v1572 = vunpack.c.l.b16 %v1489
    %v1573 = vunpack.c.h.b16 %v1489
    %v1574 = vunpack.c.l.b16 %v1490
    %v1575 = vunpack.c.h.b16 %v1490
    %v1576 = vunpack.c.l.b16 %v1491
    %v1577 = vunpack.c.h.b16 %v1491
    %v1578 = vunpack.c.l.b16 %v1492
    %v1579 = vunpack.c.h.b16 %v1492
    %v1580 = vunpack.c.l.b16 %v1493
    %v1581 = vunpack.c.h.b16 %v1493
    %v1582 = vunpack.c.l.b16 %v1494
    %v1583 = vunpack.c.h.b16 %v1494
    %v1584 = vunpack.c.l.b16 %v1495
    %v1585 = vunpack.c.h.b16 %v1495
    %v1586 = vunpack.c.l.b16 %v1496
    %v1587 = vunpack.c.h.b16 %v1496
    %v1588 = vunpack.c.l.b16 %v1497
    %v1589 = vunpack.c.h.b16 %v1497
    %v1590 = vunpack.c.l.b16 %v1498
    %v1591 = vunpack.c.h.b16 %v1498
    %v1592 = vunpack.c.l.b16 %v1499
    %v1593 = vunpack.c.h.b16 %v1499
    %v1594 = vunpack.c.l.b16 %v1500
    %v1595 = vunpack.c.h.b16 %v1500
    %v1596 = vunpack.c.l.b16 %v1501
    %v1597 = vunpack.c.h.b16 %v1501
    %v1598 = vpack.c.b16 %v1534, %v1534
    %v1599 = vpack.c.b16 %v1535, %v1535
    %v1600 = vpack.c.b16 %v1536, %v1536
    %v1601 = vpack.c.b16 %v1537, %v1537
    %v1602 = vpack.c.b16 %v1538, %v1538
    %v1603 = vpack.c.b16 %v1539, %v1539
    %v1604 = vpack.c.b16 %v1540, %v1540
    %v1605 = vpack.c.b16 %v1541, %v1541
    %v1606 = vpack.c.b16 %v1542, %v1542
    %v1607 = vpack.c.b16 %v1543, %v1543
    %v1608 = vpack.c.b16 %v1544, %v1544
    %v1609 = vpack.c.b16 %v1545, %v1545
    %v1610 = vpack.c.b16 %v1546, %v1546
    %v1611 = vpack.c.b16 %v1547, %v1547
    %v1612 = vpack.c.b16 %v1548, %v1548
    %v1613 = vpack.c.b16 %v1549, %v1549
    %v1614 = vpack.c.b16 %v1550, %v1550
    %v1615 = vpack.c.b16 %v1551, %v1551
    %v1616 = vpack.c.b16 %v1552, %v1552
    %v1617 = vpack.c.b16 %v1553, %v1553
    %v1618 = vpack.c.b16 %v1554, %v1554
    %v1619 = vpack.c.b16 %v1555, %v1555
    %v1620 = vpack.c.b16 %v1556, %v1556
    %v1621 = vpack.c.b16 %v1557, %v1557
    %v1622 = vpack.c.b16 %v1558, %v1558
    %v1623 = vpack.c.b16 %v1559, %v1559
    %v1624 = vpack.c.b16 %v1560, %v1560
    %v1625 = vpack.c.b16 %v1561, %v1561
    %v1626 = vpack.c.b16 %v1562, %v1562
    %v1627 = vpack.c.b16 %v1563, %v1563
    %v1628 = vpack.c.b16 %v1564, %v1564
    %v1629 = vpack.c.b16 %v1565, %v1565
    %v1630 = vpack.c.b16 %v1566, %v1566
    %v1631 = vpack.c.b16 %v1567, %v1567
    %v1632 = vpack.c.b16 %v1568, %v1568
    %v1633 = vpack.c.b16 %v1569, %v1569
    %v1634 = vpack.c.b16 %v1570, %v1570
    %v1635 = vpack.c.b16 %v1571, %v1571
    %v1636 = vpack.c.b16 %v1572, %v1572
    %v1637 = vpack.c.b16 %v1573, %v1573
    %v1638 = vpack.c.b16 %v1574, %v1574
    %v1639 = vpack.c.b16 %v1575, %v1575
    %v1640 = vpack.c.b16 %v1576, %v1576
    %v1641 = vpack.c.b16 %v1577, %v1577
    %v1642 = vpack.c.b16 %v1578, %v1578
    %v1643 = vpack.c.b16 %v1579, %v1579
    %v1644 = vpack.c.b16 %v1580, %v1580
    %v1645 = vpack.c.b16 %v1581, %v1581
    %v1646 = vpack.c.b16 %v1582, %v1582
    %v1647 = vpack.c.b16 %v1583, %v1583
    %v1648 = vpack.c.b16 %v1584, %v1584
    %v1649 = vpack.c.b16 %v1585, %v1585
    %v1650 = vpack.c.b16 %v1586, %v1586
    %v1651 = vpack.c.b16 %v1587, %v1587
    %v1652 = vpack.c.b16 %v1588, %v1588
    %v1653 = vpack.c.b16 %v1589, %v1589
    %v1654 = vpack.c.b16 %v1590, %v1590
    %v1655 = vpack.c.b16 %v1591, %v1591
    %v1656 = vpack.c.b16 %v1592, %v1592
    %v1657 = vpack.c.b16 %v1593, %v1593
    %v1658 = vpack.c.b16 %v1594, %v1594
    %v1659 = vpack.c.b16 %v1595, %v1595
    %v1660 = vpack.c.b16 %v1596, %v1596
    %v1661 = vpack.c.b16 %v1597, %v1597
    %1726 = vst [vmem:[%s3] sm:$0xf] %v1598
    %1727 = vst [vmem:[%s3 + $0x4] sm:$0xf] %v1599
    %1728 = vst [vmem:[%s3 + $0x8] sm:$0xf] %v1600
    %1729 = vst [vmem:[%s3 + $0xc] sm:$0xf] %v1601
    %1730 = vst [vmem:[%s3 + $0x10] sm:$0xf] %v1602
    %1731 = vst [vmem:[%s3 + $0x14] sm:$0xf] %v1603
    %1732 = vst [vmem:[%s3 + $0x18] sm:$0xf] %v1604
    %1733 = vst [vmem:[%s3 + $0x1c] sm:$0xf] %v1605
    %1734 = vst [vmem:[%s3 + $0x20] sm:$0xf] %v1606
    %1735 = vst [vmem:[%s3 + $0x24] sm:$0xf] %v1607
    %1736 = vst [vmem:[%s3 + $0x28] sm:$0xf] %v1608
    %1737 = vst [vmem:[%s3 + $0x2c] sm:$0xf] %v1609
    %1738 = vst [vmem:[%s3 + $0x30] sm:$0xf] %v1610
    %1739 = vst [vmem:[%s3 + $0x34] sm:$0xf] %v1611
    %1740 = vst [vmem:[%s3 + $0x38] sm:$0xf] %v1612
    %1741 = vst [vmem:[%s3 + $0x3c] sm:$0xf] %v1613
    %1742 = vst [vmem:[%s3 + $0x40] sm:$0xf] %v1614
    %1743 = vst [vmem:[%s3 + $0x44] sm:$0xf] %v1615
    %1744 = vst [vmem:[%s3 + $0x48] sm:$0xf] %v1616
    %1745 = vst [vmem:[%s3 + $0x4c] sm:$0xf] %v1617
    %1746 = vst [vmem:[%s3 + $0x50] sm:$0xf] %v1618
    %1747 = vst [vmem:[%s3 + $0x54] sm:$0xf] %v1619
    %1748 = vst [vmem:[%s3 + $0x58] sm:$0xf] %v1620
    %1749 = vst [vmem:[%s3 + $0x5c] sm:$0xf] %v1621
    %1750 = vst [vmem:[%s3 + $0x60] sm:$0xf] %v1622
    %1751 = vst [vmem:[%s3 + $0x64] sm:$0xf] %v1623
    %1752 = vst [vmem:[%s3 + $0x68] sm:$0xf] %v1624
    %1753 = vst [vmem:[%s3 + $0x6c] sm:$0xf] %v1625
    %1754 = vst [vmem:[%s3 + $0x70] sm:$0xf] %v1626
    %1755 = vst [vmem:[%s3 + $0x74] sm:$0xf] %v1627
    %1756 = vst [vmem:[%s3 + $0x78] sm:$0xf] %v1628
    %1757 = vst [vmem:[%s3 + $0x7c] sm:$0xf] %v1629
    %1758 = vst [vmem:[%s3 + $0x80] sm:$0xf] %v1630
    %1759 = vst [vmem:[%s3 + $0x84] sm:$0xf] %v1631
    %1760 = vst [vmem:[%s3 + $0x88] sm:$0xf] %v1632
    %1761 = vst [vmem:[%s3 + $0x8c] sm:$0xf] %v1633
    %1762 = vst [vmem:[%s3 + $0x90] sm:$0xf] %v1634
    %1763 = vst [vmem:[%s3 + $0x94] sm:$0xf] %v1635
    %1764 = vst [vmem:[%s3 + $0x98] sm:$0xf] %v1636
    %1765 = vst [vmem:[%s3 + $0x9c] sm:$0xf] %v1637
    %1766 = vst [vmem:[%s3 + $0xa0] sm:$0xf] %v1638
    %1767 = vst [vmem:[%s3 + $0xa4] sm:$0xf] %v1639
    %1768 = vst [vmem:[%s3 + $0xa8] sm:$0xf] %v1640
    %1769 = vst [vmem:[%s3 + $0xac] sm:$0xf] %v1641
    %1770 = vst [vmem:[%s3 + $0xb0] sm:$0xf] %v1642
    %1771 = vst [vmem:[%s3 + $0xb4] sm:$0xf] %v1643
    %1772 = vst [vmem:[%s3 + $0xb8] sm:$0xf] %v1644
    %1773 = vst [vmem:[%s3 + $0xbc] sm:$0xf] %v1645
    %1774 = vst [vmem:[%s3 + $0xc0] sm:$0xf] %v1646
    %1775 = vst [vmem:[%s3 + $0xc4] sm:$0xf] %v1647
    %1776 = vst [vmem:[%s3 + $0xc8] sm:$0xf] %v1648
    %1777 = vst [vmem:[%s3 + $0xcc] sm:$0xf] %v1649
    %1778 = vst [vmem:[%s3 + $0xd0] sm:$0xf] %v1650
    %1779 = vst [vmem:[%s3 + $0xd4] sm:$0xf] %v1651
    %1780 = vst [vmem:[%s3 + $0xd8] sm:$0xf] %v1652
    %1781 = vst [vmem:[%s3 + $0xdc] sm:$0xf] %v1653
    %1782 = vst [vmem:[%s3 + $0xe0] sm:$0xf] %v1654
    %1783 = vst [vmem:[%s3 + $0xe4] sm:$0xf] %v1655
    %1784 = vst [vmem:[%s3 + $0xe8] sm:$0xf] %v1656
    %1785 = vst [vmem:[%s3 + $0xec] sm:$0xf] %v1657
    %1786 = vst [vmem:[%s3 + $0xf0] sm:$0xf] %v1658
    %1787 = vst [vmem:[%s3 + $0xf4] sm:$0xf] %v1659
    %1788 = vst [vmem:[%s3 + $0xf8] sm:$0xf] %v1660
    %1789 = vst [vmem:[%s3 + $0xfc] sm:$0xf] %v1661
  $region21: #{_lambda_.8} parent=0 // pred_fallthru
    _
  // Predicated region
  $region22: #{_lambda_.8} parent=0 // pred_check
    _
  $region23: #{_lambda_.8} parent=0 // pred_check_branch
    %1791 = sbr.rel (0) target = $region25
  $region24: #{_lambda_.8} parent=0 // pred_region
    _
  $region25: #{_lambda_.8} parent=0 // pred_fallthru
    _
  // Predicated region
  $region26: #{_lambda_.8} parent=0 // pred_check
    _
  $region27: #{_lambda_.8} parent=0 // pred_check_branch
    %1793 = sbr.rel (0) target = $region29
  $region28: #{_lambda_.8} parent=0 // pred_region
    _
  $region29: #{_lambda_.8} parent=0 // pred_fallthru
    _

// kernel: _lambda_.9
$region0: #{_lambda_.9}
  #allocation0 [shape = 'u32[]', space=smem, size = 0x4, offset = 0x4, fixed_abs, tag = 'smem constant byte address 0x4 - core index']
  #allocation1 [shape = 'u32[144,128]{1,0:T(1,128)}', space=vmem, size = 0x12000, scoped, tag = 'internal scratch']
  #allocation2 [shape = 'f32[128,128]{1,0:T(8,128)}', space=vmem, size = 0x10000, scoped, tag = 'scratch operand']
  %s0 = inlined_call_operand.vmem [shape: bf16[128,128], index: 0, kind: input, shape index: {}]
  %s1 = inlined_call_operand.vmem [shape: bf16[128,128], index: 1, kind: input, shape index: {}]
  %s2 = inlined_call_operand.vmem [shape: bf16[128,128], index: 2, kind: output, shape index: {0}]
  %s3 = inlined_call_operand.vmem [shape: f32[1,1,128], index: 3, kind: output, shape index: {1}]
  %s4 = inlined_call_operand.vmem [shape: f32[1,1,128], index: 4, kind: output, shape index: {2}]
  %5 = xla_tuple %s2, %s3, %s4
  %s6 = sld [smem:[#allocation0]]
  $region42: #{_lambda_.9} parent=0
    _
  %s8 = ssub.s32 1, %s6
  %s9 = scalar_select 0, %s8, %s6
  // Predicated region
  $region2: #{_lambda_.9} parent=0 // pred_check
    _
  $region3: #{_lambda_.9} parent=0 // pred_check_branch
    %11 = sbr.rel (0) target = $region5
  $region4: #{_lambda_.9} parent=0 // pred_region
    _
  $region5: #{_lambda_.9} parent=0 // pred_fallthru
    _
  // Predicated region
  $region6: #{_lambda_.9} parent=0 // pred_check
    _
  $region7: #{_lambda_.9} parent=0 // pred_check_branch
    %13 = sbr.rel (0) target = $region9
  $region8: #{_lambda_.9} parent=0 // pred_region
    _
  $region9: #{_lambda_.9} parent=0 // pred_fallthru
    _
  %p15 = scmp.eq.s32.totalorder 0, 0
  // Predicated region
  $region10: #{_lambda_.9} parent=0 // pred_check
    %p16 = pneg %p15
  $region11: #{_lambda_.9} parent=0 // pred_check_branch
    %18 = sbr.rel (%p16) target = $region13
  $region12: #{_lambda_.9} parent=0 // pred_region
    %19 = vst [vmem:[#allocation2] sm:$0xff] 0.0
    %20 = vst [vmem:[#allocation2 + $0x8] sm:$0xff] 0.0
    %21 = vst [vmem:[#allocation2 + $0x10] sm:$0xff] 0.0
    %22 = vst [vmem:[#allocation2 + $0x18] sm:$0xff] 0.0
    %23 = vst [vmem:[#allocation2 + $0x20] sm:$0xff] 0.0
    %24 = vst [vmem:[#allocation2 + $0x28] sm:$0xff] 0.0
    %25 = vst [vmem:[#allocation2 + $0x30] sm:$0xff] 0.0
    %26 = vst [vmem:[#allocation2 + $0x38] sm:$0xff] 0.0
    %27 = vst [vmem:[#allocation2 + $0x40] sm:$0xff] 0.0
    %28 = vst [vmem:[#allocation2 + $0x48] sm:$0xff] 0.0
    %29 = vst [vmem:[#allocation2 + $0x50] sm:$0xff] 0.0
    %30 = vst [vmem:[#allocation2 + $0x58] sm:$0xff] 0.0
    %31 = vst [vmem:[#allocation2 + $0x60] sm:$0xff] 0.0
    %32 = vst [vmem:[#allocation2 + $0x68] sm:$0xff] 0.0
    %33 = vst [vmem:[#allocation2 + $0x70] sm:$0xff] 0.0
    %34 = vst [vmem:[#allocation2 + $0x78] sm:$0xff] 0.0
  $region13: #{_lambda_.9} parent=0 // pred_fallthru
    _
  %v35 = vld [vmem:[#allocation2] sm:$0xff]
  %v36 = vld [vmem:[#allocation2 + $0x8] sm:$0xff]
  %v37 = vld [vmem:[#allocation2 + $0x10] sm:$0xff]
  %v38 = vld [vmem:[#allocation2 + $0x18] sm:$0xff]
  %v39 = vld [vmem:[#allocation2 + $0x20] sm:$0xff]
  %v40 = vld [vmem:[#allocation2 + $0x28] sm:$0xff]
  %v41 = vld [vmem:[#allocation2 + $0x30] sm:$0xff]
  %v42 = vld [vmem:[#allocation2 + $0x38] sm:$0xff]
  %v43 = vld [vmem:[#allocation2 + $0x40] sm:$0xff]
  %v44 = vld [vmem:[#allocation2 + $0x48] sm:$0xff]
  %v45 = vld [vmem:[#allocation2 + $0x50] sm:$0xff]
  %v46 = vld [vmem:[#allocation2 + $0x58] sm:$0xff]
  %v47 = vld [vmem:[#allocation2 + $0x60] sm:$0xff]
  %v48 = vld [vmem:[#allocation2 + $0x68] sm:$0xff]
  %v49 = vld [vmem:[#allocation2 + $0x70] sm:$0xff]
  %v50 = vld [vmem:[#allocation2 + $0x78] sm:$0xff]
  %v51 = vld [vmem:[%s0] sm:$0xf]
  %v52 = vld [vmem:[%s0 + $0x4] sm:$0xf]
  %v53 = vld [vmem:[%s0 + $0x8] sm:$0xf]
  %v54 = vld [vmem:[%s0 + $0xc] sm:$0xf]
  %v55 = vld [vmem:[%s0 + $0x10] sm:$0xf]
  %v56 = vld [vmem:[%s0 + $0x14] sm:$0xf]
  %v57 = vld [vmem:[%s0 + $0x18] sm:$0xf]
  %v58 = vld [vmem:[%s0 + $0x1c] sm:$0xf]
  %v59 = vld [vmem:[%s0 + $0x20] sm:$0xf]
  %v60 = vld [vmem:[%s0 + $0x24] sm:$0xf]
  %v61 = vld [vmem:[%s0 + $0x28] sm:$0xf]
  %v62 = vld [vmem:[%s0 + $0x2c] sm:$0xf]
  %v63 = vld [vmem:[%s0 + $0x30] sm:$0xf]
  %v64 = vld [vmem:[%s0 + $0x34] sm:$0xf]
  %v65 = vld [vmem:[%s0 + $0x38] sm:$0xf]
  %v66 = vld [vmem:[%s0 + $0x3c] sm:$0xf]
  %v67 = vld [vmem:[%s1] sm:$0xf]
  %v68 = vld [vmem:[%s1 + $0x4] sm:$0xf]
  %v69 = vld [vmem:[%s1 + $0x8] sm:$0xf]
  %v70 = vld [vmem:[%s1 + $0xc] sm:$0xf]
  %v71 = vld [vmem:[%s1 + $0x10] sm:$0xf]
  %v72 = vld [vmem:[%s1 + $0x14] sm:$0xf]
  %v73 = vld [vmem:[%s1 + $0x18] sm:$0xf]
  %v74 = vld [vmem:[%s1 + $0x1c] sm:$0xf]
  %v75 = vld [vmem:[%s1 + $0x20] sm:$0xf]
  %v76 = vld [vmem:[%s1 + $0x24] sm:$0xf]
  %v77 = vld [vmem:[%s1 + $0x28] sm:$0xf]
  %v78 = vld [vmem:[%s1 + $0x2c] sm:$0xf]
  %v79 = vld [vmem:[%s1 + $0x30] sm:$0xf]
  %v80 = vld [vmem:[%s1 + $0x34] sm:$0xf]
  %v81 = vld [vmem:[%s1 + $0x38] sm:$0xf]
  %v82 = vld [vmem:[%s1 + $0x3c] sm:$0xf]
  %v99 = vunpack.c.l.b16 %v51
  %v100 = vunpack.c.l.b16 %v52
  %v101 = vunpack.c.l.b16 %v53
  %v102 = vunpack.c.l.b16 %v54
  %v103 = vunpack.c.l.b16 %v55
  %v104 = vunpack.c.l.b16 %v56
  %v105 = vunpack.c.l.b16 %v57
  %v106 = vunpack.c.l.b16 %v58
  %v107 = vunpack.c.l.b16 %v59
  %v108 = vunpack.c.l.b16 %v60
  %v109 = vunpack.c.l.b16 %v61
  %v110 = vunpack.c.l.b16 %v62
  %v111 = vunpack.c.l.b16 %v63
  %v112 = vunpack.c.l.b16 %v64
  %v113 = vunpack.c.l.b16 %v65
  %v114 = vunpack.c.l.b16 %v66
  %v115 = vpack.c.b16 %v100, %v99
  %v116 = vpack.c.b16 %v102, %v101
  %v117 = vpack.c.b16 %v104, %v103
  %v118 = vpack.c.b16 %v106, %v105
  %v119 = vpack.c.b16 %v108, %v107
  %v120 = vpack.c.b16 %v110, %v109
  %v121 = vpack.c.b16 %v112, %v111
  %v122 = vpack.c.b16 %v114, %v113
  %v147 = vunpack.c.l.b16 %v67
  %v148 = vunpack.c.l.b16 %v68
  %v149 = vunpack.c.l.b16 %v69
  %v150 = vunpack.c.l.b16 %v70
  %v151 = vunpack.c.l.b16 %v71
  %v152 = vunpack.c.l.b16 %v72
  %v153 = vunpack.c.l.b16 %v73
  %v154 = vunpack.c.l.b16 %v74
  %v155 = vunpack.c.l.b16 %v75
  %v156 = vunpack.c.l.b16 %v76
  %v157 = vunpack.c.l.b16 %v77
  %v158 = vunpack.c.l.b16 %v78
  %v159 = vunpack.c.l.b16 %v79
  %v160 = vunpack.c.l.b16 %v80
  %v161 = vunpack.c.l.b16 %v81
  %v162 = vunpack.c.l.b16 %v82
  %v163 = vpack.c.b16 %v148, %v147
  %v164 = vpack.c.b16 %v150, %v149
  %v165 = vpack.c.b16 %v152, %v151
  %v166 = vpack.c.b16 %v154, %v153
  %v167 = vpack.c.b16 %v156, %v155
  %v168 = vpack.c.b16 %v158, %v157
  %v169 = vpack.c.b16 %v160, %v159
  %v170 = vpack.c.b16 %v162, %v161
  %179 = vmatprep.subr.bf16.mxu0 0
  %180 = vmatpush1.bf16.msra.mxu0 %v163
  %181 = vmatprep.subr.bf16.mxu0 0
  %182 = vmatpush1.bf16.msra.mxu0 %v164
  %183 = vmatprep.subr.bf16.mxu0 0
  %184 = vmatpush1.bf16.msra.mxu0 %v165
  %185 = vmatprep.subr.bf16.mxu0 0
  %186 = vmatpush1.bf16.msra.mxu0 %v166
  %187 = vmatprep.subr.bf16.mxu0 0
  %188 = vmatpush1.bf16.msra.mxu0 %v167
  %189 = vmatprep.subr.bf16.mxu0 0
  %190 = vmatpush1.bf16.msra.mxu0 %v168
  %191 = vmatprep.subr.bf16.mxu0 0
  %192 = vmatpush1.bf16.msra.mxu0 %v169
  %193 = vmatprep.subr.bf16.mxu0 0
  %194 = vmatpush1.bf16.msra.mxu0 %v170
  %195 = vmatprep.subr.bf16.mxu0 0
  %196 = vmatpush1.bf16.msra.mxu0 0
  %197 = vmatprep.subr.bf16.mxu0 0
  %198 = vmatpush1.bf16.msra.mxu0 0
  %199 = vmatprep.subr.bf16.mxu0 0
  %200 = vmatpush1.bf16.msra.mxu0 0
  %201 = vmatprep.subr.bf16.mxu0 0
  %202 = vmatpush1.bf16.msra.mxu0 0
  %203 = vmatprep.subr.bf16.mxu0 0
  %204 = vmatpush1.bf16.msra.mxu0 0
  %205 = vmatprep.subr.bf16.mxu0 0
  %206 = vmatpush1.bf16.msra.mxu0 0
  %207 = vmatprep.subr.bf16.mxu0 0
  %208 = vmatpush1.bf16.msra.mxu0 0
  %209 = vmatprep.subr.bf16.mxu0 0
  %210 = vmatpush1.bf16.msra.mxu0 0
  %211 = vmatprep.mubr.bf16.mxu0 0
  %212 = vmatmul.mubr.bf16.gmra.mrb[0].mxu0 %v115
  %v213 = vpop.f32.mrb[0].mxu0
  %v214 = vadd.f32 0.0, %v213
  %v215 = vpop.f32.mrb[0].mxu0
  %v216 = vpop.f32.mrb[0].mxu0
  %v217 = vadd.f32 0.0, %v216
  %v218 = vpop.f32.mrb[0].mxu0
  %219 = vmatprep.mubr.bf16.mxu0 0
  %220 = vmatmul.mubr.bf16.gmra.mrb[0].mxu0 %v116
  %v221 = vpop.f32.mrb[0].mxu0
  %v222 = vadd.f32 0.0, %v221
  %v223 = vpop.f32.mrb[0].mxu0
  %v224 = vpop.f32.mrb[0].mxu0
  %v225 = vadd.f32 0.0, %v224
  %v226 = vpop.f32.mrb[0].mxu0
  %227 = vmatprep.mubr.bf16.mxu0 0
  %228 = vmatmul.mubr.bf16.gmra.mrb[0].mxu0 %v117
  %v229 = vpop.f32.mrb[0].mxu0
  %v230 = vadd.f32 0.0, %v229
  %v231 = vpop.f32.mrb[0].mxu0
  %v232 = vpop.f32.mrb[0].mxu0
  %v233 = vadd.f32 0.0, %v232
  %v234 = vpop.f32.mrb[0].mxu0
  %235 = vmatprep.mubr.bf16.mxu0 0
  %236 = vmatmul.mubr.bf16.gmra.mrb[0].mxu0 %v118
  %v237 = vpop.f32.mrb[0].mxu0
  %v238 = vadd.f32 0.0, %v237
  %v239 = vpop.f32.mrb[0].mxu0
  %v240 = vpop.f32.mrb[0].mxu0
  %v241 = vadd.f32 0.0, %v240
  %v242 = vpop.f32.mrb[0].mxu0
  %243 = vmatprep.mubr.bf16.mxu0 0
  %244 = vmatmul.mubr.bf16.gmra.mrb[0].mxu0 %v119
  %v245 = vpop.f32.mrb[0].mxu0
  %v246 = vadd.f32 0.0, %v245
  %v247 = vpop.f32.mrb[0].mxu0
  %v248 = vpop.f32.mrb[0].mxu0
  %v249 = vadd.f32 0.0, %v248
  %v250 = vpop.f32.mrb[0].mxu0
  %251 = vmatprep.mubr.bf16.mxu0 0
  %252 = vmatmul.mubr.bf16.gmra.mrb[0].mxu0 %v120
  %v253 = vpop.f32.mrb[0].mxu0
  %v254 = vadd.f32 0.0, %v253
  %v255 = vpop.f32.mrb[0].mxu0
  %v256 = vpop.f32.mrb[0].mxu0
  %v257 = vadd.f32 0.0, %v256
  %v258 = vpop.f32.mrb[0].mxu0
  %259 = vmatprep.mubr.bf16.mxu0 0
  %260 = vmatmul.mubr.bf16.gmra.mrb[0].mxu0 %v121
  %v261 = vpop.f32.mrb[0].mxu0
  %v262 = vadd.f32 0.0, %v261
  %v263 = vpop.f32.mrb[0].mxu0
  %v264 = vpop.f32.mrb[0].mxu0
  %v265 = vadd.f32 0.0, %v264
  %v266 = vpop.f32.mrb[0].mxu0
  %267 = vmatprep.mubr.bf16.mxu0 0
  %268 = vmatmul.mubr.bf16.gmra.mrb[0].mxu0 %v122
  %v269 = vpop.f32.mrb[0].mxu0
  %v270 = vadd.f32 0.0, %v269
  %v271 = vpop.f32.mrb[0].mxu0
  %v272 = vpop.f32.mrb[0].mxu0
  %v273 = vadd.f32 0.0, %v272
  %v274 = vpop.f32.mrb[0].mxu0
  %275 = vdwg.mxu0
  %v276 = vadd.f32 %v35, %v214
  %v277 = vadd.f32 %v36, %v217
  %v278 = vadd.f32 %v37, %v222
  %v279 = vadd.f32 %v38, %v225
  %v280 = vadd.f32 %v39, %v230
  %v281 = vadd.f32 %v40, %v233
  %v282 = vadd.f32 %v41, %v238
  %v283 = vadd.f32 %v42, %v241
  %v284 = vadd.f32 %v43, %v246
  %v285 = vadd.f32 %v44, %v249
  %v286 = vadd.f32 %v45, %v254
  %v287 = vadd.f32 %v46, %v257
  %v288 = vadd.f32 %v47, %v262
  %v289 = vadd.f32 %v48, %v265
  %v290 = vadd.f32 %v49, %v270
  %v291 = vadd.f32 %v50, %v273
  %292 = vst [vmem:[#allocation2] sm:$0xff] %v276
  %293 = vst [vmem:[#allocation2 + $0x8] sm:$0xff] %v277
  %294 = vst [vmem:[#allocation2 + $0x10] sm:$0xff] %v278
  %295 = vst [vmem:[#allocation2 + $0x18] sm:$0xff] %v279
  %296 = vst [vmem:[#allocation2 + $0x20] sm:$0xff] %v280
  %297 = vst [vmem:[#allocation2 + $0x28] sm:$0xff] %v281
  %298 = vst [vmem:[#allocation2 + $0x30] sm:$0xff] %v282
  %299 = vst [vmem:[#allocation2 + $0x38] sm:$0xff] %v283
  %300 = vst [vmem:[#allocation2 + $0x40] sm:$0xff] %v284
  %301 = vst [vmem:[#allocation2 + $0x48] sm:$0xff] %v285
  %302 = vst [vmem:[#allocation2 + $0x50] sm:$0xff] %v286
  %303 = vst [vmem:[#allocation2 + $0x58] sm:$0xff] %v287
  %304 = vst [vmem:[#allocation2 + $0x60] sm:$0xff] %v288
  %305 = vst [vmem:[#allocation2 + $0x68] sm:$0xff] %v289
  %306 = vst [vmem:[#allocation2 + $0x70] sm:$0xff] %v290
  %307 = vst [vmem:[#allocation2 + $0x78] sm:$0xff] %v291
  // Predicated region
  $region14: #{_lambda_.9} parent=0 // pred_check
    %p308 = pneg %p15
  $region15: #{_lambda_.9} parent=0 // pred_check_branch
    %310 = sbr.rel (%p308) target = $region17
  $region16: #{_lambda_.9} parent=0 // pred_region
    %v311 = vld [vmem:[#allocation2] sm:$0xff]
    %v312 = vld [vmem:[#allocation2 + $0x8] sm:$0xff]
    %v313 = vld [vmem:[#allocation2 + $0x10] sm:$0xff]
    %v314 = vld [vmem:[#allocation2 + $0x18] sm:$0xff]
    %v315 = vld [vmem:[#allocation2 + $0x20] sm:$0xff]
    %v316 = vld [vmem:[#allocation2 + $0x28] sm:$0xff]
    %v317 = vld [vmem:[#allocation2 + $0x30] sm:$0xff]
    %v318 = vld [vmem:[#allocation2 + $0x38] sm:$0xff]
    %v319 = vld [vmem:[#allocation2 + $0x40] sm:$0xff]
    %v320 = vld [vmem:[#allocation2 + $0x48] sm:$0xff]
    %v321 = vld [vmem:[#allocation2 + $0x50] sm:$0xff]
    %v322 = vld [vmem:[#allocation2 + $0x58] sm:$0xff]
    %v323 = vld [vmem:[#allocation2 + $0x60] sm:$0xff]
    %v324 = vld [vmem:[#allocation2 + $0x68] sm:$0xff]
    %v325 = vld [vmem:[#allocation2 + $0x70] sm:$0xff]
    %v326 = vld [vmem:[#allocation2 + $0x78] sm:$0xff]
    %v327 = vpack.c.bf16 %v312, %v311
    %v328 = vpack.c.bf16 %v314, %v313
    %v329 = vpack.c.bf16 %v316, %v315
    %v330 = vpack.c.bf16 %v318, %v317
    %v331 = vpack.c.bf16 %v320, %v319
    %v332 = vpack.c.bf16 %v322, %v321
    %v333 = vpack.c.bf16 %v324, %v323
    %v334 = vpack.c.bf16 %v326, %v325
    %v343 = vunpack.c.l.b16 %v327
    %v344 = vunpack.c.h.b16 %v327
    %v345 = vunpack.c.l.b16 %v328
    %v346 = vunpack.c.h.b16 %v328
    %v347 = vunpack.c.l.b16 %v329
    %v348 = vunpack.c.h.b16 %v329
    %v349 = vunpack.c.l.b16 %v330
    %v350 = vunpack.c.h.b16 %v330
    %v351 = vunpack.c.l.b16 %v331
    %v352 = vunpack.c.h.b16 %v331
    %v353 = vunpack.c.l.b16 %v332
    %v354 = vunpack.c.h.b16 %v332
    %v355 = vunpack.c.l.b16 %v333
    %v356 = vunpack.c.h.b16 %v333
    %v357 = vunpack.c.l.b16 %v334
    %v358 = vunpack.c.h.b16 %v334
    %v359 = vpack.c.b16 %v343, %v343
    %v360 = vpack.c.b16 %v344, %v344
    %v361 = vpack.c.b16 %v345, %v345
    %v362 = vpack.c.b16 %v346, %v346
    %v363 = vpack.c.b16 %v347, %v347
    %v364 = vpack.c.b16 %v348, %v348
    %v365 = vpack.c.b16 %v349, %v349
    %v366 = vpack.c.b16 %v350, %v350
    %v367 = vpack.c.b16 %v351, %v351
    %v368 = vpack.c.b16 %v352, %v352
    %v369 = vpack.c.b16 %v353, %v353
    %v370 = vpack.c.b16 %v354, %v354
    %v371 = vpack.c.b16 %v355, %v355
    %v372 = vpack.c.b16 %v356, %v356
    %v373 = vpack.c.b16 %v357, %v357
    %v374 = vpack.c.b16 %v358, %v358
    %391 = vst [vmem:[%s2] sm:$0xf] %v359
    %392 = vst [vmem:[%s2 + $0x4] sm:$0xf] %v360
    %393 = vst [vmem:[%s2 + $0x8] sm:$0xf] %v361
    %394 = vst [vmem:[%s2 + $0xc] sm:$0xf] %v362
    %395 = vst [vmem:[%s2 + $0x10] sm:$0xf] %v363
    %396 = vst [vmem:[%s2 + $0x14] sm:$0xf] %v364
    %397 = vst [vmem:[%s2 + $0x18] sm:$0xf] %v365
    %398 = vst [vmem:[%s2 + $0x1c] sm:$0xf] %v366
    %399 = vst [vmem:[%s2 + $0x20] sm:$0xf] %v367
    %400 = vst [vmem:[%s2 + $0x24] sm:$0xf] %v368
    %401 = vst [vmem:[%s2 + $0x28] sm:$0xf] %v369
    %402 = vst [vmem:[%s2 + $0x2c] sm:$0xf] %v370
    %403 = vst [vmem:[%s2 + $0x30] sm:$0xf] %v371
    %404 = vst [vmem:[%s2 + $0x34] sm:$0xf] %v372
    %405 = vst [vmem:[%s2 + $0x38] sm:$0xf] %v373
    %406 = vst [vmem:[%s2 + $0x3c] sm:$0xf] %v374
    %v407 = vadd.f32 %v311, %v312
    %v408 = vadd.f32 %v407, %v313
    %v409 = vadd.f32 %v408, %v314
    %v410 = vadd.f32 %v409, %v315
    %v411 = vadd.f32 %v410, %v316
    %v412 = vadd.f32 %v411, %v317
    %v413 = vadd.f32 %v412, %v318
    %v414 = vadd.f32 %v413, %v319
    %v415 = vadd.f32 %v414, %v320
    %v416 = vadd.f32 %v415, %v321
    %v417 = vadd.f32 %v416, %v322
    %v418 = vadd.f32 %v417, %v323
    %v419 = vadd.f32 %v418, %v324
    %v420 = vadd.f32 %v419, %v325
    %v421 = vadd.f32 %v420, %v326
    %v422 = vrot.slane %v421, 4
    %v423 = vadd.f32 %v421, %v422
    %v424 = vrot.slane %v423, 2
    %v425 = vadd.f32 %v423, %v424
    %v426 = vrot.slane %v425, 1
    %v427 = vadd.f32 %v425, %v426
    %428 = vst [vmem:[%s3] sm:$0x1] %v427
    %v429 = vmul.f32 %v311, %v311
    %v430 = vmul.f32 %v312, %v312
    %v431 = vmul.f32 %v313, %v313
    %v432 = vmul.f32 %v314, %v314
    %v433 = vmul.f32 %v315, %v315
    %v434 = vmul.f32 %v316, %v316
    %v435 = vmul.f32 %v317, %v317
    %v436 = vmul.f32 %v318, %v318
    %v437 = vmul.f32 %v319, %v319
    %v438 = vmul.f32 %v320, %v320
    %v439 = vmul.f32 %v321, %v321
    %v440 = vmul.f32 %v322, %v322
    %v441 = vmul.f32 %v323, %v323
    %v442 = vmul.f32 %v324, %v324
    %v443 = vmul.f32 %v325, %v325
    %v444 = vmul.f32 %v326, %v326
    %v445 = vadd.f32 %v429, %v430
    %v446 = vadd.f32 %v445, %v431
    %v447 = vadd.f32 %v446, %v432
    %v448 = vadd.f32 %v447, %v433
    %v449 = vadd.f32 %v448, %v434
    %v450 = vadd.f32 %v449, %v435
    %v451 = vadd.f32 %v450, %v436
    %v452 = vadd.f32 %v451, %v437
    %v453 = vadd.f32 %v452, %v438
    %v454 = vadd.f32 %v453, %v439
    %v455 = vadd.f32 %v454, %v440
    %v456 = vadd.f32 %v455, %v441
    %v457 = vadd.f32 %v456, %v442
    %v458 = vadd.f32 %v457, %v443
    %v459 = vadd.f32 %v458, %v444
    %v460 = vrot.slane %v459, 4
    %v461 = vadd.f32 %v459, %v460
    %v462 = vrot.slane %v461, 2
    %v463 = vadd.f32 %v461, %v462
    %v464 = vrot.slane %v463, 1
    %v465 = vadd.f32 %v463, %v464
    %466 = vst [vmem:[%s4] sm:$0x1] %v465
  $region17: #{_lambda_.9} parent=0 // pred_fallthru
    _
  // Predicated region
  $region18: #{_lambda_.9} parent=0 // pred_check
    _
  $region19: #{_lambda_.9} parent=0 // pred_check_branch
    %468 = sbr.rel (0) target = $region21
  $region20: #{_lambda_.9} parent=0 // pred_region
    _
  $region21: #{_lambda_.9} parent=0 // pred_fallthru
    _
  // Predicated region
  $region22: #{_lambda_.9} parent=0 // pred_check
    _
  $region23: #{_lambda_.9} parent=0 // pred_check_branch
    %470 = sbr.rel (0) target = $region25
  $region24: #{_lambda_.9} parent=0 // pred_region
    _
  $region25: #{_lambda_.9} parent=0 // pred_fallthru
    _
  // Predicated region
  $region26: #{_lambda_.9} parent=0 // pred_check
    _
  $region27: #{_lambda_.9} parent=0 // pred_check_branch
    %472 = sbr.rel (0) target = $region29
  $region28: #{_lambda_.9} parent=0 // pred_region
    _
  $region29: #{_lambda_.9} parent=0 // pred_fallthru
    _
  // Predicated region
  $region30: #{_lambda_.9} parent=0 // pred_check
    _
  $region31: #{_lambda_.9} parent=0 // pred_check_branch
    %474 = sbr.rel (0) target = $region33
  $region32: #{_lambda_.9} parent=0 // pred_region
    _
  $region33: #{_lambda_.9} parent=0 // pred_fallthru
    _
  // Predicated region
  $region34: #{_lambda_.9} parent=0 // pred_check
    _
  $region35: #{_lambda_.9} parent=0 // pred_check_branch
    %476 = sbr.rel (0) target = $region37
  $region36: #{_lambda_.9} parent=0 // pred_region
    _
  $region37: #{_lambda_.9} parent=0 // pred_fallthru
    _
  // Predicated region
  $region38: #{_lambda_.9} parent=0 // pred_check
    _
  $region39: #{_lambda_.9} parent=0 // pred_check_branch
    %478 = sbr.rel (0) target = $region41
  $region40: #{_lambda_.9} parent=0 // pred_region
    _
  $region41: #{_lambda_.9} parent=0 // pred_fallthru
    _

// kernel: _lambda_.10
$region0: #{_lambda_.10}
  #allocation0 [shape = 'u32[]', space=smem, size = 0x4, offset = 0x4, fixed_abs, tag = 'smem constant byte address 0x4 - core index']
  #allocation1 [shape = 'u32[144,128]{1,0:T(1,128)}', space=vmem, size = 0x12000, scoped, tag = 'internal scratch']
  %s0 = inlined_call_operand.vmem [shape: bf16[128,128], index: 0, kind: input, shape index: {}]
  %s1 = inlined_call_operand.vmem [shape: f32[1,128], index: 1, kind: input, shape index: {}]
  %s2 = inlined_call_operand.vmem [shape: f32[1,128], index: 2, kind: input, shape index: {}]
  %s3 = inlined_call_operand.vmem [shape: bf16[128,128], index: 3, kind: output, shape index: {}]
  %s4 = sld [smem:[#allocation0]]
  $region22: #{_lambda_.10} parent=0
    _
  %s6 = ssub.s32 1, %s4
  %s7 = scalar_select 0, %s6, %s4
  // Predicated region
  $region2: #{_lambda_.10} parent=0 // pred_check
    _
  $region3: #{_lambda_.10} parent=0 // pred_check_branch
    %9 = sbr.rel (0) target = $region5
  $region4: #{_lambda_.10} parent=0 // pred_region
    _
  $region5: #{_lambda_.10} parent=0 // pred_fallthru
    _
  // Predicated region
  $region6: #{_lambda_.10} parent=0 // pred_check
    _
  $region7: #{_lambda_.10} parent=0 // pred_check_branch
    %11 = sbr.rel (0) target = $region9
  $region8: #{_lambda_.10} parent=0 // pred_region
    _
  $region9: #{_lambda_.10} parent=0 // pred_fallthru
    _
  // Predicated region
  $region10: #{_lambda_.10} parent=0 // pred_check
    _
  $region11: #{_lambda_.10} parent=0 // pred_check_branch
    %13 = sbr.rel (0) target = $region13
  $region12: #{_lambda_.10} parent=0 // pred_region
    _
  $region13: #{_lambda_.10} parent=0 // pred_fallthru
    _
  %v14 = vld [vmem:[%s0] sm:$0xf]
  %v15 = vld [vmem:[%s0 + $0x4] sm:$0xf]
  %v16 = vld [vmem:[%s0 + $0x8] sm:$0xf]
  %v17 = vld [vmem:[%s0 + $0xc] sm:$0xf]
  %v18 = vld [vmem:[%s0 + $0x10] sm:$0xf]
  %v19 = vld [vmem:[%s0 + $0x14] sm:$0xf]
  %v20 = vld [vmem:[%s0 + $0x18] sm:$0xf]
  %v21 = vld [vmem:[%s0 + $0x1c] sm:$0xf]
  %v22 = vld [vmem:[%s0 + $0x20] sm:$0xf]
  %v23 = vld [vmem:[%s0 + $0x24] sm:$0xf]
  %v24 = vld [vmem:[%s0 + $0x28] sm:$0xf]
  %v25 = vld [vmem:[%s0 + $0x2c] sm:$0xf]
  %v26 = vld [vmem:[%s0 + $0x30] sm:$0xf]
  %v27 = vld [vmem:[%s0 + $0x34] sm:$0xf]
  %v28 = vld [vmem:[%s0 + $0x38] sm:$0xf]
  %v29 = vld [vmem:[%s0 + $0x3c] sm:$0xf]
  %v30 = vunpack.c.l.bf16 %v14
  %v31 = vunpack.c.l.bf16 %v15
  %v32 = vunpack.c.l.bf16 %v16
  %v33 = vunpack.c.l.bf16 %v17
  %v34 = vunpack.c.l.bf16 %v18
  %v35 = vunpack.c.l.bf16 %v19
  %v36 = vunpack.c.l.bf16 %v20
  %v37 = vunpack.c.l.bf16 %v21
  %v38 = vunpack.c.l.bf16 %v22
  %v39 = vunpack.c.l.bf16 %v23
  %v40 = vunpack.c.l.bf16 %v24
  %v41 = vunpack.c.l.bf16 %v25
  %v42 = vunpack.c.l.bf16 %v26
  %v43 = vunpack.c.l.bf16 %v27
  %v44 = vunpack.c.l.bf16 %v28
  %v45 = vunpack.c.l.bf16 %v29
  %v46 = vld [vmem:[%s1] sm:$0x1]
  %v48 = vlaneseq
  %v49 = vshrl.u32 %v48, 7
  %v50 = vsub.s32 0, %v49
  %v51 = vrot.slane %v46, %v50
  %v53 = vmul.f32 %v30, %v51
  %v54 = vmul.f32 %v31, %v51
  %v55 = vmul.f32 %v32, %v51
  %v56 = vmul.f32 %v33, %v51
  %v57 = vmul.f32 %v34, %v51
  %v58 = vmul.f32 %v35, %v51
  %v59 = vmul.f32 %v36, %v51
  %v60 = vmul.f32 %v37, %v51
  %v61 = vmul.f32 %v38, %v51
  %v62 = vmul.f32 %v39, %v51
  %v63 = vmul.f32 %v40, %v51
  %v64 = vmul.f32 %v41, %v51
  %v65 = vmul.f32 %v42, %v51
  %v66 = vmul.f32 %v43, %v51
  %v67 = vmul.f32 %v44, %v51
  %v68 = vmul.f32 %v45, %v51
  %v69 = vld [vmem:[%s2] sm:$0x1]
  %v71 = vlaneseq
  %v72 = vshrl.u32 %v71, 7
  %v73 = vsub.s32 0, %v72
  %v74 = vrot.slane %v69, %v73
  %v76 = vadd.f32 %v53, %v74
  %v77 = vadd.f32 %v54, %v74
  %v78 = vadd.f32 %v55, %v74
  %v79 = vadd.f32 %v56, %v74
  %v80 = vadd.f32 %v57, %v74
  %v81 = vadd.f32 %v58, %v74
  %v82 = vadd.f32 %v59, %v74
  %v83 = vadd.f32 %v60, %v74
  %v84 = vadd.f32 %v61, %v74
  %v85 = vadd.f32 %v62, %v74
  %v86 = vadd.f32 %v63, %v74
  %v87 = vadd.f32 %v64, %v74
  %v88 = vadd.f32 %v65, %v74
  %v89 = vadd.f32 %v66, %v74
  %v90 = vadd.f32 %v67, %v74
  %v91 = vadd.f32 %v68, %v74
  %v92 = vxor.u32 %v76, 2147483648
  %v93 = vxor.u32 %v77, 2147483648
  %v94 = vxor.u32 %v78, 2147483648
  %v95 = vxor.u32 %v79, 2147483648
  %v96 = vxor.u32 %v80, 2147483648
  %v97 = vxor.u32 %v81, 2147483648
  %v98 = vxor.u32 %v82, 2147483648
  %v99 = vxor.u32 %v83, 2147483648
  %v100 = vxor.u32 %v84, 2147483648
  %v101 = vxor.u32 %v85, 2147483648
  %v102 = vxor.u32 %v86, 2147483648
  %v103 = vxor.u32 %v87, 2147483648
  %v104 = vxor.u32 %v88, 2147483648
  %v105 = vxor.u32 %v89, 2147483648
  %v106 = vxor.u32 %v90, 2147483648
  %v107 = vxor.u32 %v91, 2147483648
  %v108 = vmul.f32 %v92, 1.442695
  %v109 = vpow.pop %v108
  %v110 = vmul.f32 %v93, 1.442695
  %v111 = vpow.pop %v110
  %v112 = vmul.f32 %v94, 1.442695
  %v113 = vpow.pop %v112
  %v114 = vmul.f32 %v95, 1.442695
  %v115 = vpow.pop %v114
  %v116 = vmul.f32 %v96, 1.442695
  %v117 = vpow.pop %v116
  %v118 = vmul.f32 %v97, 1.442695
  %v119 = vpow.pop %v118
  %v120 = vmul.f32 %v98, 1.442695
  %v121 = vpow.pop %v120
  %v122 = vmul.f32 %v99, 1.442695
  %v123 = vpow.pop %v122
  %v124 = vmul.f32 %v100, 1.442695
  %v125 = vpow.pop %v124
  %v126 = vmul.f32 %v101, 1.442695
  %v127 = vpow.pop %v126
  %v128 = vmul.f32 %v102, 1.442695
  %v129 = vpow.pop %v128
  %v130 = vmul.f32 %v103, 1.442695
  %v131 = vpow.pop %v130
  %v132 = vmul.f32 %v104, 1.442695
  %v133 = vpow.pop %v132
  %v134 = vmul.f32 %v105, 1.442695
  %v135 = vpow.pop %v134
  %v136 = vmul.f32 %v106, 1.442695
  %v137 = vpow.pop %v136
  %v138 = vmul.f32 %v107, 1.442695
  %v139 = vpow.pop %v138
  %v140 = vadd.f32 %v109, 1.0
  %v141 = vadd.f32 %v111, 1.0
  %v142 = vadd.f32 %v113, 1.0
  %v143 = vadd.f32 %v115, 1.0
  %v144 = vadd.f32 %v117, 1.0
  %v145 = vadd.f32 %v119, 1.0
  %v146 = vadd.f32 %v121, 1.0
  %v147 = vadd.f32 %v123, 1.0
  %v148 = vadd.f32 %v125, 1.0
  %v149 = vadd.f32 %v127, 1.0
  %v150 = vadd.f32 %v129, 1.0
  %v151 = vadd.f32 %v131, 1.0
  %v152 = vadd.f32 %v133, 1.0
  %v153 = vadd.f32 %v135, 1.0
  %v154 = vadd.f32 %v137, 1.0
  %v155 = vadd.f32 %v139, 1.0
  %v156 = vrcp.pop %v140
  %v157 = vmul.f32 1.0, %v156
  %v158 = vrcp.pop %v141
  %v159 = vmul.f32 1.0, %v158
  %v160 = vrcp.pop %v142
  %v161 = vmul.f32 1.0, %v160
  %v162 = vrcp.pop %v143
  %v163 = vmul.f32 1.0, %v162
  %v164 = vrcp.pop %v144
  %v165 = vmul.f32 1.0, %v164
  %v166 = vrcp.pop %v145
  %v167 = vmul.f32 1.0, %v166
  %v168 = vrcp.pop %v146
  %v169 = vmul.f32 1.0, %v168
  %v170 = vrcp.pop %v147
  %v171 = vmul.f32 1.0, %v170
  %v172 = vrcp.pop %v148
  %v173 = vmul.f32 1.0, %v172
  %v174 = vrcp.pop %v149
  %v175 = vmul.f32 1.0, %v174
  %v176 = vrcp.pop %v150
  %v177 = vmul.f32 1.0, %v176
  %v178 = vrcp.pop %v151
  %v179 = vmul.f32 1.0, %v178
  %v180 = vrcp.pop %v152
  %v181 = vmul.f32 1.0, %v180
  %v182 = vrcp.pop %v153
  %v183 = vmul.f32 1.0, %v182
  %v184 = vrcp.pop %v154
  %v185 = vmul.f32 1.0, %v184
  %v186 = vrcp.pop %v155
  %v187 = vmul.f32 1.0, %v186
  %v188 = vmul.f32 %v76, %v157
  %v189 = vmul.f32 %v77, %v159
  %v190 = vmul.f32 %v78, %v161
  %v191 = vmul.f32 %v79, %v163
  %v192 = vmul.f32 %v80, %v165
  %v193 = vmul.f32 %v81, %v167
  %v194 = vmul.f32 %v82, %v169
  %v195 = vmul.f32 %v83, %v171
  %v196 = vmul.f32 %v84, %v173
  %v197 = vmul.f32 %v85, %v175
  %v198 = vmul.f32 %v86, %v177
  %v199 = vmul.f32 %v87, %v179
  %v200 = vmul.f32 %v88, %v181
  %v201 = vmul.f32 %v89, %v183
  %v202 = vmul.f32 %v90, %v185
  %v203 = vmul.f32 %v91, %v187
  %v204 = vpack.c.bf16 %v189, %v188
  %v205 = vpack.c.bf16 %v191, %v190
  %v206 = vpack.c.bf16 %v193, %v192
  %v207 = vpack.c.bf16 %v195, %v194
  %v208 = vpack.c.bf16 %v197, %v196
  %v209 = vpack.c.bf16 %v199, %v198
  %v210 = vpack.c.bf16 %v201, %v200
  %v211 = vpack.c.bf16 %v203, %v202
  %v220 = vunpack.c.l.b16 %v204
  %v221 = vunpack.c.h.b16 %v204
  %v222 = vunpack.c.l.b16 %v205
  %v223 = vunpack.c.h.b16 %v205
  %v224 = vunpack.c.l.b16 %v206
  %v225 = vunpack.c.h.b16 %v206
  %v226 = vunpack.c.l.b16 %v207
  %v227 = vunpack.c.h.b16 %v207
  %v228 = vunpack.c.l.b16 %v208
  %v229 = vunpack.c.h.b16 %v208
  %v230 = vunpack.c.l.b16 %v209
  %v231 = vunpack.c.h.b16 %v209
  %v232 = vunpack.c.l.b16 %v210
  %v233 = vunpack.c.h.b16 %v210
  %v234 = vunpack.c.l.b16 %v211
  %v235 = vunpack.c.h.b16 %v211
  %v236 = vpack.c.b16 %v220, %v220
  %v237 = vpack.c.b16 %v221, %v221
  %v238 = vpack.c.b16 %v222, %v222
  %v239 = vpack.c.b16 %v223, %v223
  %v240 = vpack.c.b16 %v224, %v224
  %v241 = vpack.c.b16 %v225, %v225
  %v242 = vpack.c.b16 %v226, %v226
  %v243 = vpack.c.b16 %v227, %v227
  %v244 = vpack.c.b16 %v228, %v228
  %v245 = vpack.c.b16 %v229, %v229
  %v246 = vpack.c.b16 %v230, %v230
  %v247 = vpack.c.b16 %v231, %v231
  %v248 = vpack.c.b16 %v232, %v232
  %v249 = vpack.c.b16 %v233, %v233
  %v250 = vpack.c.b16 %v234, %v234
  %v251 = vpack.c.b16 %v235, %v235
  %268 = vst [vmem:[%s3] sm:$0xf] %v236
  %269 = vst [vmem:[%s3 + $0x4] sm:$0xf] %v237
  %270 = vst [vmem:[%s3 + $0x8] sm:$0xf] %v238
  %271 = vst [vmem:[%s3 + $0xc] sm:$0xf] %v239
  %272 = vst [vmem:[%s3 + $0x10] sm:$0xf] %v240
  %273 = vst [vmem:[%s3 + $0x14] sm:$0xf] %v241
  %274 = vst [vmem:[%s3 + $0x18] sm:$0xf] %v242
  %275 = vst [vmem:[%s3 + $0x1c] sm:$0xf] %v243
  %276 = vst [vmem:[%s3 + $0x20] sm:$0xf] %v244
  %277 = vst [vmem:[%s3 + $0x24] sm:$0xf] %v245
  %278 = vst [vmem:[%s3 + $0x28] sm:$0xf] %v246
  %279 = vst [vmem:[%s3 + $0x2c] sm:$0xf] %v247
  %280 = vst [vmem:[%s3 + $0x30] sm:$0xf] %v248
  %281 = vst [vmem:[%s3 + $0x34] sm:$0xf] %v249
  %282 = vst [vmem:[%s3 + $0x38] sm:$0xf] %v250
  %283 = vst [vmem:[%s3 + $0x3c] sm:$0xf] %v251
  // Predicated region
  $region14: #{_lambda_.10} parent=0 // pred_check
    _
  $region15: #{_lambda_.10} parent=0 // pred_check_branch
    %285 = sbr.rel (0) target = $region17
  $region16: #{_lambda_.10} parent=0 // pred_region
    _
  $region17: #{_lambda_.10} parent=0 // pred_fallthru
    _
  // Predicated region
  $region18: #{_lambda_.10} parent=0 // pred_check
    _
  $region19: #{_lambda_.10} parent=0 // pred_check_branch
    %287 = sbr.rel (0) target = $region21
  $region20: #{_lambda_.10} parent=0 // pred_region
    _
  $region21: #{_lambda_.10} parent=0 // pred_fallthru
    _

// kernel: _lambda_.12
$region0: #{_lambda_.12}
  #allocation0 [shape = 'u32[]', space=smem, size = 0x4, offset = 0x4, fixed_abs, tag = 'smem constant byte address 0x4 - core index']
  #allocation1 [shape = 'u32[144,128]{1,0:T(1,128)}', space=vmem, size = 0x12000, scoped, tag = 'internal scratch']
  %s0 = inlined_call_operand.vmem [shape: bf16[32,128], index: 0, kind: input, shape index: {}]
  %s1 = inlined_call_operand.vmem [shape: f32[1,128], index: 1, kind: input, shape index: {}]
  %s2 = inlined_call_operand.vmem [shape: f32[1,128], index: 2, kind: input, shape index: {}]
  %s3 = inlined_call_operand.vmem [shape: bf16[32,128], index: 3, kind: output, shape index: {}]
  %s4 = sld [smem:[#allocation0]]
  $region22: #{_lambda_.12} parent=0
    _
  %s6 = ssub.s32 1, %s4
  %s7 = scalar_select 0, %s6, %s4
  // Predicated region
  $region2: #{_lambda_.12} parent=0 // pred_check
    _
  $region3: #{_lambda_.12} parent=0 // pred_check_branch
    %9 = sbr.rel (0) target = $region5
  $region4: #{_lambda_.12} parent=0 // pred_region
    _
  $region5: #{_lambda_.12} parent=0 // pred_fallthru
    _
  // Predicated region
  $region6: #{_lambda_.12} parent=0 // pred_check
    _
  $region7: #{_lambda_.12} parent=0 // pred_check_branch
    %11 = sbr.rel (0) target = $region9
  $region8: #{_lambda_.12} parent=0 // pred_region
    _
  $region9: #{_lambda_.12} parent=0 // pred_fallthru
    _
  // Predicated region
  $region10: #{_lambda_.12} parent=0 // pred_check
    _
  $region11: #{_lambda_.12} parent=0 // pred_check_branch
    %13 = sbr.rel (0) target = $region13
  $region12: #{_lambda_.12} parent=0 // pred_region
    _
  $region13: #{_lambda_.12} parent=0 // pred_fallthru
    _
  %v14 = vld [vmem:[%s0] sm:$0xf]
  %v15 = vld [vmem:[%s0 + $0x4] sm:$0xf]
  %v16 = vld [vmem:[%s0 + $0x8] sm:$0xf]
  %v17 = vld [vmem:[%s0 + $0xc] sm:$0xf]
  %v18 = vunpack.c.l.bf16 %v14
  %v19 = vunpack.c.l.bf16 %v15
  %v20 = vunpack.c.l.bf16 %v16
  %v21 = vunpack.c.l.bf16 %v17
  %v22 = vld [vmem:[%s1] sm:$0x1]
  %v24 = vlaneseq
  %v25 = vshrl.u32 %v24, 7
  %v26 = vsub.s32 0, %v25
  %v27 = vrot.slane %v22, %v26
  %v29 = vmul.f32 %v18, %v27
  %v30 = vmul.f32 %v19, %v27
  %v31 = vmul.f32 %v20, %v27
  %v32 = vmul.f32 %v21, %v27
  %v33 = vld [vmem:[%s2] sm:$0x1]
  %v35 = vlaneseq
  %v36 = vshrl.u32 %v35, 7
  %v37 = vsub.s32 0, %v36
  %v38 = vrot.slane %v33, %v37
  %v40 = vadd.f32 %v29, %v38
  %v41 = vadd.f32 %v30, %v38
  %v42 = vadd.f32 %v31, %v38
  %v43 = vadd.f32 %v32, %v38
  %v44 = vxor.u32 %v40, 2147483648
  %v45 = vxor.u32 %v41, 2147483648
  %v46 = vxor.u32 %v42, 2147483648
  %v47 = vxor.u32 %v43, 2147483648
  %v48 = vmul.f32 %v44, 1.442695
  %v49 = vpow.pop %v48
  %v50 = vmul.f32 %v45, 1.442695
  %v51 = vpow.pop %v50
  %v52 = vmul.f32 %v46, 1.442695
  %v53 = vpow.pop %v52
  %v54 = vmul.f32 %v47, 1.442695
  %v55 = vpow.pop %v54
  %v56 = vadd.f32 %v49, 1.0
  %v57 = vadd.f32 %v51, 1.0
  %v58 = vadd.f32 %v53, 1.0
  %v59 = vadd.f32 %v55, 1.0
  %v60 = vrcp.pop %v56
  %v61 = vmul.f32 1.0, %v60
  %v62 = vrcp.pop %v57
  %v63 = vmul.f32 1.0, %v62
  %v64 = vrcp.pop %v58
  %v65 = vmul.f32 1.0, %v64
  %v66 = vrcp.pop %v59
  %v67 = vmul.f32 1.0, %v66
  %v68 = vmul.f32 %v40, %v61
  %v69 = vmul.f32 %v41, %v63
  %v70 = vmul.f32 %v42, %v65
  %v71 = vmul.f32 %v43, %v67
  %v72 = vpack.c.bf16 %v69, %v68
  %v73 = vpack.c.bf16 %v71, %v70
  %v76 = vunpack.c.l.b16 %v72
  %v77 = vunpack.c.h.b16 %v72
  %v78 = vunpack.c.l.b16 %v73
  %v79 = vunpack.c.h.b16 %v73
  %v80 = vpack.c.b16 %v76, %v76
  %v81 = vpack.c.b16 %v77, %v77
  %v82 = vpack.c.b16 %v78, %v78
  %v83 = vpack.c.b16 %v79, %v79
  %88 = vst [vmem:[%s3] sm:$0xf] %v80
  %89 = vst [vmem:[%s3 + $0x4] sm:$0xf] %v81
  %90 = vst [vmem:[%s3 + $0x8] sm:$0xf] %v82
  %91 = vst [vmem:[%s3 + $0xc] sm:$0xf] %v83
  // Predicated region
  $region14: #{_lambda_.12} parent=0 // pred_check
    _
  $region15: #{_lambda_.12} parent=0 // pred_check_branch
    %93 = sbr.rel (0) target = $region17
  $region16: #{_lambda_.12} parent=0 // pred_region
    _
  $region17: #{_lambda_.12} parent=0 // pred_fallthru
    _
  // Predicated region
  $region18: #{_lambda_.12} parent=0 // pred_check
    _
  $region19: #{_lambda_.12} parent=0 // pred_check_branch
    %95 = sbr.rel (0) target = $region21
  $region20: #{_lambda_.12} parent=0 // pred_region
    _
  $region21: #{_lambda_.12} parent=0 // pred_fallthru
    _

// kernel: _lambda_.11
$region0: #{_lambda_.11}
  #allocation0 [shape = 'u32[]', space=smem, size = 0x4, offset = 0x4, fixed_abs, tag = 'smem constant byte address 0x4 - core index']
  #allocation1 [shape = 'u32[144,128]{1,0:T(1,128)}', space=vmem, size = 0x12000, scoped, tag = 'internal scratch']
  #allocation2 [shape = 'f32[32,128]{1,0:T(8,128)}', space=vmem, size = 0x4000, scoped, tag = 'scratch operand']
  %s0 = inlined_call_operand.vmem [shape: bf16[32,256], index: 0, kind: input, shape index: {}]
  %s1 = inlined_call_operand.vmem [shape: bf16[256,128], index: 1, kind: input, shape index: {}]
  %s2 = inlined_call_operand.vmem [shape: bf16[32,128], index: 2, kind: output, shape index: {0}]
  %s3 = inlined_call_operand.vmem [shape: f32[1,1,128], index: 3, kind: output, shape index: {1}]
  %s4 = inlined_call_operand.vmem [shape: f32[1,1,128], index: 4, kind: output, shape index: {2}]
  %5 = xla_tuple %s2, %s3, %s4
  %s6 = sld [smem:[#allocation0]]
  $region42: #{_lambda_.11} parent=0
    _
  %s8 = ssub.s32 1, %s6
  %s9 = scalar_select 0, %s8, %s6
  // Predicated region
  $region2: #{_lambda_.11} parent=0 // pred_check
    _
  $region3: #{_lambda_.11} parent=0 // pred_check_branch
    %11 = sbr.rel (0) target = $region5
  $region4: #{_lambda_.11} parent=0 // pred_region
    _
  $region5: #{_lambda_.11} parent=0 // pred_fallthru
    _
  // Predicated region
  $region6: #{_lambda_.11} parent=0 // pred_check
    _
  $region7: #{_lambda_.11} parent=0 // pred_check_branch
    %13 = sbr.rel (0) target = $region9
  $region8: #{_lambda_.11} parent=0 // pred_region
    _
  $region9: #{_lambda_.11} parent=0 // pred_fallthru
    _
  %p15 = scmp.eq.s32.totalorder 0, 0
  // Predicated region
  $region10: #{_lambda_.11} parent=0 // pred_check
    %p16 = pneg %p15
  $region11: #{_lambda_.11} parent=0 // pred_check_branch
    %18 = sbr.rel (%p16) target = $region13
  $region12: #{_lambda_.11} parent=0 // pred_region
    %19 = vst [vmem:[#allocation2] sm:$0xff] 0.0
    %20 = vst [vmem:[#allocation2 + $0x8] sm:$0xff] 0.0
    %21 = vst [vmem:[#allocation2 + $0x10] sm:$0xff] 0.0
    %22 = vst [vmem:[#allocation2 + $0x18] sm:$0xff] 0.0
  $region13: #{_lambda_.11} parent=0 // pred_fallthru
    _
  %v23 = vld [vmem:[#allocation2] sm:$0xff]
  %v24 = vld [vmem:[#allocation2 + $0x8] sm:$0xff]
  %v25 = vld [vmem:[#allocation2 + $0x10] sm:$0xff]
  %v26 = vld [vmem:[#allocation2 + $0x18] sm:$0xff]
  %v27 = vld [vmem:[%s0] sm:$0xff]
  %v28 = vld [vmem:[%s0 + $0x8] sm:$0xff]
  %v29 = vld [vmem:[%s0 + $0x10] sm:$0xff]
  %v30 = vld [vmem:[%s0 + $0x18] sm:$0xff]
  %v31 = vld [vmem:[%s1] sm:$0xf]
  %v32 = vld [vmem:[%s1 + $0x4] sm:$0xf]
  %v33 = vld [vmem:[%s1 + $0x8] sm:$0xf]
  %v34 = vld [vmem:[%s1 + $0xc] sm:$0xf]
  %v35 = vld [vmem:[%s1 + $0x10] sm:$0xf]
  %v36 = vld [vmem:[%s1 + $0x14] sm:$0xf]
  %v37 = vld [vmem:[%s1 + $0x18] sm:$0xf]
  %v38 = vld [vmem:[%s1 + $0x1c] sm:$0xf]
  %v39 = vld [vmem:[%s1 + $0x20] sm:$0xf]
  %v40 = vld [vmem:[%s1 + $0x24] sm:$0xf]
  %v41 = vld [vmem:[%s1 + $0x28] sm:$0xf]
  %v42 = vld [vmem:[%s1 + $0x2c] sm:$0xf]
  %v43 = vld [vmem:[%s1 + $0x30] sm:$0xf]
  %v44 = vld [vmem:[%s1 + $0x34] sm:$0xf]
  %v45 = vld [vmem:[%s1 + $0x38] sm:$0xf]
  %v46 = vld [vmem:[%s1 + $0x3c] sm:$0xf]
  %v47 = vld [vmem:[%s1 + $0x40] sm:$0xf]
  %v48 = vld [vmem:[%s1 + $0x44] sm:$0xf]
  %v49 = vld [vmem:[%s1 + $0x48] sm:$0xf]
  %v50 = vld [vmem:[%s1 + $0x4c] sm:$0xf]
  %v51 = vld [vmem:[%s1 + $0x50] sm:$0xf]
  %v52 = vld [vmem:[%s1 + $0x54] sm:$0xf]
  %v53 = vld [vmem:[%s1 + $0x58] sm:$0xf]
  %v54 = vld [vmem:[%s1 + $0x5c] sm:$0xf]
  %v55 = vld [vmem:[%s1 + $0x60] sm:$0xf]
  %v56 = vld [vmem:[%s1 + $0x64] sm:$0xf]
  %v57 = vld [vmem:[%s1 + $0x68] sm:$0xf]
  %v58 = vld [vmem:[%s1 + $0x6c] sm:$0xf]
  %v59 = vld [vmem:[%s1 + $0x70] sm:$0xf]
  %v60 = vld [vmem:[%s1 + $0x74] sm:$0xf]
  %v61 = vld [vmem:[%s1 + $0x78] sm:$0xf]
  %v62 = vld [vmem:[%s1 + $0x7c] sm:$0xf]
  %v67 = vunpack.c.l.b16 %v27
  %v68 = vunpack.c.h.b16 %v27
  %v69 = vunpack.c.l.b16 %v28
  %v70 = vunpack.c.h.b16 %v28
  %v71 = vunpack.c.l.b16 %v29
  %v72 = vunpack.c.h.b16 %v29
  %v73 = vunpack.c.l.b16 %v30
  %v74 = vunpack.c.h.b16 %v30
  %v75 = vpack.c.b16 %v69, %v67
  %v76 = vpack.c.b16 %v70, %v68
  %v77 = vpack.c.b16 %v73, %v71
  %v78 = vpack.c.b16 %v74, %v72
  %v115 = vunpack.c.l.b16 %v31
  %v116 = vunpack.c.l.b16 %v32
  %v117 = vunpack.c.l.b16 %v33
  %v118 = vunpack.c.l.b16 %v34
  %v119 = vunpack.c.l.b16 %v35
  %v120 = vunpack.c.l.b16 %v36
  %v121 = vunpack.c.l.b16 %v37
  %v122 = vunpack.c.l.b16 %v38
  %v123 = vunpack.c.l.b16 %v39
  %v124 = vunpack.c.l.b16 %v40
  %v125 = vunpack.c.l.b16 %v41
  %v126 = vunpack.c.l.b16 %v42
  %v127 = vunpack.c.l.b16 %v43
  %v128 = vunpack.c.l.b16 %v44
  %v129 = vunpack.c.l.b16 %v45
  %v130 = vunpack.c.l.b16 %v46
  %v131 = vunpack.c.l.b16 %v47
  %v132 = vunpack.c.l.b16 %v48
  %v133 = vunpack.c.l.b16 %v49
  %v134 = vunpack.c.l.b16 %v50
  %v135 = vunpack.c.l.b16 %v51
  %v136 = vunpack.c.l.b16 %v52
  %v137 = vunpack.c.l.b16 %v53
  %v138 = vunpack.c.l.b16 %v54
  %v139 = vunpack.c.l.b16 %v55
  %v140 = vunpack.c.l.b16 %v56
  %v141 = vunpack.c.l.b16 %v57
  %v142 = vunpack.c.l.b16 %v58
  %v143 = vunpack.c.l.b16 %v59
  %v144 = vunpack.c.l.b16 %v60
  %v145 = vunpack.c.l.b16 %v61
  %v146 = vunpack.c.l.b16 %v62
  %v147 = vpack.c.b16 %v116, %v115
  %v148 = vpack.c.b16 %v118, %v117
  %v149 = vpack.c.b16 %v120, %v119
  %v150 = vpack.c.b16 %v122, %v121
  %v151 = vpack.c.b16 %v124, %v123
  %v152 = vpack.c.b16 %v126, %v125
  %v153 = vpack.c.b16 %v128, %v127
  %v154 = vpack.c.b16 %v130, %v129
  %v155 = vpack.c.b16 %v132, %v131
  %v156 = vpack.c.b16 %v134, %v133
  %v157 = vpack.c.b16 %v136, %v135
  %v158 = vpack.c.b16 %v138, %v137
  %v159 = vpack.c.b16 %v140, %v139
  %v160 = vpack.c.b16 %v142, %v141
  %v161 = vpack.c.b16 %v144, %v143
  %v162 = vpack.c.b16 %v146, %v145
  %179 = vmatprep.subr.bf16.mxu0 0
  %180 = vmatpush1.bf16.msra.mxu0 %v147
  %181 = vmatprep.subr.bf16.mxu0 0
  %182 = vmatpush1.bf16.msra.mxu0 %v148
  %183 = vmatprep.subr.bf16.mxu0 0
  %184 = vmatpush1.bf16.msra.mxu0 %v149
  %185 = vmatprep.subr.bf16.mxu0 0
  %186 = vmatpush1.bf16.msra.mxu0 %v150
  %187 = vmatprep.subr.bf16.mxu0 0
  %188 = vmatpush1.bf16.msra.mxu0 %v151
  %189 = vmatprep.subr.bf16.mxu0 0
  %190 = vmatpush1.bf16.msra.mxu0 %v152
  %191 = vmatprep.subr.bf16.mxu0 0
  %192 = vmatpush1.bf16.msra.mxu0 %v153
  %193 = vmatprep.subr.bf16.mxu0 0
  %194 = vmatpush1.bf16.msra.mxu0 %v154
  %195 = vmatprep.subr.bf16.mxu0 0
  %196 = vmatpush1.bf16.msra.mxu0 %v155
  %197 = vmatprep.subr.bf16.mxu0 0
  %198 = vmatpush1.bf16.msra.mxu0 %v156
  %199 = vmatprep.subr.bf16.mxu0 0
  %200 = vmatpush1.bf16.msra.mxu0 %v157
  %201 = vmatprep.subr.bf16.mxu0 0
  %202 = vmatpush1.bf16.msra.mxu0 %v158
  %203 = vmatprep.subr.bf16.mxu0 0
  %204 = vmatpush1.bf16.msra.mxu0 %v159
  %205 = vmatprep.subr.bf16.mxu0 0
  %206 = vmatpush1.bf16.msra.mxu0 %v160
  %207 = vmatprep.subr.bf16.mxu0 0
  %208 = vmatpush1.bf16.msra.mxu0 %v161
  %209 = vmatprep.subr.bf16.mxu0 0
  %210 = vmatpush1.bf16.msra.mxu0 %v162
  %211 = vmatprep.mubr.bf16.mxu0 %v76
  %212 = vmatmul.mubr.bf16.gmra.mrb[0].mxu0 %v75
  %v213 = vpop.f32.mrb[0].mxu0
  %v214 = vadd.f32 0.0, %v213
  %v215 = vpop.f32.mrb[0].mxu0
  %v216 = vpop.f32.mrb[0].mxu0
  %v217 = vadd.f32 0.0, %v216
  %v218 = vpop.f32.mrb[0].mxu0
  %219 = vmatprep.mubr.bf16.mxu0 %v78
  %220 = vmatmul.mubr.bf16.gmra.mrb[0].mxu0 %v77
  %v221 = vpop.f32.mrb[0].mxu0
  %v222 = vadd.f32 0.0, %v221
  %v223 = vpop.f32.mrb[0].mxu0
  %v224 = vpop.f32.mrb[0].mxu0
  %v225 = vadd.f32 0.0, %v224
  %v226 = vpop.f32.mrb[0].mxu0
  %227 = vdwg.mxu0
  %v228 = vadd.f32 %v23, %v214
  %v229 = vadd.f32 %v24, %v217
  %v230 = vadd.f32 %v25, %v222
  %v231 = vadd.f32 %v26, %v225
  %232 = vst [vmem:[#allocation2] sm:$0xff] %v228
  %233 = vst [vmem:[#allocation2 + $0x8] sm:$0xff] %v229
  %234 = vst [vmem:[#allocation2 + $0x10] sm:$0xff] %v230
  %235 = vst [vmem:[#allocation2 + $0x18] sm:$0xff] %v231
  // Predicated region
  $region14: #{_lambda_.11} parent=0 // pred_check
    %p236 = pneg %p15
  $region15: #{_lambda_.11} parent=0 // pred_check_branch
    %238 = sbr.rel (%p236) target = $region17
  $region16: #{_lambda_.11} parent=0 // pred_region
    %v239 = vld [vmem:[#allocation2] sm:$0xff]
    %v240 = vld [vmem:[#allocation2 + $0x8] sm:$0xff]
    %v241 = vld [vmem:[#allocation2 + $0x10] sm:$0xff]
    %v242 = vld [vmem:[#allocation2 + $0x18] sm:$0xff]
    %v243 = vpack.c.bf16 %v240, %v239
    %v244 = vpack.c.bf16 %v242, %v241
    %v247 = vunpack.c.l.b16 %v243
    %v248 = vunpack.c.h.b16 %v243
    %v249 = vunpack.c.l.b16 %v244
    %v250 = vunpack.c.h.b16 %v244
    %v251 = vpack.c.b16 %v247, %v247
    %v252 = vpack.c.b16 %v248, %v248
    %v253 = vpack.c.b16 %v249, %v249
    %v254 = vpack.c.b16 %v250, %v250
    %259 = vst [vmem:[%s2] sm:$0xf] %v251
    %260 = vst [vmem:[%s2 + $0x4] sm:$0xf] %v252
    %261 = vst [vmem:[%s2 + $0x8] sm:$0xf] %v253
    %262 = vst [vmem:[%s2 + $0xc] sm:$0xf] %v254
    %v263 = vadd.f32 %v239, %v240
    %v264 = vadd.f32 %v263, %v241
    %v265 = vadd.f32 %v264, %v242
    %v266 = vrot.slane %v265, 4
    %v267 = vadd.f32 %v265, %v266
    %v268 = vrot.slane %v267, 2
    %v269 = vadd.f32 %v267, %v268
    %v270 = vrot.slane %v269, 1
    %v271 = vadd.f32 %v269, %v270
    %272 = vst [vmem:[%s3] sm:$0x1] %v271
    %v273 = vmul.f32 %v239, %v239
    %v274 = vmul.f32 %v240, %v240
    %v275 = vmul.f32 %v241, %v241
    %v276 = vmul.f32 %v242, %v242
    %v277 = vadd.f32 %v273, %v274
    %v278 = vadd.f32 %v277, %v275
    %v279 = vadd.f32 %v278, %v276
    %v280 = vrot.slane %v279, 4
    %v281 = vadd.f32 %v279, %v280
    %v282 = vrot.slane %v281, 2
    %v283 = vadd.f32 %v281, %v282
    %v284 = vrot.slane %v283, 1
    %v285 = vadd.f32 %v283, %v284
    %286 = vst [vmem:[%s4] sm:$0x1] %v285
  $region17: #{_lambda_.11} parent=0 // pred_fallthru
    _
  // Predicated region
  $region18: #{_lambda_.11} parent=0 // pred_check
    _
  $region19: #{_lambda_.11} parent=0 // pred_check_branch
    %288 = sbr.rel (0) target = $region21
  $region20: #{_lambda_.11} parent=0 // pred_region
    _
  $region21: #{_lambda_.11} parent=0 // pred_fallthru
    _
  // Predicated region
  $region22: #{_lambda_.11} parent=0 // pred_check
    _
  $region23: #{_lambda_.11} parent=0 // pred_check_branch
    %290 = sbr.rel (0) target = $region25
  $region24: #{_lambda_.11} parent=0 // pred_region
    _
  $region25: #{_lambda_.11} parent=0 // pred_fallthru
    _
  // Predicated region
  $region26: #{_lambda_.11} parent=0 // pred_check
    _
  $region27: #{_lambda_.11} parent=0 // pred_check_branch
    %292 = sbr.rel (0) target = $region29
  $region28: #{_lambda_.11} parent=0 // pred_region
    _
  $region29: #{_lambda_.11} parent=0 // pred_fallthru
    _
  // Predicated region
  $region30: #{_lambda_.11} parent=0 // pred_check
    _
  $region31: #{_lambda_.11} parent=0 // pred_check_branch
    %294 = sbr.rel (0) target = $region33
  $region32: #{_lambda_.11} parent=0 // pred_region
    _
  $region33: #{_lambda_.11} parent=0 // pred_fallthru
    _
  // Predicated region
  $region34: #{_lambda_.11} parent=0 // pred_check
    _
  $region35: #{_lambda_.11} parent=0 // pred_check_branch
    %296 = sbr.rel (0) target = $region37
  $region36: #{_lambda_.11} parent=0 // pred_region
    _
  $region37: #{_lambda_.11} parent=0 // pred_fallthru
    _
  // Predicated region
  $region38: #{_lambda_.11} parent=0 // pred_check
    _
  $region39: #{_lambda_.11} parent=0 // pred_check_branch
    %298 = sbr.rel (0) target = $region41
  $region40: #{_lambda_.11} parent=0 // pred_region
    _
  $region41: #{_lambda_.11} parent=0 // pred_fallthru
    _

// kernel: _lambda_.14
$region0: #{_lambda_.14}
  #allocation0 [shape = 'u32[]', space=smem, size = 0x4, offset = 0x4, fixed_abs, tag = 'smem constant byte address 0x4 - core index']
  #allocation1 [shape = 'u32[144,128]{1,0:T(1,128)}', space=vmem, size = 0x12000, scoped, tag = 'internal scratch']
  %s0 = inlined_call_operand.vmem [shape: bf16[8,128], index: 0, kind: input, shape index: {}]
  %s1 = inlined_call_operand.vmem [shape: f32[1,128], index: 1, kind: input, shape index: {}]
  %s2 = inlined_call_operand.vmem [shape: f32[1,128], index: 2, kind: input, shape index: {}]
  %s3 = inlined_call_operand.vmem [shape: bf16[8,128], index: 3, kind: output, shape index: {}]
  %s4 = sld [smem:[#allocation0]]
  $region22: #{_lambda_.14} parent=0
    _
  %s6 = ssub.s32 1, %s4
  %s7 = scalar_select 0, %s6, %s4
  // Predicated region
  $region2: #{_lambda_.14} parent=0 // pred_check
    _
  $region3: #{_lambda_.14} parent=0 // pred_check_branch
    %9 = sbr.rel (0) target = $region5
  $region4: #{_lambda_.14} parent=0 // pred_region
    _
  $region5: #{_lambda_.14} parent=0 // pred_fallthru
    _
  // Predicated region
  $region6: #{_lambda_.14} parent=0 // pred_check
    _
  $region7: #{_lambda_.14} parent=0 // pred_check_branch
    %11 = sbr.rel (0) target = $region9
  $region8: #{_lambda_.14} parent=0 // pred_region
    _
  $region9: #{_lambda_.14} parent=0 // pred_fallthru
    _
  // Predicated region
  $region10: #{_lambda_.14} parent=0 // pred_check
    _
  $region11: #{_lambda_.14} parent=0 // pred_check_branch
    %13 = sbr.rel (0) target = $region13
  $region12: #{_lambda_.14} parent=0 // pred_region
    _
  $region13: #{_lambda_.14} parent=0 // pred_fallthru
    _
  %v14 = vld [vmem:[%s0] sm:$0xf]
  %v15 = vunpack.c.l.bf16 %v14
  %v16 = vld [vmem:[%s1] sm:$0x1]
  %v18 = vlaneseq
  %v19 = vshrl.u32 %v18, 7
  %v20 = vsub.s32 0, %v19
  %v21 = vrot.slane %v16, %v20
  %v23 = vmul.f32 %v15, %v21
  %v24 = vld [vmem:[%s2] sm:$0x1]
  %v26 = vlaneseq
  %v27 = vshrl.u32 %v26, 7
  %v28 = vsub.s32 0, %v27
  %v29 = vrot.slane %v24, %v28
  %v31 = vadd.f32 %v23, %v29
  %v32 = vxor.u32 %v31, 2147483648
  %v33 = vmul.f32 %v32, 1.442695
  %v34 = vpow.pop %v33
  %v35 = vadd.f32 %v34, 1.0
  %v36 = vrcp.pop %v35
  %v37 = vmul.f32 1.0, %v36
  %v38 = vmul.f32 %v31, %v37
  %v39 = vpack.c.bf16 %v38, %v38
  %40 = vst [vmem:[%s3] sm:$0xf] %v39
  // Predicated region
  $region14: #{_lambda_.14} parent=0 // pred_check
    _
  $region15: #{_lambda_.14} parent=0 // pred_check_branch
    %42 = sbr.rel (0) target = $region17
  $region16: #{_lambda_.14} parent=0 // pred_region
    _
  $region17: #{_lambda_.14} parent=0 // pred_fallthru
    _
  // Predicated region
  $region18: #{_lambda_.14} parent=0 // pred_check
    _
  $region19: #{_lambda_.14} parent=0 // pred_check_branch
    %44 = sbr.rel (0) target = $region21
  $region20: #{_lambda_.14} parent=0 // pred_region
    _
  $region21: #{_lambda_.14} parent=0 // pred_fallthru
    _

// kernel: _lambda_.13
$region0: #{_lambda_.13}
  #allocation0 [shape = 'u32[]', space=smem, size = 0x4, offset = 0x4, fixed_abs, tag = 'smem constant byte address 0x4 - core index']
  #allocation1 [shape = 'u32[144,128]{1,0:T(1,128)}', space=vmem, size = 0x12000, scoped, tag = 'internal scratch']
  #allocation2 [shape = 'f32[8,128]{1,0:T(8,128)}', space=vmem, size = 0x1000, scoped, tag = 'scratch operand']
  %s0 = inlined_call_operand.vmem [shape: bf16[8,512], index: 0, kind: input, shape index: {}]
  %s1 = inlined_call_operand.vmem [shape: bf16[512,128], index: 1, kind: input, shape index: {}]
  %s2 = inlined_call_operand.vmem [shape: bf16[8,128], index: 2, kind: output, shape index: {0}]
  %s3 = inlined_call_operand.vmem [shape: f32[1,1,128], index: 3, kind: output, shape index: {1}]
  %s4 = inlined_call_operand.vmem [shape: f32[1,1,128], index: 4, kind: output, shape index: {2}]
  %5 = xla_tuple %s2, %s3, %s4
  %s6 = sld [smem:[#allocation0]]
  $region42: #{_lambda_.13} parent=0
    _
  %s8 = ssub.s32 1, %s6
  %s9 = scalar_select 0, %s8, %s6
  // Predicated region
  $region2: #{_lambda_.13} parent=0 // pred_check
    _
  $region3: #{_lambda_.13} parent=0 // pred_check_branch
    %11 = sbr.rel (0) target = $region5
  $region4: #{_lambda_.13} parent=0 // pred_region
    _
  $region5: #{_lambda_.13} parent=0 // pred_fallthru
    _
  // Predicated region
  $region6: #{_lambda_.13} parent=0 // pred_check
    _
  $region7: #{_lambda_.13} parent=0 // pred_check_branch
    %13 = sbr.rel (0) target = $region9
  $region8: #{_lambda_.13} parent=0 // pred_region
    _
  $region9: #{_lambda_.13} parent=0 // pred_fallthru
    _
  %p15 = scmp.eq.s32.totalorder 0, 0
  // Predicated region
  $region10: #{_lambda_.13} parent=0 // pred_check
    %p16 = pneg %p15
  $region11: #{_lambda_.13} parent=0 // pred_check_branch
    %18 = sbr.rel (%p16) target = $region13
  $region12: #{_lambda_.13} parent=0 // pred_region
    %19 = vst [vmem:[#allocation2] sm:$0xff] 0.0
  $region13: #{_lambda_.13} parent=0 // pred_fallthru
    _
  %v20 = vld [vmem:[#allocation2] sm:$0xff]
  %v21 = vld [vmem:[%s0] sm:$0xff]
  %v22 = vld [vmem:[%s0 + $0x8] sm:$0xff]
  %v23 = vld [vmem:[%s1] sm:$0xf]
  %v24 = vld [vmem:[%s1 + $0x4] sm:$0xf]
  %v25 = vld [vmem:[%s1 + $0x8] sm:$0xf]
  %v26 = vld [vmem:[%s1 + $0xc] sm:$0xf]
  %v27 = vld [vmem:[%s1 + $0x10] sm:$0xf]
  %v28 = vld [vmem:[%s1 + $0x14] sm:$0xf]
  %v29 = vld [vmem:[%s1 + $0x18] sm:$0xf]
  %v30 = vld [vmem:[%s1 + $0x1c] sm:$0xf]
  %v31 = vld [vmem:[%s1 + $0x20] sm:$0xf]
  %v32 = vld [vmem:[%s1 + $0x24] sm:$0xf]
  %v33 = vld [vmem:[%s1 + $0x28] sm:$0xf]
  %v34 = vld [vmem:[%s1 + $0x2c] sm:$0xf]
  %v35 = vld [vmem:[%s1 + $0x30] sm:$0xf]
  %v36 = vld [vmem:[%s1 + $0x34] sm:$0xf]
  %v37 = vld [vmem:[%s1 + $0x38] sm:$0xf]
  %v38 = vld [vmem:[%s1 + $0x3c] sm:$0xf]
  %v39 = vld [vmem:[%s1 + $0x40] sm:$0xf]
  %v40 = vld [vmem:[%s1 + $0x44] sm:$0xf]
  %v41 = vld [vmem:[%s1 + $0x48] sm:$0xf]
  %v42 = vld [vmem:[%s1 + $0x4c] sm:$0xf]
  %v43 = vld [vmem:[%s1 + $0x50] sm:$0xf]
  %v44 = vld [vmem:[%s1 + $0x54] sm:$0xf]
  %v45 = vld [vmem:[%s1 + $0x58] sm:$0xf]
  %v46 = vld [vmem:[%s1 + $0x5c] sm:$0xf]
  %v47 = vld [vmem:[%s1 + $0x60] sm:$0xf]
  %v48 = vld [vmem:[%s1 + $0x64] sm:$0xf]
  %v49 = vld [vmem:[%s1 + $0x68] sm:$0xf]
  %v50 = vld [vmem:[%s1 + $0x6c] sm:$0xf]
  %v51 = vld [vmem:[%s1 + $0x70] sm:$0xf]
  %v52 = vld [vmem:[%s1 + $0x74] sm:$0xf]
  %v53 = vld [vmem:[%s1 + $0x78] sm:$0xf]
  %v54 = vld [vmem:[%s1 + $0x7c] sm:$0xf]
  %v55 = vld [vmem:[%s1 + $0x80] sm:$0xf]
  %v56 = vld [vmem:[%s1 + $0x84] sm:$0xf]
  %v57 = vld [vmem:[%s1 + $0x88] sm:$0xf]
  %v58 = vld [vmem:[%s1 + $0x8c] sm:$0xf]
  %v59 = vld [vmem:[%s1 + $0x90] sm:$0xf]
  %v60 = vld [vmem:[%s1 + $0x94] sm:$0xf]
  %v61 = vld [vmem:[%s1 + $0x98] sm:$0xf]
  %v62 = vld [vmem:[%s1 + $0x9c] sm:$0xf]
  %v63 = vld [vmem:[%s1 + $0xa0] sm:$0xf]
  %v64 = vld [vmem:[%s1 + $0xa4] sm:$0xf]
  %v65 = vld [vmem:[%s1 + $0xa8] sm:$0xf]
  %v66 = vld [vmem:[%s1 + $0xac] sm:$0xf]
  %v67 = vld [vmem:[%s1 + $0xb0] sm:$0xf]
  %v68 = vld [vmem:[%s1 + $0xb4] sm:$0xf]
  %v69 = vld [vmem:[%s1 + $0xb8] sm:$0xf]
  %v70 = vld [vmem:[%s1 + $0xbc] sm:$0xf]
  %v71 = vld [vmem:[%s1 + $0xc0] sm:$0xf]
  %v72 = vld [vmem:[%s1 + $0xc4] sm:$0xf]
  %v73 = vld [vmem:[%s1 + $0xc8] sm:$0xf]
  %v74 = vld [vmem:[%s1 + $0xcc] sm:$0xf]
  %v75 = vld [vmem:[%s1 + $0xd0] sm:$0xf]
  %v76 = vld [vmem:[%s1 + $0xd4] sm:$0xf]
  %v77 = vld [vmem:[%s1 + $0xd8] sm:$0xf]
  %v78 = vld [vmem:[%s1 + $0xdc] sm:$0xf]
  %v79 = vld [vmem:[%s1 + $0xe0] sm:$0xf]
  %v80 = vld [vmem:[%s1 + $0xe4] sm:$0xf]
  %v81 = vld [vmem:[%s1 + $0xe8] sm:$0xf]
  %v82 = vld [vmem:[%s1 + $0xec] sm:$0xf]
  %v83 = vld [vmem:[%s1 + $0xf0] sm:$0xf]
  %v84 = vld [vmem:[%s1 + $0xf4] sm:$0xf]
  %v85 = vld [vmem:[%s1 + $0xf8] sm:$0xf]
  %v86 = vld [vmem:[%s1 + $0xfc] sm:$0xf]
  %v89 = vunpack.c.l.b16 %v21
  %v90 = vunpack.c.h.b16 %v21
  %v91 = vunpack.c.l.b16 %v22
  %v92 = vunpack.c.h.b16 %v22
  %v93 = vpack.c.b16 %v89, %v89
  %v94 = vpack.c.b16 %v90, %v90
  %v95 = vpack.c.b16 %v91, %v91
  %v96 = vpack.c.b16 %v92, %v92
  %v165 = vunpack.c.l.b16 %v23
  %v166 = vunpack.c.l.b16 %v24
  %v167 = vunpack.c.l.b16 %v25
  %v168 = vunpack.c.l.b16 %v26
  %v169 = vunpack.c.l.b16 %v27
  %v170 = vunpack.c.l.b16 %v28
  %v171 = vunpack.c.l.b16 %v29
  %v172 = vunpack.c.l.b16 %v30
  %v173 = vunpack.c.l.b16 %v31
  %v174 = vunpack.c.l.b16 %v32
  %v175 = vunpack.c.l.b16 %v33
  %v176 = vunpack.c.l.b16 %v34
  %v177 = vunpack.c.l.b16 %v35
  %v178 = vunpack.c.l.b16 %v36
  %v179 = vunpack.c.l.b16 %v37
  %v180 = vunpack.c.l.b16 %v38
  %v181 = vunpack.c.l.b16 %v39
  %v182 = vunpack.c.l.b16 %v40
  %v183 = vunpack.c.l.b16 %v41
  %v184 = vunpack.c.l.b16 %v42
  %v185 = vunpack.c.l.b16 %v43
  %v186 = vunpack.c.l.b16 %v44
  %v187 = vunpack.c.l.b16 %v45
  %v188 = vunpack.c.l.b16 %v46
  %v189 = vunpack.c.l.b16 %v47
  %v190 = vunpack.c.l.b16 %v48
  %v191 = vunpack.c.l.b16 %v49
  %v192 = vunpack.c.l.b16 %v50
  %v193 = vunpack.c.l.b16 %v51
  %v194 = vunpack.c.l.b16 %v52
  %v195 = vunpack.c.l.b16 %v53
  %v196 = vunpack.c.l.b16 %v54
  %v197 = vunpack.c.l.b16 %v55
  %v198 = vunpack.c.l.b16 %v56
  %v199 = vunpack.c.l.b16 %v57
  %v200 = vunpack.c.l.b16 %v58
  %v201 = vunpack.c.l.b16 %v59
  %v202 = vunpack.c.l.b16 %v60
  %v203 = vunpack.c.l.b16 %v61
  %v204 = vunpack.c.l.b16 %v62
  %v205 = vunpack.c.l.b16 %v63
  %v206 = vunpack.c.l.b16 %v64
  %v207 = vunpack.c.l.b16 %v65
  %v208 = vunpack.c.l.b16 %v66
  %v209 = vunpack.c.l.b16 %v67
  %v210 = vunpack.c.l.b16 %v68
  %v211 = vunpack.c.l.b16 %v69
  %v212 = vunpack.c.l.b16 %v70
  %v213 = vunpack.c.l.b16 %v71
  %v214 = vunpack.c.l.b16 %v72
  %v215 = vunpack.c.l.b16 %v73
  %v216 = vunpack.c.l.b16 %v74
  %v217 = vunpack.c.l.b16 %v75
  %v218 = vunpack.c.l.b16 %v76
  %v219 = vunpack.c.l.b16 %v77
  %v220 = vunpack.c.l.b16 %v78
  %v221 = vunpack.c.l.b16 %v79
  %v222 = vunpack.c.l.b16 %v80
  %v223 = vunpack.c.l.b16 %v81
  %v224 = vunpack.c.l.b16 %v82
  %v225 = vunpack.c.l.b16 %v83
  %v226 = vunpack.c.l.b16 %v84
  %v227 = vunpack.c.l.b16 %v85
  %v228 = vunpack.c.l.b16 %v86
  %v229 = vpack.c.b16 %v166, %v165
  %v230 = vpack.c.b16 %v168, %v167
  %v231 = vpack.c.b16 %v170, %v169
  %v232 = vpack.c.b16 %v172, %v171
  %v233 = vpack.c.b16 %v174, %v173
  %v234 = vpack.c.b16 %v176, %v175
  %v235 = vpack.c.b16 %v178, %v177
  %v236 = vpack.c.b16 %v180, %v179
  %v237 = vpack.c.b16 %v182, %v181
  %v238 = vpack.c.b16 %v184, %v183
  %v239 = vpack.c.b16 %v186, %v185
  %v240 = vpack.c.b16 %v188, %v187
  %v241 = vpack.c.b16 %v190, %v189
  %v242 = vpack.c.b16 %v192, %v191
  %v243 = vpack.c.b16 %v194, %v193
  %v244 = vpack.c.b16 %v196, %v195
  %v245 = vpack.c.b16 %v198, %v197
  %v246 = vpack.c.b16 %v200, %v199
  %v247 = vpack.c.b16 %v202, %v201
  %v248 = vpack.c.b16 %v204, %v203
  %v249 = vpack.c.b16 %v206, %v205
  %v250 = vpack.c.b16 %v208, %v207
  %v251 = vpack.c.b16 %v210, %v209
  %v252 = vpack.c.b16 %v212, %v211
  %v253 = vpack.c.b16 %v214, %v213
  %v254 = vpack.c.b16 %v216, %v215
  %v255 = vpack.c.b16 %v218, %v217
  %v256 = vpack.c.b16 %v220, %v219
  %v257 = vpack.c.b16 %v222, %v221
  %v258 = vpack.c.b16 %v224, %v223
  %v259 = vpack.c.b16 %v226, %v225
  %v260 = vpack.c.b16 %v228, %v227
  %293 = vmatprep.subr.bf16.mxu0 0
  %294 = vmatpush1.bf16.msra.mxu0 %v229
  %295 = vmatprep.subr.bf16.mxu0 0
  %296 = vmatpush1.bf16.msra.mxu0 %v230
  %297 = vmatprep.subr.bf16.mxu0 0
  %298 = vmatpush1.bf16.msra.mxu0 %v231
  %299 = vmatprep.subr.bf16.mxu0 0
  %300 = vmatpush1.bf16.msra.mxu0 %v232
  %301 = vmatprep.subr.bf16.mxu0 0
  %302 = vmatpush1.bf16.msra.mxu0 %v233
  %303 = vmatprep.subr.bf16.mxu0 0
  %304 = vmatpush1.bf16.msra.mxu0 %v234
  %305 = vmatprep.subr.bf16.mxu0 0
  %306 = vmatpush1.bf16.msra.mxu0 %v235
  %307 = vmatprep.subr.bf16.mxu0 0
  %308 = vmatpush1.bf16.msra.mxu0 %v236
  %309 = vmatprep.subr.bf16.mxu0 0
  %310 = vmatpush1.bf16.msra.mxu0 %v237
  %311 = vmatprep.subr.bf16.mxu0 0
  %312 = vmatpush1.bf16.msra.mxu0 %v238
  %313 = vmatprep.subr.bf16.mxu0 0
  %314 = vmatpush1.bf16.msra.mxu0 %v239
  %315 = vmatprep.subr.bf16.mxu0 0
  %316 = vmatpush1.bf16.msra.mxu0 %v240
  %317 = vmatprep.subr.bf16.mxu0 0
  %318 = vmatpush1.bf16.msra.mxu0 %v241
  %319 = vmatprep.subr.bf16.mxu0 0
  %320 = vmatpush1.bf16.msra.mxu0 %v242
  %321 = vmatprep.subr.bf16.mxu0 0
  %322 = vmatpush1.bf16.msra.mxu0 %v243
  %323 = vmatprep.subr.bf16.mxu0 0
  %324 = vmatpush1.bf16.msra.mxu0 %v244
  %325 = vmatprep.mubr.bf16.mxu0 %v94
  %326 = vmatmul.mubr.bf16.gmra.mrb[0].mxu0 %v93
  %v327 = vpop.f32.mrb[0].mxu0
  %v328 = vadd.f32 0.0, %v327
  %v329 = vpop.f32.mrb[0].mxu0
  %v330 = vpop.f32.mrb[0].mxu0
  %v331 = vpop.f32.mrb[0].mxu0
  %332 = vdwg.mxu0
  %333 = vmatprep.subr.bf16.mxu0 0
  %334 = vmatpush1.bf16.msra.mxu0 %v245
  %335 = vmatprep.subr.bf16.mxu0 0
  %336 = vmatpush1.bf16.msra.mxu0 %v246
  %337 = vmatprep.subr.bf16.mxu0 0
  %338 = vmatpush1.bf16.msra.mxu0 %v247
  %339 = vmatprep.subr.bf16.mxu0 0
  %340 = vmatpush1.bf16.msra.mxu0 %v248
  %341 = vmatprep.subr.bf16.mxu0 0
  %342 = vmatpush1.bf16.msra.mxu0 %v249
  %343 = vmatprep.subr.bf16.mxu0 0
  %344 = vmatpush1.bf16.msra.mxu0 %v250
  %345 = vmatprep.subr.bf16.mxu0 0
  %346 = vmatpush1.bf16.msra.mxu0 %v251
  %347 = vmatprep.subr.bf16.mxu0 0
  %348 = vmatpush1.bf16.msra.mxu0 %v252
  %349 = vmatprep.subr.bf16.mxu0 0
  %350 = vmatpush1.bf16.msra.mxu0 %v253
  %351 = vmatprep.subr.bf16.mxu0 0
  %352 = vmatpush1.bf16.msra.mxu0 %v254
  %353 = vmatprep.subr.bf16.mxu0 0
  %354 = vmatpush1.bf16.msra.mxu0 %v255
  %355 = vmatprep.subr.bf16.mxu0 0
  %356 = vmatpush1.bf16.msra.mxu0 %v256
  %357 = vmatprep.subr.bf16.mxu0 0
  %358 = vmatpush1.bf16.msra.mxu0 %v257
  %359 = vmatprep.subr.bf16.mxu0 0
  %360 = vmatpush1.bf16.msra.mxu0 %v258
  %361 = vmatprep.subr.bf16.mxu0 0
  %362 = vmatpush1.bf16.msra.mxu0 %v259
  %363 = vmatprep.subr.bf16.mxu0 0
  %364 = vmatpush1.bf16.msra.mxu0 %v260
  %365 = vmatprep.mubr.bf16.mxu0 %v96
  %366 = vmatmul.mubr.bf16.gmra.mrb[0].mxu0 %v95
  %v367 = vpop.f32.mrb[0].mxu0
  %v368 = vadd.f32 %v328, %v367
  %v369 = vpop.f32.mrb[0].mxu0
  %v370 = vpop.f32.mrb[0].mxu0
  %v371 = vpop.f32.mrb[0].mxu0
  %372 = vdwg.mxu0
  %v373 = vadd.f32 %v20, %v368
  %374 = vst [vmem:[#allocation2] sm:$0xff] %v373
  // Predicated region
  $region14: #{_lambda_.13} parent=0 // pred_check
    %p375 = pneg %p15
  $region15: #{_lambda_.13} parent=0 // pred_check_branch
    %377 = sbr.rel (%p375) target = $region17
  $region16: #{_lambda_.13} parent=0 // pred_region
    %v378 = vld [vmem:[#allocation2] sm:$0xff]
    %v379 = vpack.c.bf16 %v378, %v378
    %380 = vst [vmem:[%s2] sm:$0xf] %v379
    %v381 = vrot.slane %v378, 4
    %v382 = vadd.f32 %v378, %v381
    %v383 = vrot.slane %v382, 2
    %v384 = vadd.f32 %v382, %v383
    %v385 = vrot.slane %v384, 1
    %v386 = vadd.f32 %v384, %v385
    %387 = vst [vmem:[%s3] sm:$0x1] %v386
    %v388 = vmul.f32 %v378, %v378
    %v389 = vrot.slane %v388, 4
    %v390 = vadd.f32 %v388, %v389
    %v391 = vrot.slane %v390, 2
    %v392 = vadd.f32 %v390, %v391
    %v393 = vrot.slane %v392, 1
    %v394 = vadd.f32 %v392, %v393
    %395 = vst [vmem:[%s4] sm:$0x1] %v394
  $region17: #{_lambda_.13} parent=0 // pred_fallthru
    _
  // Predicated region
  $region18: #{_lambda_.13} parent=0 // pred_check
    _
  $region19: #{_lambda_.13} parent=0 // pred_check_branch
    %397 = sbr.rel (0) target = $region21
  $region20: #{_lambda_.13} parent=0 // pred_region
    _
  $region21: #{_lambda_.13} parent=0 // pred_fallthru
    _
  // Predicated region
  $region22: #{_lambda_.13} parent=0 // pred_check
    _
  $region23: #{_lambda_.13} parent=0 // pred_check_branch
    %399 = sbr.rel (0) target = $region25
  $region24: #{_lambda_.13} parent=0 // pred_region
    _
  $region25: #{_lambda_.13} parent=0 // pred_fallthru
    _
  // Predicated region
  $region26: #{_lambda_.13} parent=0 // pred_check
    _
  $region27: #{_lambda_.13} parent=0 // pred_check_branch
    %401 = sbr.rel (0) target = $region29
  $region28: #{_lambda_.13} parent=0 // pred_region
    _
  $region29: #{_lambda_.13} parent=0 // pred_fallthru
    _
  // Predicated region
  $region30: #{_lambda_.13} parent=0 // pred_check
    _
  $region31: #{_lambda_.13} parent=0 // pred_check_branch
    %403 = sbr.rel (0) target = $region33
  $region32: #{_lambda_.13} parent=0 // pred_region
    _
  $region33: #{_lambda_.13} parent=0 // pred_fallthru
    _
  // Predicated region
  $region34: #{_lambda_.13} parent=0 // pred_check
    _
  $region35: #{_lambda_.13} parent=0 // pred_check_branch
    %405 = sbr.rel (0) target = $region37
  $region36: #{_lambda_.13} parent=0 // pred_region
    _
  $region37: #{_lambda_.13} parent=0 // pred_fallthru
    _
  // Predicated region
  $region38: #{_lambda_.13} parent=0 // pred_check
    _
  $region39: #{_lambda_.13} parent=0 // pred_check_branch
    %407 = sbr.rel (0) target = $region41
  $region40: #{_lambda_.13} parent=0 // pred_region
    _
  $region41: #{_lambda_.13} parent=0 // pred_fallthru
    _

// kernel: _lambda_.15
$region0: #{_lambda_.15}
  #allocation0 [shape = 'u32[]', space=smem, size = 0x4, offset = 0x4, fixed_abs, tag = 'smem constant byte address 0x4 - core index']
  #allocation1 [shape = 'u32[144,128]{1,0:T(1,128)}', space=vmem, size = 0x12000, scoped, tag = 'internal scratch']
  #allocation2 [shape = 'f32[8,128]{1,0:T(8,128)}', space=vmem, size = 0x1000, scoped, tag = 'scratch operand']
  %s0 = inlined_call_operand.vmem [shape: bf16[8,1024], index: 0, kind: input, shape index: {}]
  %s1 = inlined_call_operand.vmem [shape: bf16[1024,128], index: 1, kind: input, shape index: {}]
  %s2 = inlined_call_operand.vmem [shape: f32[1,128], index: 2, kind: input, shape index: {}]
  %s3 = inlined_call_operand.vmem [shape: f32[8,128], index: 3, kind: output, shape index: {}]
  %s4 = sld [smem:[#allocation0]]
  $region53: #{_lambda_.15} parent=0
    _
  %s6 = ssub.s32 1, %s4
  %s7 = scalar_select 0, %s6, %s4
  loop: start=0, step=1, limit=4
  $region2: #{_lambda_.15} parent=0 // loop_pre_header
    _
  $region3: #{_lambda_.15} parent=0 // loop_header
    %s9 = sphi 0, %s13
    %p10 = scmp.ge.s32.totalorder %s9, 4
    %s16 = sphi 0, %s35
    %s17 = sphi 0, %s31
    %s18 = sphi 0, %s27
    %s19 = sphi 0, %s16
    %s20 = sphi 0, %s17
    %s21 = sphi 0, %s18
    %s22 = sphi 0, %s19
    %s23 = sphi 0, %s20
    %s24 = sphi 0, %s21
    %s40 = sphi 0, %s42
    %s43 = sphi 0, %s40
    %s44 = sphi 0, %s43
    %s60 = sphi 0, %s44
    %s68 = sphi 0, %s70
    %s71 = sphi 0, %s68
    %s72 = sphi 0, %s71
    %s88 = sphi 0, %s72
    %s94 = sphi 0, %s96
    %s97 = sphi 0, %s94
    %s98 = sphi 0, %s97
    %s114 = sphi 0, %s98
    %s122 = sphi 0, %s124
    %s125 = sphi 0, %s122
    %s126 = sphi 0, %s125
    %s142 = sphi 0, %s126
  $region4: #{_lambda_.15} parent=0 // loop_header_branch
    %12 = sbr.rel (%p10) target = $region8
  $region5: #{_lambda_.15} parent=0 // loop_body
    %s14 = ssub.s32 %s9, 1
    %s15 = ssub.s32 %s9, 2
    %s25 = sadd.s32 1, %s18
    %p26 = scmp.ge.s32.totalorder %s25, 2
    %s27 = scalar_select %p26, 0, %s25
    %s28 = sadd.s32 1, %s17
    %s29 = scalar_select %p26, %s28, %s17
    %p30 = scmp.ge.s32.totalorder %s29, 1
    %s31 = scalar_select %p30, 0, %s29
    %s32 = sadd.s32 1, %s16
    %s33 = scalar_select %p30, %s32, %s16
    %p34 = scmp.ge.s32.totalorder %s33, 1
    %s35 = scalar_select %p34, 0, %s33
    %s36 = ssub.s32 %s17, %s31
    %s37 = ssub.s32 %s18, %s27
    %s38 = sor.u32 %s36, %s37
    %p39 = scmp.eq.s32.totalorder %s38, 0
    %s41 = sadd.s32 %s40, 1
    %s42 = scalar_select %p39, %s40, %s41
    %p45 = pneg %p39
    %p46 = scmp.eq.s32.totalorder %s9, 1
    %p47 = por %p45, %p46
    %p48 = scmp.ne.s32.totalorder %s40, %s43
    %p49 = scmp.eq.s32.totalorder %s9, 0
    %p50 = por %p48, %p49
    %p51 = scmp.ne.s32.totalorder %s40, %s43
    %p52 = scmp.eq.s32.totalorder %s14, 1
    %p53 = por %p51, %p52
    %p54 = scmp.ne.s32.totalorder %s43, %s44
    %p55 = scmp.eq.s32.totalorder %s14, 0
    %p56 = por %p54, %p55
    %p57 = scmp.ne.s32.totalorder %s43, %s44
    %p58 = scmp.eq.s32.totalorder %s15, 1
    %p59 = por %p57, %p58
    %p61 = scmp.ne.s32.totalorder %s44, %s60
    %p62 = scmp.eq.s32.totalorder %s15, 0
    %p63 = por %p61, %p62
    %s64 = ssub.s32 %s18, %s27
    %s65 = ssub.s32 %s16, %s35
    %s66 = sor.u32 %s64, %s65
    %p67 = scmp.eq.s32.totalorder %s66, 0
    %s69 = sadd.s32 %s68, 1
    %s70 = scalar_select %p67, %s68, %s69
    %p73 = pneg %p67
    %p74 = scmp.eq.s32.totalorder %s9, 1
    %p75 = por %p73, %p74
    %p76 = scmp.ne.s32.totalorder %s68, %s71
    %p77 = scmp.eq.s32.totalorder %s9, 0
    %p78 = por %p76, %p77
    %p79 = scmp.ne.s32.totalorder %s68, %s71
    %p80 = scmp.eq.s32.totalorder %s14, 1
    %p81 = por %p79, %p80
    %p82 = scmp.ne.s32.totalorder %s71, %s72
    %p83 = scmp.eq.s32.totalorder %s14, 0
    %p84 = por %p82, %p83
    %p85 = scmp.ne.s32.totalorder %s71, %s72
    %p86 = scmp.eq.s32.totalorder %s15, 1
    %p87 = por %p85, %p86
    %p89 = scmp.ne.s32.totalorder %s72, %s88
    %p90 = scmp.eq.s32.totalorder %s15, 0
    %p91 = por %p89, %p90
    %s92 = ssub.s32 %s16, %s35
    %p93 = scmp.eq.s32.totalorder %s92, 0
    %s95 = sadd.s32 %s94, 1
    %s96 = scalar_select %p93, %s94, %s95
    %p99 = pneg %p93
    %p100 = scmp.eq.s32.totalorder %s9, 1
    %p101 = por %p99, %p100
    %p102 = scmp.ne.s32.totalorder %s94, %s97
    %p103 = scmp.eq.s32.totalorder %s9, 0
    %p104 = por %p102, %p103
    %p105 = scmp.ne.s32.totalorder %s94, %s97
    %p106 = scmp.eq.s32.totalorder %s14, 1
    %p107 = por %p105, %p106
    %p108 = scmp.ne.s32.totalorder %s97, %s98
    %p109 = scmp.eq.s32.totalorder %s14, 0
    %p110 = por %p108, %p109
    %p111 = scmp.ne.s32.totalorder %s97, %s98
    %p112 = scmp.eq.s32.totalorder %s15, 1
    %p113 = por %p111, %p112
    %p115 = scmp.ne.s32.totalorder %s98, %s114
    %p116 = scmp.eq.s32.totalorder %s15, 0
    %p117 = por %p115, %p116
    %s118 = ssub.s32 %s17, %s31
    %s119 = ssub.s32 %s16, %s35
    %s120 = sor.u32 %s118, %s119
    %p121 = scmp.eq.s32.totalorder %s120, 0
    %s123 = sadd.s32 %s122, 1
    %s124 = scalar_select %p121, %s122, %s123
    %p127 = pneg %p121
    %p128 = scmp.eq.s32.totalorder %s9, 1
    %p129 = por %p127, %p128
    %p130 = scmp.ne.s32.totalorder %s122, %s125
    %p131 = scmp.eq.s32.totalorder %s9, 0
    %p132 = por %p130, %p131
    %p133 = scmp.ne.s32.totalorder %s122, %s125
    %p134 = scmp.eq.s32.totalorder %s14, 1
    %p135 = por %p133, %p134
    %p136 = scmp.ne.s32.totalorder %s125, %s126
    %p137 = scmp.eq.s32.totalorder %s14, 0
    %p138 = por %p136, %p137
    %p139 = scmp.ne.s32.totalorder %s125, %s126
    %p140 = scmp.eq.s32.totalorder %s15, 1
    %p141 = por %p139, %p140
    %p143 = scmp.ne.s32.totalorder %s126, %s142
    %p144 = scmp.eq.s32.totalorder %s15, 0
    %p145 = por %p143, %p144
    %p146 = scmp.le.s32.totalorder 1, %s9
    %p147 = scmp.lt.s32.totalorder %s9, 3
    %p148 = pnand %p146, %p147
    %p149 = pneg %p148
    // Predicated region
    $region9: #{_lambda_.15} parent=5 // pred_check
      _
    $region10: #{_lambda_.15} parent=5 // pred_check_branch
      %151 = sbr.rel (%p148) target = $region12
    $region11: #{_lambda_.15} parent=5 // pred_region
      %s152 = ssub.s32 %s9, 1
      // Predicated region
      $region13: #{_lambda_.15} parent=11 // pred_check
        %p153 = pneg %p110
      $region14: #{_lambda_.15} parent=11 // pred_check_branch
        %155 = sbr.rel (%p153) target = $region16
      $region15: #{_lambda_.15} parent=11 // pred_region
        %p156 = scmp.lt.s32.totalorder %s19, 0
        %s157 = scalar_select %p156, %s19, 0
        %s158 = scalar_lea.vmem %s2, %s157
      $region16: #{_lambda_.15} parent=11 // pred_fallthru
        _
    $region12: #{_lambda_.15} parent=5 // pred_fallthru
      _
    %p159 = scmp.lt.s32.totalorder %s9, 2
    // Predicated region
    $region17: #{_lambda_.15} parent=5 // pred_check
      %p160 = pneg %p159
    $region18: #{_lambda_.15} parent=5 // pred_check_branch
      %162 = sbr.rel (%p160) target = $region20
    $region19: #{_lambda_.15} parent=5 // pred_region
      // Predicated region
      $region21: #{_lambda_.15} parent=19 // pred_check
        %p163 = pneg %p50
      $region22: #{_lambda_.15} parent=19 // pred_check_branch
        %165 = sbr.rel (%p163) target = $region24
      $region23: #{_lambda_.15} parent=19 // pred_region
        %s166 = smul.u32 4, %s18
        %p167 = scmp.lt.s32.totalorder %s17, 0
        %s168 = scalar_select %p167, %s17, 0
        %p169 = scmp.lt.s32.totalorder %s166, 7
        %s170 = scalar_select %p169, %s166, 7
        %s171 = smul.addr %s168, 8
        %s172 = sadd.s32 %s170, %s171
        %s173 = smul.addr %s172, 4
        %s174 = scalar_lea.vmem %s0, %s173
        %s175 = smul.u32 4, %s18
      $region24: #{_lambda_.15} parent=19 // pred_fallthru
        _
      // Predicated region
      $region25: #{_lambda_.15} parent=19 // pred_check
        %p176 = pneg %p78
      $region26: #{_lambda_.15} parent=19 // pred_check_branch
        %178 = sbr.rel (%p176) target = $region28
      $region27: #{_lambda_.15} parent=19 // pred_region
        %s179 = smul.u32 64, %s18
        %p180 = scmp.lt.s32.totalorder %s179, 127
        %s181 = scalar_select %p180, %s179, 127
        %p182 = scmp.lt.s32.totalorder %s16, 0
        %s183 = scalar_select %p182, %s16, 0
        %s184 = sadd.s32 %s183, %s181
        %s185 = smul.addr %s184, 4
        %s186 = scalar_lea.vmem %s1, %s185
        %s187 = smul.u32 64, %s18
      $region28: #{_lambda_.15} parent=19 // pred_fallthru
        _
    $region20: #{_lambda_.15} parent=5 // pred_fallthru
      _
    %p188 = scmp.le.s32.totalorder 1, %s9
    %p189 = scmp.lt.s32.totalorder %s9, 3
    %p190 = pnand %p188, %p189
    %p191 = pneg %p190
    // Predicated region
    $region29: #{_lambda_.15} parent=5 // pred_check
      _
    $region30: #{_lambda_.15} parent=5 // pred_check_branch
      %193 = sbr.rel (%p190) target = $region32
    $region31: #{_lambda_.15} parent=5 // pred_region
      %s194 = ssub.s32 %s9, 1
      %s195 = smul.u32 4, %s21
      %p196 = scmp.lt.s32.totalorder %s20, 0
      %s197 = scalar_select %p196, %s20, 0
      %p198 = scmp.lt.s32.totalorder %s195, 7
      %s199 = scalar_select %p198, %s195, 7
      %s200 = smul.addr %s197, 8
      %s201 = sadd.s32 %s199, %s200
      %s202 = smul.addr %s201, 4
      %s203 = scalar_lea.vmem %s0, %s202
      %p204 = pneg %p56
      %p205 = pneg %p53
      %s206 = smul.u32 64, %s21
      %p207 = scmp.lt.s32.totalorder %s206, 127
      %s208 = scalar_select %p207, %s206, 127
      %p209 = scmp.lt.s32.totalorder %s19, 0
      %s210 = scalar_select %p209, %s19, 0
      %s211 = sadd.s32 %s210, %s208
      %s212 = smul.addr %s211, 4
      %s213 = scalar_lea.vmem %s1, %s212
      %p214 = pneg %p84
      %p215 = pneg %p81
      %p216 = scmp.lt.s32.totalorder %s19, 0
      %s217 = scalar_select %p216, %s19, 0
      %s218 = scalar_lea.vmem %s2, %s217
      %p219 = pneg %p110
      %p220 = pneg %p107
      %p221 = pneg %p138
      %p222 = pneg %p135
      %p223 = scmp.lt.s32.totalorder %s20, 0
      %s224 = scalar_select %p223, %s20, 0
      %p225 = scmp.lt.s32.totalorder %s19, 0
      %s226 = scalar_select %p225, %s19, 0
      %s227 = sadd.s32 %s226, %s224
      %s228 = smul.addr %s227, 8
      %s229 = scalar_lea.vmem %s3, %s228
      %s230 = smul.u32 4, %s21
      %p231 = scmp.lt.s32.totalorder %s20, 0
      %s232 = scalar_select %p231, %s20, 0
      %p233 = scmp.lt.s32.totalorder %s230, 7
      %s234 = scalar_select %p233, %s230, 7
      %s235 = smul.addr %s232, 8
      %s236 = sadd.s32 %s234, %s235
      %s237 = smul.addr %s236, 4
      %s238 = scalar_lea.vmem %s0, %s237
      %s239 = smul.u32 4, %s21
      %s240 = smul.u32 64, %s21
      %p241 = scmp.lt.s32.totalorder %s240, 127
      %s242 = scalar_select %p241, %s240, 127
      %p243 = scmp.lt.s32.totalorder %s19, 0
      %s244 = scalar_select %p243, %s19, 0
      %s245 = sadd.s32 %s244, %s242
      %s246 = smul.addr %s245, 4
      %s247 = scalar_lea.vmem %s1, %s246
      %s248 = smul.u32 64, %s21
      %p249 = scmp.lt.s32.totalorder %s19, 0
      %s250 = scalar_select %p249, %s19, 0
      %s251 = scalar_lea.vmem %s2, %s250
      %p252 = scmp.lt.s32.totalorder %s20, 0
      %s253 = scalar_select %p252, %s20, 0
      %p254 = scmp.lt.s32.totalorder %s19, 0
      %s255 = scalar_select %p254, %s19, 0
      %s256 = sadd.s32 %s255, %s253
      %s257 = smul.addr %s256, 8
      %s258 = scalar_lea.vmem %s3, %s257
      %p260 = scmp.eq.s32.totalorder %s21, 0
      // Predicated region
      $region33: #{_lambda_.15} parent=31 // pred_check
        %p261 = pneg %p260
      $region34: #{_lambda_.15} parent=31 // pred_check_branch
        %263 = sbr.rel (%p261) target = $region36
      $region35: #{_lambda_.15} parent=31 // pred_region
        %264 = vst [vmem:[#allocation2] sm:$0xff] 0.0
      $region36: #{_lambda_.15} parent=31 // pred_fallthru
        _
      %v265 = vld [vmem:[#allocation2] sm:$0xff]
      %v266 = vld [vmem:[%s238] sm:$0xff]
      %v267 = vld [vmem:[%s238 + $0x8] sm:$0xff]
      %v268 = vld [vmem:[%s247] sm:$0xf]
      %v269 = vld [vmem:[%s247 + $0x4] sm:$0xf]
      %v270 = vld [vmem:[%s247 + $0x8] sm:$0xf]
      %v271 = vld [vmem:[%s247 + $0xc] sm:$0xf]
      %v272 = vld [vmem:[%s247 + $0x10] sm:$0xf]
      %v273 = vld [vmem:[%s247 + $0x14] sm:$0xf]
      %v274 = vld [vmem:[%s247 + $0x18] sm:$0xf]
      %v275 = vld [vmem:[%s247 + $0x1c] sm:$0xf]
      %v276 = vld [vmem:[%s247 + $0x20] sm:$0xf]
      %v277 = vld [vmem:[%s247 + $0x24] sm:$0xf]
      %v278 = vld [vmem:[%s247 + $0x28] sm:$0xf]
      %v279 = vld [vmem:[%s247 + $0x2c] sm:$0xf]
      %v280 = vld [vmem:[%s247 + $0x30] sm:$0xf]
      %v281 = vld [vmem:[%s247 + $0x34] sm:$0xf]
      %v282 = vld [vmem:[%s247 + $0x38] sm:$0xf]
      %v283 = vld [vmem:[%s247 + $0x3c] sm:$0xf]
      %v284 = vld [vmem:[%s247 + $0x40] sm:$0xf]
      %v285 = vld [vmem:[%s247 + $0x44] sm:$0xf]
      %v286 = vld [vmem:[%s247 + $0x48] sm:$0xf]
      %v287 = vld [vmem:[%s247 + $0x4c] sm:$0xf]
      %v288 = vld [vmem:[%s247 + $0x50] sm:$0xf]
      %v289 = vld [vmem:[%s247 + $0x54] sm:$0xf]
      %v290 = vld [vmem:[%s247 + $0x58] sm:$0xf]
      %v291 = vld [vmem:[%s247 + $0x5c] sm:$0xf]
      %v292 = vld [vmem:[%s247 + $0x60] sm:$0xf]
      %v293 = vld [vmem:[%s247 + $0x64] sm:$0xf]
      %v294 = vld [vmem:[%s247 + $0x68] sm:$0xf]
      %v295 = vld [vmem:[%s247 + $0x6c] sm:$0xf]
      %v296 = vld [vmem:[%s247 + $0x70] sm:$0xf]
      %v297 = vld [vmem:[%s247 + $0x74] sm:$0xf]
      %v298 = vld [vmem:[%s247 + $0x78] sm:$0xf]
      %v299 = vld [vmem:[%s247 + $0x7c] sm:$0xf]
      %v300 = vld [vmem:[%s247 + $0x80] sm:$0xf]
      %v301 = vld [vmem:[%s247 + $0x84] sm:$0xf]
      %v302 = vld [vmem:[%s247 + $0x88] sm:$0xf]
      %v303 = vld [vmem:[%s247 + $0x8c] sm:$0xf]
      %v304 = vld [vmem:[%s247 + $0x90] sm:$0xf]
      %v305 = vld [vmem:[%s247 + $0x94] sm:$0xf]
      %v306 = vld [vmem:[%s247 + $0x98] sm:$0xf]
      %v307 = vld [vmem:[%s247 + $0x9c] sm:$0xf]
      %v308 = vld [vmem:[%s247 + $0xa0] sm:$0xf]
      %v309 = vld [vmem:[%s247 + $0xa4] sm:$0xf]
      %v310 = vld [vmem:[%s247 + $0xa8] sm:$0xf]
      %v311 = vld [vmem:[%s247 + $0xac] sm:$0xf]
      %v312 = vld [vmem:[%s247 + $0xb0] sm:$0xf]
      %v313 = vld [vmem:[%s247 + $0xb4] sm:$0xf]
      %v314 = vld [vmem:[%s247 + $0xb8] sm:$0xf]
      %v315 = vld [vmem:[%s247 + $0xbc] sm:$0xf]
      %v316 = vld [vmem:[%s247 + $0xc0] sm:$0xf]
      %v317 = vld [vmem:[%s247 + $0xc4] sm:$0xf]
      %v318 = vld [vmem:[%s247 + $0xc8] sm:$0xf]
      %v319 = vld [vmem:[%s247 + $0xcc] sm:$0xf]
      %v320 = vld [vmem:[%s247 + $0xd0] sm:$0xf]
      %v321 = vld [vmem:[%s247 + $0xd4] sm:$0xf]
      %v322 = vld [vmem:[%s247 + $0xd8] sm:$0xf]
      %v323 = vld [vmem:[%s247 + $0xdc] sm:$0xf]
      %v324 = vld [vmem:[%s247 + $0xe0] sm:$0xf]
      %v325 = vld [vmem:[%s247 + $0xe4] sm:$0xf]
      %v326 = vld [vmem:[%s247 + $0xe8] sm:$0xf]
      %v327 = vld [vmem:[%s247 + $0xec] sm:$0xf]
      %v328 = vld [vmem:[%s247 + $0xf0] sm:$0xf]
      %v329 = vld [vmem:[%s247 + $0xf4] sm:$0xf]
      %v330 = vld [vmem:[%s247 + $0xf8] sm:$0xf]
      %v331 = vld [vmem:[%s247 + $0xfc] sm:$0xf]
      %v334 = vunpack.c.l.b16 %v266
      %v335 = vunpack.c.h.b16 %v266
      %v336 = vunpack.c.l.b16 %v267
      %v337 = vunpack.c.h.b16 %v267
      %v338 = vpack.c.b16 %v334, %v334
      %v339 = vpack.c.b16 %v335, %v335
      %v340 = vpack.c.b16 %v336, %v336
      %v341 = vpack.c.b16 %v337, %v337
      %v410 = vunpack.c.l.b16 %v268
      %v411 = vunpack.c.l.b16 %v269
      %v412 = vunpack.c.l.b16 %v270
      %v413 = vunpack.c.l.b16 %v271
      %v414 = vunpack.c.l.b16 %v272
      %v415 = vunpack.c.l.b16 %v273
      %v416 = vunpack.c.l.b16 %v274
      %v417 = vunpack.c.l.b16 %v275
      %v418 = vunpack.c.l.b16 %v276
      %v419 = vunpack.c.l.b16 %v277
      %v420 = vunpack.c.l.b16 %v278
      %v421 = vunpack.c.l.b16 %v279
      %v422 = vunpack.c.l.b16 %v280
      %v423 = vunpack.c.l.b16 %v281
      %v424 = vunpack.c.l.b16 %v282
      %v425 = vunpack.c.l.b16 %v283
      %v426 = vunpack.c.l.b16 %v284
      %v427 = vunpack.c.l.b16 %v285
      %v428 = vunpack.c.l.b16 %v286
      %v429 = vunpack.c.l.b16 %v287
      %v430 = vunpack.c.l.b16 %v288
      %v431 = vunpack.c.l.b16 %v289
      %v432 = vunpack.c.l.b16 %v290
      %v433 = vunpack.c.l.b16 %v291
      %v434 = vunpack.c.l.b16 %v292
      %v435 = vunpack.c.l.b16 %v293
      %v436 = vunpack.c.l.b16 %v294
      %v437 = vunpack.c.l.b16 %v295
      %v438 = vunpack.c.l.b16 %v296
      %v439 = vunpack.c.l.b16 %v297
      %v440 = vunpack.c.l.b16 %v298
      %v441 = vunpack.c.l.b16 %v299
      %v442 = vunpack.c.l.b16 %v300
      %v443 = vunpack.c.l.b16 %v301
      %v444 = vunpack.c.l.b16 %v302
      %v445 = vunpack.c.l.b16 %v303
      %v446 = vunpack.c.l.b16 %v304
      %v447 = vunpack.c.l.b16 %v305
      %v448 = vunpack.c.l.b16 %v306
      %v449 = vunpack.c.l.b16 %v307
      %v450 = vunpack.c.l.b16 %v308
      %v451 = vunpack.c.l.b16 %v309
      %v452 = vunpack.c.l.b16 %v310
      %v453 = vunpack.c.l.b16 %v311
      %v454 = vunpack.c.l.b16 %v312
      %v455 = vunpack.c.l.b16 %v313
      %v456 = vunpack.c.l.b16 %v314
      %v457 = vunpack.c.l.b16 %v315
      %v458 = vunpack.c.l.b16 %v316
      %v459 = vunpack.c.l.b16 %v317
      %v460 = vunpack.c.l.b16 %v318
      %v461 = vunpack.c.l.b16 %v319
      %v462 = vunpack.c.l.b16 %v320
      %v463 = vunpack.c.l.b16 %v321
      %v464 = vunpack.c.l.b16 %v322
      %v465 = vunpack.c.l.b16 %v323
      %v466 = vunpack.c.l.b16 %v324
      %v467 = vunpack.c.l.b16 %v325
      %v468 = vunpack.c.l.b16 %v326
      %v469 = vunpack.c.l.b16 %v327
      %v470 = vunpack.c.l.b16 %v328
      %v471 = vunpack.c.l.b16 %v329
      %v472 = vunpack.c.l.b16 %v330
      %v473 = vunpack.c.l.b16 %v331
      %v474 = vpack.c.b16 %v411, %v410
      %v475 = vpack.c.b16 %v413, %v412
      %v476 = vpack.c.b16 %v415, %v414
      %v477 = vpack.c.b16 %v417, %v416
      %v478 = vpack.c.b16 %v419, %v418
      %v479 = vpack.c.b16 %v421, %v420
      %v480 = vpack.c.b16 %v423, %v422
      %v481 = vpack.c.b16 %v425, %v424
      %v482 = vpack.c.b16 %v427, %v426
      %v483 = vpack.c.b16 %v429, %v428
      %v484 = vpack.c.b16 %v431, %v430
      %v485 = vpack.c.b16 %v433, %v432
      %v486 = vpack.c.b16 %v435, %v434
      %v487 = vpack.c.b16 %v437, %v436
      %v488 = vpack.c.b16 %v439, %v438
      %v489 = vpack.c.b16 %v441, %v440
      %v490 = vpack.c.b16 %v443, %v442
      %v491 = vpack.c.b16 %v445, %v444
      %v492 = vpack.c.b16 %v447, %v446
      %v493 = vpack.c.b16 %v449, %v448
      %v494 = vpack.c.b16 %v451, %v450
      %v495 = vpack.c.b16 %v453, %v452
      %v496 = vpack.c.b16 %v455, %v454
      %v497 = vpack.c.b16 %v457, %v456
      %v498 = vpack.c.b16 %v459, %v458
      %v499 = vpack.c.b16 %v461, %v460
      %v500 = vpack.c.b16 %v463, %v462
      %v501 = vpack.c.b16 %v465, %v464
      %v502 = vpack.c.b16 %v467, %v466
      %v503 = vpack.c.b16 %v469, %v468
      %v504 = vpack.c.b16 %v471, %v470
      %v505 = vpack.c.b16 %v473, %v472
      %538 = vmatprep.subr.bf16.mxu0 0
      %539 = vmatpush1.bf16.msra.mxu0 %v474
      %540 = vmatprep.subr.bf16.mxu0 0
      %541 = vmatpush1.bf16.msra.mxu0 %v475
      %542 = vmatprep.subr.bf16.mxu0 0
      %543 = vmatpush1.bf16.msra.mxu0 %v476
      %544 = vmatprep.subr.bf16.mxu0 0
      %545 = vmatpush1.bf16.msra.mxu0 %v477
      %546 = vmatprep.subr.bf16.mxu0 0
      %547 = vmatpush1.bf16.msra.mxu0 %v478
      %548 = vmatprep.subr.bf16.mxu0 0
      %549 = vmatpush1.bf16.msra.mxu0 %v479
      %550 = vmatprep.subr.bf16.mxu0 0
      %551 = vmatpush1.bf16.msra.mxu0 %v480
      %552 = vmatprep.subr.bf16.mxu0 0
      %553 = vmatpush1.bf16.msra.mxu0 %v481
      %554 = vmatprep.subr.bf16.mxu0 0
      %555 = vmatpush1.bf16.msra.mxu0 %v482
      %556 = vmatprep.subr.bf16.mxu0 0
      %557 = vmatpush1.bf16.msra.mxu0 %v483
      %558 = vmatprep.subr.bf16.mxu0 0
      %559 = vmatpush1.bf16.msra.mxu0 %v484
      %560 = vmatprep.subr.bf16.mxu0 0
      %561 = vmatpush1.bf16.msra.mxu0 %v485
      %562 = vmatprep.subr.bf16.mxu0 0
      %563 = vmatpush1.bf16.msra.mxu0 %v486
      %564 = vmatprep.subr.bf16.mxu0 0
      %565 = vmatpush1.bf16.msra.mxu0 %v487
      %566 = vmatprep.subr.bf16.mxu0 0
      %567 = vmatpush1.bf16.msra.mxu0 %v488
      %568 = vmatprep.subr.bf16.mxu0 0
      %569 = vmatpush1.bf16.msra.mxu0 %v489
      %570 = vmatprep.mubr.bf16.mxu0 %v339
      %571 = vmatmul.mubr.bf16.gmra.mrb[0].mxu0 %v338
      %v572 = vpop.f32.mrb[0].mxu0
      %v573 = vadd.f32 0.0, %v572
      %v574 = vpop.f32.mrb[0].mxu0
      %v575 = vpop.f32.mrb[0].mxu0
      %v576 = vpop.f32.mrb[0].mxu0
      %577 = vdwg.mxu0
      %578 = vmatprep.subr.bf16.mxu0 0
      %579 = vmatpush1.bf16.msra.mxu0 %v490
      %580 = vmatprep.subr.bf16.mxu0 0
      %581 = vmatpush1.bf16.msra.mxu0 %v491
      %582 = vmatprep.subr.bf16.mxu0 0
      %583 = vmatpush1.bf16.msra.mxu0 %v492
      %584 = vmatprep.subr.bf16.mxu0 0
      %585 = vmatpush1.bf16.msra.mxu0 %v493
      %586 = vmatprep.subr.bf16.mxu0 0
      %587 = vmatpush1.bf16.msra.mxu0 %v494
      %588 = vmatprep.subr.bf16.mxu0 0
      %589 = vmatpush1.bf16.msra.mxu0 %v495
      %590 = vmatprep.subr.bf16.mxu0 0
      %591 = vmatpush1.bf16.msra.mxu0 %v496
      %592 = vmatprep.subr.bf16.mxu0 0
      %593 = vmatpush1.bf16.msra.mxu0 %v497
      %594 = vmatprep.subr.bf16.mxu0 0
      %595 = vmatpush1.bf16.msra.mxu0 %v498
      %596 = vmatprep.subr.bf16.mxu0 0
      %597 = vmatpush1.bf16.msra.mxu0 %v499
      %598 = vmatprep.subr.bf16.mxu0 0
      %599 = vmatpush1.bf16.msra.mxu0 %v500
      %600 = vmatprep.subr.bf16.mxu0 0
      %601 = vmatpush1.bf16.msra.mxu0 %v501
      %602 = vmatprep.subr.bf16.mxu0 0
      %603 = vmatpush1.bf16.msra.mxu0 %v502
      %604 = vmatprep.subr.bf16.mxu0 0
      %605 = vmatpush1.bf16.msra.mxu0 %v503
      %606 = vmatprep.subr.bf16.mxu0 0
      %607 = vmatpush1.bf16.msra.mxu0 %v504
      %608 = vmatprep.subr.bf16.mxu0 0
      %609 = vmatpush1.bf16.msra.mxu0 %v505
      %610 = vmatprep.mubr.bf16.mxu0 %v341
      %611 = vmatmul.mubr.bf16.gmra.mrb[0].mxu0 %v340
      %v612 = vpop.f32.mrb[0].mxu0
      %v613 = vadd.f32 %v573, %v612
      %v614 = vpop.f32.mrb[0].mxu0
      %v615 = vpop.f32.mrb[0].mxu0
      %v616 = vpop.f32.mrb[0].mxu0
      %617 = vdwg.mxu0
      %v618 = vadd.f32 %v265, %v613
      %619 = vst [vmem:[#allocation2] sm:$0xff] %v618
      %p620 = scmp.eq.s32.totalorder %s21, 1
      // Predicated region
      $region37: #{_lambda_.15} parent=31 // pred_check
        %p621 = pneg %p620
      $region38: #{_lambda_.15} parent=31 // pred_check_branch
        %623 = sbr.rel (%p621) target = $region40
      $region39: #{_lambda_.15} parent=31 // pred_region
        %v624 = vld [vmem:[#allocation2] sm:$0xff]
        %v625 = vld [vmem:[%s251] sm:$0x1]
        %v627 = vlaneseq
        %v628 = vshrl.u32 %v627, 7
        %v629 = vsub.s32 0, %v628
        %v630 = vrot.slane %v625, %v629
        %v632 = vadd.f32 %v624, %v630
        %633 = vst [vmem:[%s258] sm:$0xff] %v632
      $region40: #{_lambda_.15} parent=31 // pred_fallthru
        _
      %p634 = scmp.lt.s32.totalorder %s20, 0
      %s635 = scalar_select %p634, %s20, 0
      %p636 = scmp.lt.s32.totalorder %s19, 0
      %s637 = scalar_select %p636, %s19, 0
      %s638 = sadd.s32 %s637, %s635
      %s639 = smul.addr %s638, 8
      %s640 = scalar_lea.vmem %s3, %s639
      // Predicated region
      $region41: #{_lambda_.15} parent=31 // pred_check
        %p641 = pneg %p135
      $region42: #{_lambda_.15} parent=31 // pred_check_branch
        %643 = sbr.rel (%p641) target = $region44
      $region43: #{_lambda_.15} parent=31 // pred_region
        _
      $region44: #{_lambda_.15} parent=31 // pred_fallthru
        _
      // Predicated region
      $region45: #{_lambda_.15} parent=31 // pred_check
        %p644 = pneg %p135
      $region46: #{_lambda_.15} parent=31 // pred_check_branch
        %646 = sbr.rel (%p644) target = $region48
      $region47: #{_lambda_.15} parent=31 // pred_region
        %p647 = scmp.lt.s32.totalorder %s20, 0
        %s648 = scalar_select %p647, %s20, 0
        %p649 = scmp.lt.s32.totalorder %s19, 0
        %s650 = scalar_select %p649, %s19, 0
        %s651 = sadd.s32 %s650, %s648
        %s652 = smul.addr %s651, 8
        %s653 = scalar_lea.vmem %s3, %s652
      $region48: #{_lambda_.15} parent=31 // pred_fallthru
        _
    $region32: #{_lambda_.15} parent=5 // pred_fallthru
      _
    %p654 = scmp.le.s32.totalorder 2, %s9
    // Predicated region
    $region49: #{_lambda_.15} parent=5 // pred_check
      %p655 = pneg %p654
    $region50: #{_lambda_.15} parent=5 // pred_check_branch
      %657 = sbr.rel (%p655) target = $region52
    $region51: #{_lambda_.15} parent=5 // pred_region
      %s658 = ssub.s32 %s9, 2
    $region52: #{_lambda_.15} parent=5 // pred_fallthru
      _
  $region6: #{_lambda_.15} parent=0 // loop_footer
    %s13 = sadd.s32 1, %s9
  $region7: #{_lambda_.15} parent=0 // loop_footer_branch
    %8 = sbr.rel target = $region3
  $region8: #{_lambda_.15} parent=0 // loop_exit
    _

</llo_original>
